<compile_context>
chip_gen: v5e
topology: v5e:2x2
jax: 0.10.0
libtpu: 0.0.40
codegen_flags: <defaults>
</compile_context>

<pallas_src>
import functools
import math

import jax
import jax.numpy as jnp
from jax.experimental import pallas as pl
from jax.experimental.pallas import tpu as pltpu

# Constants referenced (but not defined) in the original source file.
SMALL_FLOAT = 1e-30
BIG_INT = 1e30
# TODO(synk): ANS_LIMIT / get_output_mask only matter for return_yp=True (not implemented).


def _gelu(x):
    # tanh-form gelu (runs on the EUP tanh slot); matches erf-gelu to ~3e-4 abs.
    c = math.sqrt(2.0 / math.pi)
    return 0.5 * x * (1.0 + jnp.tanh(c * (x + 0.044715 * x * x * x)))


def _layer_norm(x, gamma, beta, eps=1e-12):
    u = jnp.mean(x, axis=-1, keepdims=True)
    s = jnp.mean(jnp.square(x - u), axis=-1, keepdims=True)
    return (x - u) / jnp.sqrt(s + eps) * gamma + beta


def _mm(a, b):
    # A(m,k) @ B(k,n): bf16 operands, f32 accumulation on the MXU.
    return jax.lax.dot_general(
        a.astype(jnp.bfloat16), b.astype(jnp.bfloat16),
        dimension_numbers=(((1,), (0,)), ((), ())),
        preferred_element_type=jnp.float32)


def _mm_t(a, b):
    # A(m,k) @ B(n,k)^T -> (m,n): contraction on trailing dims of both operands.
    return jax.lax.dot_general(
        a.astype(jnp.bfloat16), b.astype(jnp.bfloat16),
        dimension_numbers=(((1,), (1,)), ((), ())),
        preferred_element_type=jnp.float32)


def hop_kernel(
    # streamed per-row data
    bert_ref, mask_ref, ans_ref, map_ref,
    # intermediate_hidden
    w_ih_ref, b_ih_ref,
    # BertLayer: self-attention (per-head weight blocks)
    wq_ref, bq_ref, wk_ref, bk_ref, wv_ref, bv_ref,
    wao_ref, bao_ref, ln1_g_ref, ln1_b_ref,
    # BertLayer: FFN
    wi_ref, bi_ref, wfo_ref, bfo_ref, ln2_g_ref, ln2_b_ref,
    # pooler
    wp_ref, bp_ref,
    # heads (span / sup weights stored transposed: (2, H) / (1, H))
    wsup_ref, bsup_ref, wspan_ref, bspan_ref, wtype_ref, btype_ref,
    # outputs
    se_ref, type_ref, sup_ref,
    *, num_heads, head_dim):
    x = bert_ref[0]                               # (T, BH)  bf16
    amask = (1.0 - mask_ref[0]) * -10000.0        # (1, T)   f32

    # ---- intermediate_hidden + gelu ----
    h = _gelu(_mm(x, w_ih_ref[...]) + b_ih_ref[...])          # (T, H) f32
    h_b = h.astype(jnp.bfloat16)

    # ---- BertLayer: multi-head self attention ----
    # Per-head weight blocks; each head's context is folded directly into its
    # slice of the output projection (no activation lane-slicing, no concat).
    scale = 1.0 / math.sqrt(head_dim)
    attn_proj = None
    for hd in range(num_heads):                               # static unroll
        qh = _mm(h_b, wq_ref[hd]) + bq_ref[hd]                # (T, dh) f32
        kh = _mm(h_b, wk_ref[hd]) + bk_ref[hd]
        vh = _mm(h_b, wv_ref[hd]) + bv_ref[hd]
        s = _mm_t(qh, kh) * scale + amask                     # (T, T)  f32
        m = jnp.max(s, axis=-1, keepdims=True)
        e = jnp.exp(s - m)
        p = e * pl.reciprocal(jnp.sum(e, axis=-1, keepdims=True), approx=True)
        ctx = _mm(p, vh)                                      # (T, dh) f32
        o = _mm(ctx, wao_ref[hd])                             # (T, H)  f32
        attn_proj = o if attn_proj is None else attn_proj + o
    attn = _layer_norm(attn_proj + bao_ref[...] + h,
                       ln1_g_ref[...], ln1_b_ref[...])        # (T, H)

    # ---- BertLayer: FFN ----
    inter = _gelu(_mm(attn, wi_ref[...]) + bi_ref[...])       # (T, I)
    ffn = _mm(inter, wfo_ref[...]) + bfo_ref[...]
    seq = _layer_norm(ffn + attn, ln2_g_ref[...], ln2_b_ref[...])   # (T, H)
    seq_b = seq.astype(jnp.bfloat16)

    # ---- pooler (first token -> dense -> tanh) + type head ----
    pooled = jnp.tanh(_mm(seq_b[0:1, :], wp_ref[...]) + bp_ref[...])   # (1, H) f32
    type_ref[0] = _mm(pooled, wtype_ref[...]) + btype_ref[...]         # (1, 3)

    # ---- span head: lane-dense (2, T) output + answer mask (f32) ----
    se = _mm_t(wspan_ref[...], seq_b) + bspan_ref[...]        # (2, T) f32
    se_ref[0] = se - (1.0 - ans_ref[0]) * BIG_INT

    # ---- is_support head: lane-dense (1, S) output ----
    # ((mapping @ seq) / msum) @ w_sup == (mapping @ (seq @ w_sup)) / msum
    ts = _mm_t(wsup_ref[...], seq_b)                          # (1, T)
    mp = map_ref[0]                                           # (S, T) bf16
    sup_num = _mm_t(ts, mp)                                   # (1, S)
    msum = _mm_t(jnp.ones_like(ts), mp) + SMALL_FLOAT         # (1, S) token counts
    sup_ref[0] = sup_num * pl.reciprocal(msum, approx=True) + bsup_ref[...]


def hop_forward(bert_output, context_ques_masks, answer_masks, all_mapping,
                params, *, num_heads):
    """HOPModel.forward(task='reason', return_yp=False)."""
    bsz, para_cnt, T = context_ques_masks.shape
    # The 'reason' path pairs all_mapping with the (bsz*para_cnt)-batched
    # encoder output via bmm, which requires para_cnt == 1 (same as PyTorch).
    assert para_cnt == 1, "'reason' task requires para_cnt == 1"
    N = bsz * para_cnt
    BH = bert_output.shape[-1]
    H = params["w_ih"].shape[1]
    S = all_mapping.shape[2]
    assert H % num_heads == 0
    dh = H // num_heads

    f32 = lambda a: a.astype(jnp.float32)
    bf16 = lambda a: a.astype(jnp.bfloat16)

    # --- streamed activations (one (1, ...) block per grid step) ---
    x = bf16(bert_output)                                     # (N, T, BH)
    ctx_mask = f32(context_ques_masks).reshape(N, 1, T)
    ans = f32(answer_masks).reshape(N, 1, T)                  # squeeze(dim=1)
    mapping = bf16(all_mapping).reshape(N, S, T)              # squeeze(dim=1)

    p = params
    # --- resident weights: bf16 matmul operands, f32 biases / layernorm params ---
    wq_h = bf16(p["wq"]).reshape(H, num_heads, dh).transpose(1, 0, 2)   # (nh, H, dh)
    wk_h = bf16(p["wk"]).reshape(H, num_heads, dh).transpose(1, 0, 2)
    wv_h = bf16(p["wv"]).reshape(H, num_heads, dh).transpose(1, 0, 2)
    bq_h = f32(p["bq"]).reshape(num_heads, 1, dh)
    bk_h = f32(p["bk"]).reshape(num_heads, 1, dh)
    bv_h = f32(p["bv"]).reshape(num_heads, 1, dh)
    wao_h = bf16(p["w_attn_out"]).reshape(num_heads, dh, H)             # (nh, dh, H)

    weights = [
        bf16(p["w_ih"]), f32(p["b_ih"]),
        wq_h, bq_h, wk_h, bk_h, wv_h, bv_h,
        wao_h, f32(p["b_attn_out"]), f32(p["ln1_g"]), f32(p["ln1_b"]),
        bf16(p["w_inter"]), f32(p["b_inter"]),
        bf16(p["w_ffn_out"]), f32(p["b_ffn_out"]),
        f32(p["ln2_g"]), f32(p["ln2_b"]),
        bf16(p["w_pool"]), f32(p["b_pool"]),
        bf16(p["w_sup"]).reshape(1, H), f32(p["b_sup"]).reshape(1, 1),
        bf16(p["w_span"]).T, f32(p["b_span"]).reshape(2, 1),
        bf16(p["w_type"]), f32(p["b_type"]),
    ]

    def dspec(shp):                              # streamed: one block per batch row
        nz = len(shp) - 1
        return pl.BlockSpec(shp, lambda n, _z=nz: (n,) + (0,) * _z)

    def wspec(w):                                # resident: constant index_map
        nd = w.ndim
        return pl.BlockSpec(w.shape, lambda n, _d=nd: (0,) * _d)

    in_specs = [dspec((1, T, BH)), dspec((1, 1, T)), dspec((1, 1, T)),
                dspec((1, S, T))] + [wspec(w) for w in weights]
    out_specs = (dspec((1, 2, T)), dspec((1, 1, 3)), dspec((1, 1, S)))
    out_shape = (
        jax.ShapeDtypeStruct((N, 2, T), jnp.float32),   # start/end (lane-dense T)
        jax.ShapeDtypeStruct((N, 1, 3), jnp.float32),   # type logits
        jax.ShapeDtypeStruct((N, 1, S), jnp.float32),   # is_support "one" logits
    )

    # VMEM budget: resident weights + a few per-row activation slabs, with
    # headroom below v7x's 64 MiB physical VMEM.
    I = params["w_inter"].shape[1]
    weight_bytes = sum(int(w.size) * w.dtype.itemsize for w in weights)
    act_bytes = 4 * T * (BH + 6 * H + 2 * I + T + 2 * S)
    vmem_limit = int(min(56 * 2**20, max(32 * 2**20, 2 * (weight_bytes + act_bytes))))

    se, typ, sup = pl.pallas_call(
        functools.partial(hop_kernel, num_heads=num_heads, head_dim=dh),
        grid=(N,),
        in_specs=in_specs,
        out_specs=out_specs,
        out_shape=out_shape,
        compiler_params=pltpu.CompilerParams(
            dimension_semantics=("parallel",),   # shards batch rows across TCs (v7x)
            vmem_limit_bytes=vmem_limit),
    )(x, ctx_mask, ans, mapping, *weights)

    # XLA-side glue (free): split span rows, zero-concat + unsqueeze for support.
    start_logits = se[:, 0, :]
    end_logits = se[:, 1, :]
    type_logits = typ[:, 0, :]
    one_logits = sup[:, 0, :, None]                           # (N, S, 1)
    is_support_logits = jnp.concatenate(
        [jnp.zeros_like(one_logits), one_logits], axis=2)[:, None, :, :]
    return start_logits, end_logits, type_logits, is_support_logits
    # TODO(synk): 'locate' task head (linear_has_support) and the return_yp
    # argmax span-selection path are not implemented (default call path only).


# --------------------------- pure-JAX reference -----------------------------
def hop_reference(bert_output, context_ques_masks, answer_masks, all_mapping,
                  params, *, num_heads):
    from jax.scipy.special import erf
    gelu = lambda t: t * 0.5 * (1.0 + erf(t / math.sqrt(2.0)))

    bsz, para_cnt, T = context_ques_masks.shape
    N = bsz * para_cnt
    mask = context_ques_masks.reshape(N, T).astype(jnp.float32)
    ans = jnp.squeeze(answer_masks, axis=1).astype(jnp.float32)
    mapping = jnp.squeeze(all_mapping, axis=1).astype(jnp.float32)
    p = params

    h = gelu(bert_output @ p["w_ih"] + p["b_ih"])
    H = h.shape[-1]
    dh = H // num_heads
    amask = (1.0 - mask) * -10000.0

    def heads(t):
        return t.reshape(N, T, num_heads, dh).transpose(0, 2, 1, 3)
    q = heads(h @ p["wq"] + p["bq"])
    k = heads(h @ p["wk"] + p["bk"])
    v = heads(h @ p["wv"] + p["bv"])
    scores = jnp.einsum('nhqd,nhkd->nhqk', q, k) / math.sqrt(dh)
    scores = scores + amask[:, None, None, :]
    probs = jax.nn.softmax(scores, axis=-1)
    ctx = jnp.einsum('nhqk,nhkd->nhqd', probs, v).transpose(0, 2, 1, 3).reshape(N, T, H)
    attn = _layer_norm(ctx @ p["w_attn_out"] + p["b_attn_out"] + h,
                       p["ln1_g"], p["ln1_b"])
    inter = gelu(attn @ p["w_inter"] + p["b_inter"])
    seq = _layer_norm(inter @ p["w_ffn_out"] + p["b_ffn_out"] + attn,
                      p["ln2_g"], p["ln2_b"])

    pooled = jnp.tanh(seq[:, 0, :] @ p["w_pool"] + p["b_pool"])
    type_logits = pooled @ p["w_type"] + p["b_type"]

    msum = jnp.sum(mapping, axis=2, keepdims=True) + SMALL_FLOAT
    sup_in = jnp.einsum('nst,nth->nsh', mapping, seq) / msum
    one = sup_in @ p["w_sup"] + p["b_sup"]
    is_support = jnp.concatenate([jnp.zeros_like(one), one], axis=2)[:, None, :, :]

    span = seq @ p["w_span"] + p["b_span"]
    span = span - (1.0 - ans[:, :, None]) * BIG_INT
    return span[:, :, 0], span[:, :, 1], type_logits, is_support


# ------------------------------ parameter init ------------------------------
def init_params(key, bert_hidden, hidden, intermediate):
    specs = [
        ("w_ih", bert_hidden, hidden),
        ("wq", hidden, hidden), ("wk", hidden, hidden), ("wv", hidden, hidden),
        ("w_attn_out", hidden, hidden),
        ("w_inter", hidden, intermediate),
        ("w_ffn_out", intermediate, hidden),
        ("w_pool", hidden, hidden),
        ("w_sup", hidden, 1),
        ("w_span", hidden, 2),
        ("w_type", hidden, 3),
    ]
    keys = jax.random.split(key, len(specs))
    p = {}
    for (name, fi, fo), k in zip(specs, keys):
        kw, kb = jax.random.split(k)
        p[name] = 0.02 * jax.random.normal(kw, (fi, fo), jnp.float32)
        p["b" + name[1:]] = 0.02 * jax.random.normal(kb, (1, fo), jnp.float32)
    for nm in ("ln1", "ln2"):
        p[nm + "_g"] = jnp.ones((1, hidden), jnp.float32)
        p[nm + "_b"] = jnp.zeros((1, hidden), jnp.float32)
    return p


if __name__ == "__main__":
    key = jax.random.PRNGKey(0)
    bsz, para_cnt, token_cnt = 2, 1, 16
    bert_hidden, hidden, intermediate, num_heads = 48, 32, 64, 4
    n_sent = 8
    N = bsz * para_cnt

    k_bert, k_param = jax.random.split(key)
    # debug-mode BERT output stand-in (np.random.rand -> uniform[0,1))
    bert_output = jax.random.uniform(k_bert, (N, token_cnt, bert_hidden), jnp.float32)
    # attention mask: first 12 tokens valid
    context_ques_masks = jnp.concatenate(
        [jnp.ones((bsz, para_cnt, 12)), jnp.zeros((bsz, para_cnt, 4))],
        axis=-1).astype(jnp.float32)
    # answer span mask: first 10 tokens allowed
    answer_masks = jnp.concatenate(
        [jnp.ones((bsz, 1, 10)), jnp.zeros((bsz, 1, 6))], axis=-1).astype(jnp.float32)
    # sentence->token mapping: each of 8 sentences covers 2 consecutive tokens
    sent_id = jnp.arange(token_cnt) // (token_cnt // n_sent)
    mapping_2d = jax.nn.one_hot(sent_id, n_sent, dtype=jnp.float32).T   # (S, T)
    all_mapping = jnp.broadcast_to(mapping_2d, (bsz, 1, n_sent, token_cnt))

    params = init_params(k_param, bert_hidden, hidden, intermediate)

    outs = hop_forward(bert_output, context_ques_masks, answer_masks, all_mapping,
                       params, num_heads=num_heads)
    outs = jax.block_until_ready(outs)

    refs = hop_reference(bert_output, context_ques_masks, answer_masks, all_mapping,
                         params, num_heads=num_heads)
    # Kernel uses bf16 MXU operands / tanh-gelu / approx reciprocal (per perf
    # review); reference is exact f32+erf, so compare with a relaxed tolerance
    # (observed differences are ~1e-3 at these scales).
    for o, r in zip(outs, refs):
        assert o.shape == r.shape, (o.shape, r.shape)
        assert jnp.allclose(o, r, rtol=2e-2, atol=2e-2), "mismatch vs reference"

    print("KERNEL_OK")
</pallas_src>

<mosaic_0001>
module attributes {stable_mosaic.version = 11 : i64} {
  func.func @hop_kernel(%arg0: i32, %arg1: memref<1x16x48xbf16, #tpu.memory_space<vmem>>, %arg2: memref<1x1x16xf32, #tpu.memory_space<vmem>>, %arg3: memref<1x1x16xf32, #tpu.memory_space<vmem>>, %arg4: memref<1x8x16xbf16, #tpu.memory_space<vmem>>, %arg5: memref<48x32xbf16, #tpu.memory_space<vmem>>, %arg6: memref<1x32xf32, #tpu.memory_space<vmem>>, %arg7: memref<4x32x8xbf16, #tpu.memory_space<vmem>>, %arg8: memref<4x1x8xf32, #tpu.memory_space<vmem>>, %arg9: memref<4x32x8xbf16, #tpu.memory_space<vmem>>, %arg10: memref<4x1x8xf32, #tpu.memory_space<vmem>>, %arg11: memref<4x32x8xbf16, #tpu.memory_space<vmem>>, %arg12: memref<4x1x8xf32, #tpu.memory_space<vmem>>, %arg13: memref<4x8x32xbf16, #tpu.memory_space<vmem>>, %arg14: memref<1x32xf32, #tpu.memory_space<vmem>>, %arg15: memref<1x32xf32, #tpu.memory_space<vmem>>, %arg16: memref<1x32xf32, #tpu.memory_space<vmem>>, %arg17: memref<32x64xbf16, #tpu.memory_space<vmem>>, %arg18: memref<1x64xf32, #tpu.memory_space<vmem>>, %arg19: memref<64x32xbf16, #tpu.memory_space<vmem>>, %arg20: memref<1x32xf32, #tpu.memory_space<vmem>>, %arg21: memref<1x32xf32, #tpu.memory_space<vmem>>, %arg22: memref<1x32xf32, #tpu.memory_space<vmem>>, %arg23: memref<32x32xbf16, #tpu.memory_space<vmem>>, %arg24: memref<1x32xf32, #tpu.memory_space<vmem>>, %arg25: memref<1x32xbf16, #tpu.memory_space<vmem>>, %arg26: memref<1x1xf32, #tpu.memory_space<vmem>>, %arg27: memref<2x32xbf16, #tpu.memory_space<vmem>>, %arg28: memref<2x1xf32, #tpu.memory_space<vmem>>, %arg29: memref<32x3xbf16, #tpu.memory_space<vmem>>, %arg30: memref<1x3xf32, #tpu.memory_space<vmem>>, %arg31: memref<1x2x16xf32, #tpu.memory_space<vmem>>, %arg32: memref<1x1x3xf32, #tpu.memory_space<vmem>>, %arg33: memref<1x1x8xf32, #tpu.memory_space<vmem>>) attributes {dimension_semantics = [#tpu.dimension_semantics<parallel>], iteration_bounds = array<i64: 2>, scalar_prefetch = 0 : i64, scratch_operands = 0 : i64, tpu.core_type = #tpu.core_type<tc>, window_params = [{transform_indices = @transform_0, window_bounds = array<i64: 1, 16, 48>}, {transform_indices = @transform_1, window_bounds = array<i64: 1, 1, 16>}, {transform_indices = @transform_2, window_bounds = array<i64: 1, 1, 16>}, {transform_indices = @transform_3, window_bounds = array<i64: 1, 8, 16>}, {pipeline_mode = #tpu.pipeline_mode<synchronous>, transform_indices = @transform_4, window_bounds = array<i64: 48, 32>}, {pipeline_mode = #tpu.pipeline_mode<synchronous>, transform_indices = @transform_5, window_bounds = array<i64: 1, 32>}, {pipeline_mode = #tpu.pipeline_mode<synchronous>, transform_indices = @transform_6, window_bounds = array<i64: 4, 32, 8>}, {pipeline_mode = #tpu.pipeline_mode<synchronous>, transform_indices = @transform_7, window_bounds = array<i64: 4, 1, 8>}, {pipeline_mode = #tpu.pipeline_mode<synchronous>, transform_indices = @transform_8, window_bounds = array<i64: 4, 32, 8>}, {pipeline_mode = #tpu.pipeline_mode<synchronous>, transform_indices = @transform_9, window_bounds = array<i64: 4, 1, 8>}, {pipeline_mode = #tpu.pipeline_mode<synchronous>, transform_indices = @transform_10, window_bounds = array<i64: 4, 32, 8>}, {pipeline_mode = #tpu.pipeline_mode<synchronous>, transform_indices = @transform_11, window_bounds = array<i64: 4, 1, 8>}, {pipeline_mode = #tpu.pipeline_mode<synchronous>, transform_indices = @transform_12, window_bounds = array<i64: 4, 8, 32>}, {pipeline_mode = #tpu.pipeline_mode<synchronous>, transform_indices = @transform_13, window_bounds = array<i64: 1, 32>}, {pipeline_mode = #tpu.pipeline_mode<synchronous>, transform_indices = @transform_14, window_bounds = array<i64: 1, 32>}, {pipeline_mode = #tpu.pipeline_mode<synchronous>, transform_indices = @transform_15, window_bounds = array<i64: 1, 32>}, {pipeline_mode = #tpu.pipeline_mode<synchronous>, transform_indices = @transform_16, window_bounds = array<i64: 32, 64>}, {pipeline_mode = #tpu.pipeline_mode<synchronous>, transform_indices = @transform_17, window_bounds = array<i64: 1, 64>}, {pipeline_mode = #tpu.pipeline_mode<synchronous>, transform_indices = @transform_18, window_bounds = array<i64: 64, 32>}, {pipeline_mode = #tpu.pipeline_mode<synchronous>, transform_indices = @transform_19, window_bounds = array<i64: 1, 32>}, {pipeline_mode = #tpu.pipeline_mode<synchronous>, transform_indices = @transform_20, window_bounds = array<i64: 1, 32>}, {pipeline_mode = #tpu.pipeline_mode<synchronous>, transform_indices = @transform_21, window_bounds = array<i64: 1, 32>}, {pipeline_mode = #tpu.pipeline_mode<synchronous>, transform_indices = @transform_22, window_bounds = array<i64: 32, 32>}, {pipeline_mode = #tpu.pipeline_mode<synchronous>, transform_indices = @transform_23, window_bounds = array<i64: 1, 32>}, {pipeline_mode = #tpu.pipeline_mode<synchronous>, transform_indices = @transform_24, window_bounds = array<i64: 1, 32>}, {pipeline_mode = #tpu.pipeline_mode<synchronous>, transform_indices = @transform_25, window_bounds = array<i64: 1, 1>}, {pipeline_mode = #tpu.pipeline_mode<synchronous>, transform_indices = @transform_26, window_bounds = array<i64: 2, 32>}, {pipeline_mode = #tpu.pipeline_mode<synchronous>, transform_indices = @transform_27, window_bounds = array<i64: 2, 1>}, {pipeline_mode = #tpu.pipeline_mode<synchronous>, transform_indices = @transform_28, window_bounds = array<i64: 32, 3>}, {pipeline_mode = #tpu.pipeline_mode<synchronous>, transform_indices = @transform_29, window_bounds = array<i64: 1, 3>}, {transform_indices = @transform_30, window_bounds = array<i64: 1, 2, 16>}, {transform_indices = @transform_31, window_bounds = array<i64: 1, 1, 3>}, {transform_indices = @transform_32, window_bounds = array<i64: 1, 1, 8>}]} {
    %c0 = arith.constant 0 : index
    %c0_0 = arith.constant 0 : index
    %c0_1 = arith.constant 0 : index
    %0 = vector.load %arg1[%c0, %c0_0, %c0_1] : memref<1x16x48xbf16, #tpu.memory_space<vmem>>, vector<1x16x48xbf16>
    %1 = vector.shape_cast %0 : vector<1x16x48xbf16> to vector<16x48xbf16>
    %c0_2 = arith.constant 0 : index
    %c0_3 = arith.constant 0 : index
    %c0_4 = arith.constant 0 : index
    %2 = vector.load %arg2[%c0_2, %c0_3, %c0_4] : memref<1x1x16xf32, #tpu.memory_space<vmem>>, vector<1x1x16xf32>
    %3 = vector.shape_cast %2 : vector<1x1x16xf32> to vector<1x16xf32>
    %cst = arith.constant 1.000000e+00 : f32
    %4 = vector.broadcast %cst : f32 to vector<1x16xf32>
    %5 = arith.subf %4, %3 : vector<1x16xf32>
    %cst_5 = arith.constant -1.000000e+04 : f32
    %6 = vector.broadcast %cst_5 : f32 to vector<1x16xf32>
    %7 = arith.mulf %5, %6 : vector<1x16xf32>
    %c0_6 = arith.constant 0 : index
    %c0_7 = arith.constant 0 : index
    %8 = vector.load %arg5[%c0_6, %c0_7] : memref<48x32xbf16, #tpu.memory_space<vmem>>, vector<48x32xbf16>
    %cst_8 = arith.constant dense<0.000000e+00> : vector<16x32xf32>
    %9 = tpu.matmul %1, %8, %cst_8 {dimension_numbers = #tpu.dot_dimension_numbers<[1], [0], [0], [1], [0, 0, 1, 1], [], []>} : vector<16x48xbf16>, vector<48x32xbf16>, vector<16x32xf32> -> vector<16x32xf32>
    %c0_9 = arith.constant 0 : index
    %c0_10 = arith.constant 0 : index
    %10 = vector.load %arg6[%c0_9, %c0_10] : memref<1x32xf32, #tpu.memory_space<vmem>>, vector<1x32xf32>
    %11 = vector.broadcast %10 : vector<1x32xf32> to vector<16x32xf32>
    %12 = arith.addf %9, %11 : vector<16x32xf32>
    %cst_11 = arith.constant 5.000000e-01 : f32
    %13 = vector.broadcast %cst_11 : f32 to vector<16x32xf32>
    %14 = arith.mulf %13, %12 : vector<16x32xf32>
    %cst_12 = arith.constant 4.471500e-02 : f32
    %15 = vector.broadcast %cst_12 : f32 to vector<16x32xf32>
    %16 = arith.mulf %15, %12 : vector<16x32xf32>
    %17 = arith.mulf %16, %12 : vector<16x32xf32>
    %18 = arith.mulf %17, %12 : vector<16x32xf32>
    %19 = arith.addf %12, %18 : vector<16x32xf32>
    %cst_13 = arith.constant 0.797884583 : f32
    %20 = vector.broadcast %cst_13 : f32 to vector<16x32xf32>
    %21 = arith.mulf %20, %19 : vector<16x32xf32>
    %22 = math.tanh %21 : vector<16x32xf32>
    %cst_14 = arith.constant 1.000000e+00 : f32
    %23 = vector.broadcast %cst_14 : f32 to vector<16x32xf32>
    %24 = arith.addf %23, %22 : vector<16x32xf32>
    %25 = arith.mulf %14, %24 : vector<16x32xf32>
    %26 = arith.truncf %25 : vector<16x32xf32> to vector<16x32xbf16>
    %c0_15 = arith.constant 0 : index
    %c0_16 = arith.constant 0 : index
    %c0_17 = arith.constant 0 : index
    %27 = vector.load %arg7[%c0_15, %c0_16, %c0_17] : memref<4x32x8xbf16, #tpu.memory_space<vmem>>, vector<1x32x8xbf16>
    %28 = vector.shape_cast %27 : vector<1x32x8xbf16> to vector<32x8xbf16>
    %cst_18 = arith.constant dense<0.000000e+00> : vector<16x8xf32>
    %29 = tpu.matmul %26, %28, %cst_18 {dimension_numbers = #tpu.dot_dimension_numbers<[1], [0], [0], [1], [0, 0, 1, 1], [], []>} : vector<16x32xbf16>, vector<32x8xbf16>, vector<16x8xf32> -> vector<16x8xf32>
    %c0_19 = arith.constant 0 : index
    %c0_20 = arith.constant 0 : index
    %c0_21 = arith.constant 0 : index
    %30 = vector.load %arg8[%c0_19, %c0_20, %c0_21] : memref<4x1x8xf32, #tpu.memory_space<vmem>>, vector<1x1x8xf32>
    %31 = vector.shape_cast %30 : vector<1x1x8xf32> to vector<1x8xf32>
    %32 = vector.broadcast %31 : vector<1x8xf32> to vector<16x8xf32>
    %33 = arith.addf %29, %32 : vector<16x8xf32>
    %c0_22 = arith.constant 0 : index
    %c0_23 = arith.constant 0 : index
    %c0_24 = arith.constant 0 : index
    %34 = vector.load %arg9[%c0_22, %c0_23, %c0_24] : memref<4x32x8xbf16, #tpu.memory_space<vmem>>, vector<1x32x8xbf16>
    %35 = vector.shape_cast %34 : vector<1x32x8xbf16> to vector<32x8xbf16>
    %cst_25 = arith.constant dense<0.000000e+00> : vector<16x8xf32>
    %36 = tpu.matmul %26, %35, %cst_25 {dimension_numbers = #tpu.dot_dimension_numbers<[1], [0], [0], [1], [0, 0, 1, 1], [], []>} : vector<16x32xbf16>, vector<32x8xbf16>, vector<16x8xf32> -> vector<16x8xf32>
    %c0_26 = arith.constant 0 : index
    %c0_27 = arith.constant 0 : index
    %c0_28 = arith.constant 0 : index
    %37 = vector.load %arg10[%c0_26, %c0_27, %c0_28] : memref<4x1x8xf32, #tpu.memory_space<vmem>>, vector<1x1x8xf32>
    %38 = vector.shape_cast %37 : vector<1x1x8xf32> to vector<1x8xf32>
    %39 = vector.broadcast %38 : vector<1x8xf32> to vector<16x8xf32>
    %40 = arith.addf %36, %39 : vector<16x8xf32>
    %c0_29 = arith.constant 0 : index
    %c0_30 = arith.constant 0 : index
    %c0_31 = arith.constant 0 : index
    %41 = vector.load %arg11[%c0_29, %c0_30, %c0_31] : memref<4x32x8xbf16, #tpu.memory_space<vmem>>, vector<1x32x8xbf16>
    %42 = vector.shape_cast %41 : vector<1x32x8xbf16> to vector<32x8xbf16>
    %cst_32 = arith.constant dense<0.000000e+00> : vector<16x8xf32>
    %43 = tpu.matmul %26, %42, %cst_32 {dimension_numbers = #tpu.dot_dimension_numbers<[1], [0], [0], [1], [0, 0, 1, 1], [], []>} : vector<16x32xbf16>, vector<32x8xbf16>, vector<16x8xf32> -> vector<16x8xf32>
    %c0_33 = arith.constant 0 : index
    %c0_34 = arith.constant 0 : index
    %c0_35 = arith.constant 0 : index
    %44 = vector.load %arg12[%c0_33, %c0_34, %c0_35] : memref<4x1x8xf32, #tpu.memory_space<vmem>>, vector<1x1x8xf32>
    %45 = vector.shape_cast %44 : vector<1x1x8xf32> to vector<1x8xf32>
    %46 = vector.broadcast %45 : vector<1x8xf32> to vector<16x8xf32>
    %47 = arith.addf %43, %46 : vector<16x8xf32>
    %48 = arith.truncf %33 : vector<16x8xf32> to vector<16x8xbf16>
    %49 = arith.truncf %40 : vector<16x8xf32> to vector<16x8xbf16>
    %cst_36 = arith.constant dense<0.000000e+00> : vector<16x16xf32>
    %50 = tpu.matmul %48, %49, %cst_36 {dimension_numbers = #tpu.dot_dimension_numbers<[1], [1], [0], [0], [0, 0, 1, 0], [], []>} : vector<16x8xbf16>, vector<16x8xbf16>, vector<16x16xf32> -> vector<16x16xf32>
    %cst_37 = arith.constant 0.353553385 : f32
    %51 = vector.broadcast %cst_37 : f32 to vector<16x16xf32>
    %52 = arith.mulf %50, %51 : vector<16x16xf32>
    %53 = vector.broadcast %7 : vector<1x16xf32> to vector<16x16xf32>
    %54 = arith.addf %52, %53 : vector<16x16xf32>
    %cst_38 = arith.constant dense<0xFF800000> : vector<16xf32>
    %55 = vector.multi_reduction <maximumf>, %54, %cst_38 [1] : vector<16x16xf32> to vector<16xf32>
    %56 = vector.shape_cast %55 : vector<16xf32> to vector<16x1xf32>
    %57 = vector.broadcast %56 : vector<16x1xf32> to vector<16x16xf32>
    %58 = arith.subf %54, %57 : vector<16x16xf32>
    %59 = math.exp %58 : vector<16x16xf32>
    %cst_39 = arith.constant dense<0.000000e+00> : vector<16xf32>
    %60 = vector.multi_reduction <add>, %59, %cst_39 [1] : vector<16x16xf32> to vector<16xf32>
    %61 = vector.shape_cast %60 : vector<16xf32> to vector<16x1xf32>
    %62 = tpu.reciprocal %61 {approx = true} : vector<16x1xf32> -> vector<16x1xf32>
    %63 = vector.broadcast %62 : vector<16x1xf32> to vector<16x16xf32>
    %64 = arith.mulf %59, %63 : vector<16x16xf32>
    %65 = arith.truncf %64 : vector<16x16xf32> to vector<16x16xbf16>
    %66 = arith.truncf %47 : vector<16x8xf32> to vector<16x8xbf16>
    %cst_40 = arith.constant dense<0.000000e+00> : vector<16x8xf32>
    %67 = tpu.matmul %65, %66, %cst_40 {dimension_numbers = #tpu.dot_dimension_numbers<[1], [0], [0], [1], [0, 0, 1, 1], [], []>} : vector<16x16xbf16>, vector<16x8xbf16>, vector<16x8xf32> -> vector<16x8xf32>
    %c0_41 = arith.constant 0 : index
    %c0_42 = arith.constant 0 : index
    %c0_43 = arith.constant 0 : index
    %68 = vector.load %arg13[%c0_41, %c0_42, %c0_43] : memref<4x8x32xbf16, #tpu.memory_space<vmem>>, vector<1x8x32xbf16>
    %69 = vector.shape_cast %68 : vector<1x8x32xbf16> to vector<8x32xbf16>
    %70 = arith.truncf %67 : vector<16x8xf32> to vector<16x8xbf16>
    %cst_44 = arith.constant dense<0.000000e+00> : vector<16x32xf32>
    %71 = tpu.matmul %70, %69, %cst_44 {dimension_numbers = #tpu.dot_dimension_numbers<[1], [0], [0], [1], [0, 0, 1, 1], [], []>} : vector<16x8xbf16>, vector<8x32xbf16>, vector<16x32xf32> -> vector<16x32xf32>
    %c1 = arith.constant 1 : index
    %c0_45 = arith.constant 0 : index
    %c0_46 = arith.constant 0 : index
    %72 = vector.load %arg7[%c1, %c0_45, %c0_46] : memref<4x32x8xbf16, #tpu.memory_space<vmem>>, vector<1x32x8xbf16>
    %73 = vector.shape_cast %72 : vector<1x32x8xbf16> to vector<32x8xbf16>
    %cst_47 = arith.constant dense<0.000000e+00> : vector<16x8xf32>
    %74 = tpu.matmul %26, %73, %cst_47 {dimension_numbers = #tpu.dot_dimension_numbers<[1], [0], [0], [1], [0, 0, 1, 1], [], []>} : vector<16x32xbf16>, vector<32x8xbf16>, vector<16x8xf32> -> vector<16x8xf32>
    %c1_48 = arith.constant 1 : index
    %c0_49 = arith.constant 0 : index
    %c0_50 = arith.constant 0 : index
    %75 = vector.load %arg8[%c1_48, %c0_49, %c0_50] : memref<4x1x8xf32, #tpu.memory_space<vmem>>, vector<1x1x8xf32>
    %76 = vector.shape_cast %75 : vector<1x1x8xf32> to vector<1x8xf32>
    %77 = vector.broadcast %76 : vector<1x8xf32> to vector<16x8xf32>
    %78 = arith.addf %74, %77 : vector<16x8xf32>
    %c1_51 = arith.constant 1 : index
    %c0_52 = arith.constant 0 : index
    %c0_53 = arith.constant 0 : index
    %79 = vector.load %arg9[%c1_51, %c0_52, %c0_53] : memref<4x32x8xbf16, #tpu.memory_space<vmem>>, vector<1x32x8xbf16>
    %80 = vector.shape_cast %79 : vector<1x32x8xbf16> to vector<32x8xbf16>
    %cst_54 = arith.constant dense<0.000000e+00> : vector<16x8xf32>
    %81 = tpu.matmul %26, %80, %cst_54 {dimension_numbers = #tpu.dot_dimension_numbers<[1], [0], [0], [1], [0, 0, 1, 1], [], []>} : vector<16x32xbf16>, vector<32x8xbf16>, vector<16x8xf32> -> vector<16x8xf32>
    %c1_55 = arith.constant 1 : index
    %c0_56 = arith.constant 0 : index
    %c0_57 = arith.constant 0 : index
    %82 = vector.load %arg10[%c1_55, %c0_56, %c0_57] : memref<4x1x8xf32, #tpu.memory_space<vmem>>, vector<1x1x8xf32>
    %83 = vector.shape_cast %82 : vector<1x1x8xf32> to vector<1x8xf32>
    %84 = vector.broadcast %83 : vector<1x8xf32> to vector<16x8xf32>
    %85 = arith.addf %81, %84 : vector<16x8xf32>
    %c1_58 = arith.constant 1 : index
    %c0_59 = arith.constant 0 : index
    %c0_60 = arith.constant 0 : index
    %86 = vector.load %arg11[%c1_58, %c0_59, %c0_60] : memref<4x32x8xbf16, #tpu.memory_space<vmem>>, vector<1x32x8xbf16>
    %87 = vector.shape_cast %86 : vector<1x32x8xbf16> to vector<32x8xbf16>
    %cst_61 = arith.constant dense<0.000000e+00> : vector<16x8xf32>
    %88 = tpu.matmul %26, %87, %cst_61 {dimension_numbers = #tpu.dot_dimension_numbers<[1], [0], [0], [1], [0, 0, 1, 1], [], []>} : vector<16x32xbf16>, vector<32x8xbf16>, vector<16x8xf32> -> vector<16x8xf32>
    %c1_62 = arith.constant 1 : index
    %c0_63 = arith.constant 0 : index
    %c0_64 = arith.constant 0 : index
    %89 = vector.load %arg12[%c1_62, %c0_63, %c0_64] : memref<4x1x8xf32, #tpu.memory_space<vmem>>, vector<1x1x8xf32>
    %90 = vector.shape_cast %89 : vector<1x1x8xf32> to vector<1x8xf32>
    %91 = vector.broadcast %90 : vector<1x8xf32> to vector<16x8xf32>
    %92 = arith.addf %88, %91 : vector<16x8xf32>
    %93 = arith.truncf %78 : vector<16x8xf32> to vector<16x8xbf16>
    %94 = arith.truncf %85 : vector<16x8xf32> to vector<16x8xbf16>
    %cst_65 = arith.constant dense<0.000000e+00> : vector<16x16xf32>
    %95 = tpu.matmul %93, %94, %cst_65 {dimension_numbers = #tpu.dot_dimension_numbers<[1], [1], [0], [0], [0, 0, 1, 0], [], []>} : vector<16x8xbf16>, vector<16x8xbf16>, vector<16x16xf32> -> vector<16x16xf32>
    %cst_66 = arith.constant 0.353553385 : f32
    %96 = vector.broadcast %cst_66 : f32 to vector<16x16xf32>
    %97 = arith.mulf %95, %96 : vector<16x16xf32>
    %98 = vector.broadcast %7 : vector<1x16xf32> to vector<16x16xf32>
    %99 = arith.addf %97, %98 : vector<16x16xf32>
    %cst_67 = arith.constant dense<0xFF800000> : vector<16xf32>
    %100 = vector.multi_reduction <maximumf>, %99, %cst_67 [1] : vector<16x16xf32> to vector<16xf32>
    %101 = vector.shape_cast %100 : vector<16xf32> to vector<16x1xf32>
    %102 = vector.broadcast %101 : vector<16x1xf32> to vector<16x16xf32>
    %103 = arith.subf %99, %102 : vector<16x16xf32>
    %104 = math.exp %103 : vector<16x16xf32>
    %cst_68 = arith.constant dense<0.000000e+00> : vector<16xf32>
    %105 = vector.multi_reduction <add>, %104, %cst_68 [1] : vector<16x16xf32> to vector<16xf32>
    %106 = vector.shape_cast %105 : vector<16xf32> to vector<16x1xf32>
    %107 = tpu.reciprocal %106 {approx = true} : vector<16x1xf32> -> vector<16x1xf32>
    %108 = vector.broadcast %107 : vector<16x1xf32> to vector<16x16xf32>
    %109 = arith.mulf %104, %108 : vector<16x16xf32>
    %110 = arith.truncf %109 : vector<16x16xf32> to vector<16x16xbf16>
    %111 = arith.truncf %92 : vector<16x8xf32> to vector<16x8xbf16>
    %cst_69 = arith.constant dense<0.000000e+00> : vector<16x8xf32>
    %112 = tpu.matmul %110, %111, %cst_69 {dimension_numbers = #tpu.dot_dimension_numbers<[1], [0], [0], [1], [0, 0, 1, 1], [], []>} : vector<16x16xbf16>, vector<16x8xbf16>, vector<16x8xf32> -> vector<16x8xf32>
    %c1_70 = arith.constant 1 : index
    %c0_71 = arith.constant 0 : index
    %c0_72 = arith.constant 0 : index
    %113 = vector.load %arg13[%c1_70, %c0_71, %c0_72] : memref<4x8x32xbf16, #tpu.memory_space<vmem>>, vector<1x8x32xbf16>
    %114 = vector.shape_cast %113 : vector<1x8x32xbf16> to vector<8x32xbf16>
    %115 = arith.truncf %112 : vector<16x8xf32> to vector<16x8xbf16>
    %cst_73 = arith.constant dense<0.000000e+00> : vector<16x32xf32>
    %116 = tpu.matmul %115, %114, %cst_73 {dimension_numbers = #tpu.dot_dimension_numbers<[1], [0], [0], [1], [0, 0, 1, 1], [], []>} : vector<16x8xbf16>, vector<8x32xbf16>, vector<16x32xf32> -> vector<16x32xf32>
    %117 = arith.addf %71, %116 : vector<16x32xf32>
    %c2 = arith.constant 2 : index
    %c0_74 = arith.constant 0 : index
    %c0_75 = arith.constant 0 : index
    %118 = vector.load %arg7[%c2, %c0_74, %c0_75] : memref<4x32x8xbf16, #tpu.memory_space<vmem>>, vector<1x32x8xbf16>
    %119 = vector.shape_cast %118 : vector<1x32x8xbf16> to vector<32x8xbf16>
    %cst_76 = arith.constant dense<0.000000e+00> : vector<16x8xf32>
    %120 = tpu.matmul %26, %119, %cst_76 {dimension_numbers = #tpu.dot_dimension_numbers<[1], [0], [0], [1], [0, 0, 1, 1], [], []>} : vector<16x32xbf16>, vector<32x8xbf16>, vector<16x8xf32> -> vector<16x8xf32>
    %c2_77 = arith.constant 2 : index
    %c0_78 = arith.constant 0 : index
    %c0_79 = arith.constant 0 : index
    %121 = vector.load %arg8[%c2_77, %c0_78, %c0_79] : memref<4x1x8xf32, #tpu.memory_space<vmem>>, vector<1x1x8xf32>
    %122 = vector.shape_cast %121 : vector<1x1x8xf32> to vector<1x8xf32>
    %123 = vector.broadcast %122 : vector<1x8xf32> to vector<16x8xf32>
    %124 = arith.addf %120, %123 : vector<16x8xf32>
    %c2_80 = arith.constant 2 : index
    %c0_81 = arith.constant 0 : index
    %c0_82 = arith.constant 0 : index
    %125 = vector.load %arg9[%c2_80, %c0_81, %c0_82] : memref<4x32x8xbf16, #tpu.memory_space<vmem>>, vector<1x32x8xbf16>
    %126 = vector.shape_cast %125 : vector<1x32x8xbf16> to vector<32x8xbf16>
    %cst_83 = arith.constant dense<0.000000e+00> : vector<16x8xf32>
    %127 = tpu.matmul %26, %126, %cst_83 {dimension_numbers = #tpu.dot_dimension_numbers<[1], [0], [0], [1], [0, 0, 1, 1], [], []>} : vector<16x32xbf16>, vector<32x8xbf16>, vector<16x8xf32> -> vector<16x8xf32>
    %c2_84 = arith.constant 2 : index
    %c0_85 = arith.constant 0 : index
    %c0_86 = arith.constant 0 : index
    %128 = vector.load %arg10[%c2_84, %c0_85, %c0_86] : memref<4x1x8xf32, #tpu.memory_space<vmem>>, vector<1x1x8xf32>
    %129 = vector.shape_cast %128 : vector<1x1x8xf32> to vector<1x8xf32>
    %130 = vector.broadcast %129 : vector<1x8xf32> to vector<16x8xf32>
    %131 = arith.addf %127, %130 : vector<16x8xf32>
    %c2_87 = arith.constant 2 : index
    %c0_88 = arith.constant 0 : index
    %c0_89 = arith.constant 0 : index
    %132 = vector.load %arg11[%c2_87, %c0_88, %c0_89] : memref<4x32x8xbf16, #tpu.memory_space<vmem>>, vector<1x32x8xbf16>
    %133 = vector.shape_cast %132 : vector<1x32x8xbf16> to vector<32x8xbf16>
    %cst_90 = arith.constant dense<0.000000e+00> : vector<16x8xf32>
    %134 = tpu.matmul %26, %133, %cst_90 {dimension_numbers = #tpu.dot_dimension_numbers<[1], [0], [0], [1], [0, 0, 1, 1], [], []>} : vector<16x32xbf16>, vector<32x8xbf16>, vector<16x8xf32> -> vector<16x8xf32>
    %c2_91 = arith.constant 2 : index
    %c0_92 = arith.constant 0 : index
    %c0_93 = arith.constant 0 : index
    %135 = vector.load %arg12[%c2_91, %c0_92, %c0_93] : memref<4x1x8xf32, #tpu.memory_space<vmem>>, vector<1x1x8xf32>
    %136 = vector.shape_cast %135 : vector<1x1x8xf32> to vector<1x8xf32>
    %137 = vector.broadcast %136 : vector<1x8xf32> to vector<16x8xf32>
    %138 = arith.addf %134, %137 : vector<16x8xf32>
    %139 = arith.truncf %124 : vector<16x8xf32> to vector<16x8xbf16>
    %140 = arith.truncf %131 : vector<16x8xf32> to vector<16x8xbf16>
    %cst_94 = arith.constant dense<0.000000e+00> : vector<16x16xf32>
    %141 = tpu.matmul %139, %140, %cst_94 {dimension_numbers = #tpu.dot_dimension_numbers<[1], [1], [0], [0], [0, 0, 1, 0], [], []>} : vector<16x8xbf16>, vector<16x8xbf16>, vector<16x16xf32> -> vector<16x16xf32>
    %cst_95 = arith.constant 0.353553385 : f32
    %142 = vector.broadcast %cst_95 : f32 to vector<16x16xf32>
    %143 = arith.mulf %141, %142 : vector<16x16xf32>
    %144 = vector.broadcast %7 : vector<1x16xf32> to vector<16x16xf32>
    %145 = arith.addf %143, %144 : vector<16x16xf32>
    %cst_96 = arith.constant dense<0xFF800000> : vector<16xf32>
    %146 = vector.multi_reduction <maximumf>, %145, %cst_96 [1] : vector<16x16xf32> to vector<16xf32>
    %147 = vector.shape_cast %146 : vector<16xf32> to vector<16x1xf32>
    %148 = vector.broadcast %147 : vector<16x1xf32> to vector<16x16xf32>
    %149 = arith.subf %145, %148 : vector<16x16xf32>
    %150 = math.exp %149 : vector<16x16xf32>
    %cst_97 = arith.constant dense<0.000000e+00> : vector<16xf32>
    %151 = vector.multi_reduction <add>, %150, %cst_97 [1] : vector<16x16xf32> to vector<16xf32>
    %152 = vector.shape_cast %151 : vector<16xf32> to vector<16x1xf32>
    %153 = tpu.reciprocal %152 {approx = true} : vector<16x1xf32> -> vector<16x1xf32>
    %154 = vector.broadcast %153 : vector<16x1xf32> to vector<16x16xf32>
    %155 = arith.mulf %150, %154 : vector<16x16xf32>
    %156 = arith.truncf %155 : vector<16x16xf32> to vector<16x16xbf16>
    %157 = arith.truncf %138 : vector<16x8xf32> to vector<16x8xbf16>
    %cst_98 = arith.constant dense<0.000000e+00> : vector<16x8xf32>
    %158 = tpu.matmul %156, %157, %cst_98 {dimension_numbers = #tpu.dot_dimension_numbers<[1], [0], [0], [1], [0, 0, 1, 1], [], []>} : vector<16x16xbf16>, vector<16x8xbf16>, vector<16x8xf32> -> vector<16x8xf32>
    %c2_99 = arith.constant 2 : index
    %c0_100 = arith.constant 0 : index
    %c0_101 = arith.constant 0 : index
    %159 = vector.load %arg13[%c2_99, %c0_100, %c0_101] : memref<4x8x32xbf16, #tpu.memory_space<vmem>>, vector<1x8x32xbf16>
    %160 = vector.shape_cast %159 : vector<1x8x32xbf16> to vector<8x32xbf16>
    %161 = arith.truncf %158 : vector<16x8xf32> to vector<16x8xbf16>
    %cst_102 = arith.constant dense<0.000000e+00> : vector<16x32xf32>
    %162 = tpu.matmul %161, %160, %cst_102 {dimension_numbers = #tpu.dot_dimension_numbers<[1], [0], [0], [1], [0, 0, 1, 1], [], []>} : vector<16x8xbf16>, vector<8x32xbf16>, vector<16x32xf32> -> vector<16x32xf32>
    %163 = arith.addf %117, %162 : vector<16x32xf32>
    %c3 = arith.constant 3 : index
    %c0_103 = arith.constant 0 : index
    %c0_104 = arith.constant 0 : index
    %164 = vector.load %arg7[%c3, %c0_103, %c0_104] : memref<4x32x8xbf16, #tpu.memory_space<vmem>>, vector<1x32x8xbf16>
    %165 = vector.shape_cast %164 : vector<1x32x8xbf16> to vector<32x8xbf16>
    %cst_105 = arith.constant dense<0.000000e+00> : vector<16x8xf32>
    %166 = tpu.matmul %26, %165, %cst_105 {dimension_numbers = #tpu.dot_dimension_numbers<[1], [0], [0], [1], [0, 0, 1, 1], [], []>} : vector<16x32xbf16>, vector<32x8xbf16>, vector<16x8xf32> -> vector<16x8xf32>
    %c3_106 = arith.constant 3 : index
    %c0_107 = arith.constant 0 : index
    %c0_108 = arith.constant 0 : index
    %167 = vector.load %arg8[%c3_106, %c0_107, %c0_108] : memref<4x1x8xf32, #tpu.memory_space<vmem>>, vector<1x1x8xf32>
    %168 = vector.shape_cast %167 : vector<1x1x8xf32> to vector<1x8xf32>
    %169 = vector.broadcast %168 : vector<1x8xf32> to vector<16x8xf32>
    %170 = arith.addf %166, %169 : vector<16x8xf32>
    %c3_109 = arith.constant 3 : index
    %c0_110 = arith.constant 0 : index
    %c0_111 = arith.constant 0 : index
    %171 = vector.load %arg9[%c3_109, %c0_110, %c0_111] : memref<4x32x8xbf16, #tpu.memory_space<vmem>>, vector<1x32x8xbf16>
    %172 = vector.shape_cast %171 : vector<1x32x8xbf16> to vector<32x8xbf16>
    %cst_112 = arith.constant dense<0.000000e+00> : vector<16x8xf32>
    %173 = tpu.matmul %26, %172, %cst_112 {dimension_numbers = #tpu.dot_dimension_numbers<[1], [0], [0], [1], [0, 0, 1, 1], [], []>} : vector<16x32xbf16>, vector<32x8xbf16>, vector<16x8xf32> -> vector<16x8xf32>
    %c3_113 = arith.constant 3 : index
    %c0_114 = arith.constant 0 : index
    %c0_115 = arith.constant 0 : index
    %174 = vector.load %arg10[%c3_113, %c0_114, %c0_115] : memref<4x1x8xf32, #tpu.memory_space<vmem>>, vector<1x1x8xf32>
    %175 = vector.shape_cast %174 : vector<1x1x8xf32> to vector<1x8xf32>
    %176 = vector.broadcast %175 : vector<1x8xf32> to vector<16x8xf32>
    %177 = arith.addf %173, %176 : vector<16x8xf32>
    %c3_116 = arith.constant 3 : index
    %c0_117 = arith.constant 0 : index
    %c0_118 = arith.constant 0 : index
    %178 = vector.load %arg11[%c3_116, %c0_117, %c0_118] : memref<4x32x8xbf16, #tpu.memory_space<vmem>>, vector<1x32x8xbf16>
    %179 = vector.shape_cast %178 : vector<1x32x8xbf16> to vector<32x8xbf16>
    %cst_119 = arith.constant dense<0.000000e+00> : vector<16x8xf32>
    %180 = tpu.matmul %26, %179, %cst_119 {dimension_numbers = #tpu.dot_dimension_numbers<[1], [0], [0], [1], [0, 0, 1, 1], [], []>} : vector<16x32xbf16>, vector<32x8xbf16>, vector<16x8xf32> -> vector<16x8xf32>
    %c3_120 = arith.constant 3 : index
    %c0_121 = arith.constant 0 : index
    %c0_122 = arith.constant 0 : index
    %181 = vector.load %arg12[%c3_120, %c0_121, %c0_122] : memref<4x1x8xf32, #tpu.memory_space<vmem>>, vector<1x1x8xf32>
    %182 = vector.shape_cast %181 : vector<1x1x8xf32> to vector<1x8xf32>
    %183 = vector.broadcast %182 : vector<1x8xf32> to vector<16x8xf32>
    %184 = arith.addf %180, %183 : vector<16x8xf32>
    %185 = arith.truncf %170 : vector<16x8xf32> to vector<16x8xbf16>
    %186 = arith.truncf %177 : vector<16x8xf32> to vector<16x8xbf16>
    %cst_123 = arith.constant dense<0.000000e+00> : vector<16x16xf32>
    %187 = tpu.matmul %185, %186, %cst_123 {dimension_numbers = #tpu.dot_dimension_numbers<[1], [1], [0], [0], [0, 0, 1, 0], [], []>} : vector<16x8xbf16>, vector<16x8xbf16>, vector<16x16xf32> -> vector<16x16xf32>
    %cst_124 = arith.constant 0.353553385 : f32
    %188 = vector.broadcast %cst_124 : f32 to vector<16x16xf32>
    %189 = arith.mulf %187, %188 : vector<16x16xf32>
    %190 = vector.broadcast %7 : vector<1x16xf32> to vector<16x16xf32>
    %191 = arith.addf %189, %190 : vector<16x16xf32>
    %cst_125 = arith.constant dense<0xFF800000> : vector<16xf32>
    %192 = vector.multi_reduction <maximumf>, %191, %cst_125 [1] : vector<16x16xf32> to vector<16xf32>
    %193 = vector.shape_cast %192 : vector<16xf32> to vector<16x1xf32>
    %194 = vector.broadcast %193 : vector<16x1xf32> to vector<16x16xf32>
    %195 = arith.subf %191, %194 : vector<16x16xf32>
    %196 = math.exp %195 : vector<16x16xf32>
    %cst_126 = arith.constant dense<0.000000e+00> : vector<16xf32>
    %197 = vector.multi_reduction <add>, %196, %cst_126 [1] : vector<16x16xf32> to vector<16xf32>
    %198 = vector.shape_cast %197 : vector<16xf32> to vector<16x1xf32>
    %199 = tpu.reciprocal %198 {approx = true} : vector<16x1xf32> -> vector<16x1xf32>
    %200 = vector.broadcast %199 : vector<16x1xf32> to vector<16x16xf32>
    %201 = arith.mulf %196, %200 : vector<16x16xf32>
    %202 = arith.truncf %201 : vector<16x16xf32> to vector<16x16xbf16>
    %203 = arith.truncf %184 : vector<16x8xf32> to vector<16x8xbf16>
    %cst_127 = arith.constant dense<0.000000e+00> : vector<16x8xf32>
    %204 = tpu.matmul %202, %203, %cst_127 {dimension_numbers = #tpu.dot_dimension_numbers<[1], [0], [0], [1], [0, 0, 1, 1], [], []>} : vector<16x16xbf16>, vector<16x8xbf16>, vector<16x8xf32> -> vector<16x8xf32>
    %c3_128 = arith.constant 3 : index
    %c0_129 = arith.constant 0 : index
    %c0_130 = arith.constant 0 : index
    %205 = vector.load %arg13[%c3_128, %c0_129, %c0_130] : memref<4x8x32xbf16, #tpu.memory_space<vmem>>, vector<1x8x32xbf16>
    %206 = vector.shape_cast %205 : vector<1x8x32xbf16> to vector<8x32xbf16>
    %207 = arith.truncf %204 : vector<16x8xf32> to vector<16x8xbf16>
    %cst_131 = arith.constant dense<0.000000e+00> : vector<16x32xf32>
    %208 = tpu.matmul %207, %206, %cst_131 {dimension_numbers = #tpu.dot_dimension_numbers<[1], [0], [0], [1], [0, 0, 1, 1], [], []>} : vector<16x8xbf16>, vector<8x32xbf16>, vector<16x32xf32> -> vector<16x32xf32>
    %209 = arith.addf %163, %208 : vector<16x32xf32>
    %c0_132 = arith.constant 0 : index
    %c0_133 = arith.constant 0 : index
    %210 = vector.load %arg14[%c0_132, %c0_133] : memref<1x32xf32, #tpu.memory_space<vmem>>, vector<1x32xf32>
    %211 = vector.broadcast %210 : vector<1x32xf32> to vector<16x32xf32>
    %212 = arith.addf %209, %211 : vector<16x32xf32>
    %213 = arith.addf %212, %25 : vector<16x32xf32>
    %c0_134 = arith.constant 0 : index
    %c0_135 = arith.constant 0 : index
    %214 = vector.load %arg15[%c0_134, %c0_135] : memref<1x32xf32, #tpu.memory_space<vmem>>, vector<1x32xf32>
    %c0_136 = arith.constant 0 : index
    %c0_137 = arith.constant 0 : index
    %215 = vector.load %arg16[%c0_136, %c0_137] : memref<1x32xf32, #tpu.memory_space<vmem>>, vector<1x32xf32>
    %cst_138 = arith.constant dense<0.000000e+00> : vector<16xf32>
    %216 = vector.multi_reduction <add>, %213, %cst_138 [1] : vector<16x32xf32> to vector<16xf32>
    %217 = vector.shape_cast %216 : vector<16xf32> to vector<16x1xf32>
    %cst_139 = arith.constant 3.200000e+01 : f32
    %218 = vector.broadcast %cst_139 : f32 to vector<16x1xf32>
    %219 = arith.divf %217, %218 : vector<16x1xf32>
    %220 = vector.broadcast %219 : vector<16x1xf32> to vector<16x32xf32>
    %221 = arith.subf %213, %220 : vector<16x32xf32>
    %222 = arith.mulf %221, %221 : vector<16x32xf32>
    %cst_140 = arith.constant dense<0.000000e+00> : vector<16xf32>
    %223 = vector.multi_reduction <add>, %222, %cst_140 [1] : vector<16x32xf32> to vector<16xf32>
    %224 = vector.shape_cast %223 : vector<16xf32> to vector<16x1xf32>
    %cst_141 = arith.constant 3.200000e+01 : f32
    %225 = vector.broadcast %cst_141 : f32 to vector<16x1xf32>
    %226 = arith.divf %224, %225 : vector<16x1xf32>
    %227 = vector.broadcast %219 : vector<16x1xf32> to vector<16x32xf32>
    %228 = arith.subf %213, %227 : vector<16x32xf32>
    %cst_142 = arith.constant 9.99999996E-13 : f32
    %229 = vector.broadcast %cst_142 : f32 to vector<16x1xf32>
    %230 = arith.addf %226, %229 : vector<16x1xf32>
    %231 = math.sqrt %230 : vector<16x1xf32>
    %232 = vector.broadcast %231 : vector<16x1xf32> to vector<16x32xf32>
    %233 = arith.divf %228, %232 : vector<16x32xf32>
    %234 = vector.broadcast %214 : vector<1x32xf32> to vector<16x32xf32>
    %235 = arith.mulf %233, %234 : vector<16x32xf32>
    %236 = vector.broadcast %215 : vector<1x32xf32> to vector<16x32xf32>
    %237 = arith.addf %235, %236 : vector<16x32xf32>
    %c0_143 = arith.constant 0 : index
    %c0_144 = arith.constant 0 : index
    %238 = vector.load %arg17[%c0_143, %c0_144] : memref<32x64xbf16, #tpu.memory_space<vmem>>, vector<32x64xbf16>
    %239 = arith.truncf %237 : vector<16x32xf32> to vector<16x32xbf16>
    %cst_145 = arith.constant dense<0.000000e+00> : vector<16x64xf32>
    %240 = tpu.matmul %239, %238, %cst_145 {dimension_numbers = #tpu.dot_dimension_numbers<[1], [0], [0], [1], [0, 0, 1, 1], [], []>} : vector<16x32xbf16>, vector<32x64xbf16>, vector<16x64xf32> -> vector<16x64xf32>
    %c0_146 = arith.constant 0 : index
    %c0_147 = arith.constant 0 : index
    %241 = vector.load %arg18[%c0_146, %c0_147] : memref<1x64xf32, #tpu.memory_space<vmem>>, vector<1x64xf32>
    %242 = vector.broadcast %241 : vector<1x64xf32> to vector<16x64xf32>
    %243 = arith.addf %240, %242 : vector<16x64xf32>
    %cst_148 = arith.constant 5.000000e-01 : f32
    %244 = vector.broadcast %cst_148 : f32 to vector<16x64xf32>
    %245 = arith.mulf %244, %243 : vector<16x64xf32>
    %cst_149 = arith.constant 4.471500e-02 : f32
    %246 = vector.broadcast %cst_149 : f32 to vector<16x64xf32>
    %247 = arith.mulf %246, %243 : vector<16x64xf32>
    %248 = arith.mulf %247, %243 : vector<16x64xf32>
    %249 = arith.mulf %248, %243 : vector<16x64xf32>
    %250 = arith.addf %243, %249 : vector<16x64xf32>
    %cst_150 = arith.constant 0.797884583 : f32
    %251 = vector.broadcast %cst_150 : f32 to vector<16x64xf32>
    %252 = arith.mulf %251, %250 : vector<16x64xf32>
    %253 = math.tanh %252 : vector<16x64xf32>
    %cst_151 = arith.constant 1.000000e+00 : f32
    %254 = vector.broadcast %cst_151 : f32 to vector<16x64xf32>
    %255 = arith.addf %254, %253 : vector<16x64xf32>
    %256 = arith.mulf %245, %255 : vector<16x64xf32>
    %c0_152 = arith.constant 0 : index
    %c0_153 = arith.constant 0 : index
    %257 = vector.load %arg19[%c0_152, %c0_153] : memref<64x32xbf16, #tpu.memory_space<vmem>>, vector<64x32xbf16>
    %258 = arith.truncf %256 : vector<16x64xf32> to vector<16x64xbf16>
    %cst_154 = arith.constant dense<0.000000e+00> : vector<16x32xf32>
    %259 = tpu.matmul %258, %257, %cst_154 {dimension_numbers = #tpu.dot_dimension_numbers<[1], [0], [0], [1], [0, 0, 1, 1], [], []>} : vector<16x64xbf16>, vector<64x32xbf16>, vector<16x32xf32> -> vector<16x32xf32>
    %c0_155 = arith.constant 0 : index
    %c0_156 = arith.constant 0 : index
    %260 = vector.load %arg20[%c0_155, %c0_156] : memref<1x32xf32, #tpu.memory_space<vmem>>, vector<1x32xf32>
    %261 = vector.broadcast %260 : vector<1x32xf32> to vector<16x32xf32>
    %262 = arith.addf %259, %261 : vector<16x32xf32>
    %263 = arith.addf %262, %237 : vector<16x32xf32>
    %c0_157 = arith.constant 0 : index
    %c0_158 = arith.constant 0 : index
    %264 = vector.load %arg21[%c0_157, %c0_158] : memref<1x32xf32, #tpu.memory_space<vmem>>, vector<1x32xf32>
    %c0_159 = arith.constant 0 : index
    %c0_160 = arith.constant 0 : index
    %265 = vector.load %arg22[%c0_159, %c0_160] : memref<1x32xf32, #tpu.memory_space<vmem>>, vector<1x32xf32>
    %cst_161 = arith.constant dense<0.000000e+00> : vector<16xf32>
    %266 = vector.multi_reduction <add>, %263, %cst_161 [1] : vector<16x32xf32> to vector<16xf32>
    %267 = vector.shape_cast %266 : vector<16xf32> to vector<16x1xf32>
    %cst_162 = arith.constant 3.200000e+01 : f32
    %268 = vector.broadcast %cst_162 : f32 to vector<16x1xf32>
    %269 = arith.divf %267, %268 : vector<16x1xf32>
    %270 = vector.broadcast %269 : vector<16x1xf32> to vector<16x32xf32>
    %271 = arith.subf %263, %270 : vector<16x32xf32>
    %272 = arith.mulf %271, %271 : vector<16x32xf32>
    %cst_163 = arith.constant dense<0.000000e+00> : vector<16xf32>
    %273 = vector.multi_reduction <add>, %272, %cst_163 [1] : vector<16x32xf32> to vector<16xf32>
    %274 = vector.shape_cast %273 : vector<16xf32> to vector<16x1xf32>
    %cst_164 = arith.constant 3.200000e+01 : f32
    %275 = vector.broadcast %cst_164 : f32 to vector<16x1xf32>
    %276 = arith.divf %274, %275 : vector<16x1xf32>
    %277 = vector.broadcast %269 : vector<16x1xf32> to vector<16x32xf32>
    %278 = arith.subf %263, %277 : vector<16x32xf32>
    %cst_165 = arith.constant 9.99999996E-13 : f32
    %279 = vector.broadcast %cst_165 : f32 to vector<16x1xf32>
    %280 = arith.addf %276, %279 : vector<16x1xf32>
    %281 = math.sqrt %280 : vector<16x1xf32>
    %282 = vector.broadcast %281 : vector<16x1xf32> to vector<16x32xf32>
    %283 = arith.divf %278, %282 : vector<16x32xf32>
    %284 = vector.broadcast %264 : vector<1x32xf32> to vector<16x32xf32>
    %285 = arith.mulf %283, %284 : vector<16x32xf32>
    %286 = vector.broadcast %265 : vector<1x32xf32> to vector<16x32xf32>
    %287 = arith.addf %285, %286 : vector<16x32xf32>
    %288 = arith.truncf %287 : vector<16x32xf32> to vector<16x32xbf16>
    %289 = vector.extract_strided_slice %288 {offsets = [0, 0], sizes = [1, 32], strides = [1, 1]} : vector<16x32xbf16> to vector<1x32xbf16>
    %c0_166 = arith.constant 0 : index
    %c0_167 = arith.constant 0 : index
    %290 = vector.load %arg23[%c0_166, %c0_167] : memref<32x32xbf16, #tpu.memory_space<vmem>>, vector<32x32xbf16>
    %cst_168 = arith.constant dense<0.000000e+00> : vector<1x32xf32>
    %291 = tpu.matmul %289, %290, %cst_168 {dimension_numbers = #tpu.dot_dimension_numbers<[1], [0], [0], [1], [0, 0, 1, 1], [], []>} : vector<1x32xbf16>, vector<32x32xbf16>, vector<1x32xf32> -> vector<1x32xf32>
    %c0_169 = arith.constant 0 : index
    %c0_170 = arith.constant 0 : index
    %292 = vector.load %arg24[%c0_169, %c0_170] : memref<1x32xf32, #tpu.memory_space<vmem>>, vector<1x32xf32>
    %293 = arith.addf %291, %292 : vector<1x32xf32>
    %294 = math.tanh %293 : vector<1x32xf32>
    %c0_171 = arith.constant 0 : index
    %c0_172 = arith.constant 0 : index
    %295 = vector.load %arg29[%c0_171, %c0_172] : memref<32x3xbf16, #tpu.memory_space<vmem>>, vector<32x3xbf16>
    %296 = arith.truncf %294 : vector<1x32xf32> to vector<1x32xbf16>
    %cst_173 = arith.constant dense<0.000000e+00> : vector<1x3xf32>
    %297 = tpu.matmul %296, %295, %cst_173 {dimension_numbers = #tpu.dot_dimension_numbers<[1], [0], [0], [1], [0, 0, 1, 1], [], []>} : vector<1x32xbf16>, vector<32x3xbf16>, vector<1x3xf32> -> vector<1x3xf32>
    %c0_174 = arith.constant 0 : index
    %c0_175 = arith.constant 0 : index
    %298 = vector.load %arg30[%c0_174, %c0_175] : memref<1x3xf32, #tpu.memory_space<vmem>>, vector<1x3xf32>
    %299 = arith.addf %297, %298 : vector<1x3xf32>
    %c0_176 = arith.constant 0 : index
    %c0_177 = arith.constant 0 : index
    %c0_178 = arith.constant 0 : index
    %300 = vector.load %arg32[%c0_176, %c0_177, %c0_178] : memref<1x1x3xf32, #tpu.memory_space<vmem>>, vector<1x1x3xf32>
    %301 = vector.shape_cast %300 : vector<1x1x3xf32> to vector<1x3xf32>
    %302 = vector.shape_cast %299 : vector<1x3xf32> to vector<1x1x3xf32>
    tpu.vector_store %arg32[%c0_176, %c0_177, %c0_178], %302 {strides = array<i32>} : memref<1x1x3xf32, #tpu.memory_space<vmem>>, vector<1x1x3xf32>,
    %c0_179 = arith.constant 0 : index
    %c0_180 = arith.constant 0 : index
    %303 = vector.load %arg27[%c0_179, %c0_180] : memref<2x32xbf16, #tpu.memory_space<vmem>>, vector<2x32xbf16>
    %cst_181 = arith.constant dense<0.000000e+00> : vector<2x16xf32>
    %304 = tpu.matmul %303, %288, %cst_181 {dimension_numbers = #tpu.dot_dimension_numbers<[1], [1], [0], [0], [0, 0, 1, 0], [], []>} : vector<2x32xbf16>, vector<16x32xbf16>, vector<2x16xf32> -> vector<2x16xf32>
    %c0_182 = arith.constant 0 : index
    %c0_183 = arith.constant 0 : index
    %305 = vector.load %arg28[%c0_182, %c0_183] : memref<2x1xf32, #tpu.memory_space<vmem>>, vector<2x1xf32>
    %306 = vector.broadcast %305 : vector<2x1xf32> to vector<2x16xf32>
    %307 = arith.addf %304, %306 : vector<2x16xf32>
    %c0_184 = arith.constant 0 : index
    %c0_185 = arith.constant 0 : index
    %c0_186 = arith.constant 0 : index
    %308 = vector.load %arg3[%c0_184, %c0_185, %c0_186] : memref<1x1x16xf32, #tpu.memory_space<vmem>>, vector<1x1x16xf32>
    %309 = vector.shape_cast %308 : vector<1x1x16xf32> to vector<1x16xf32>
    %cst_187 = arith.constant 1.000000e+00 : f32
    %310 = vector.broadcast %cst_187 : f32 to vector<1x16xf32>
    %311 = arith.subf %310, %309 : vector<1x16xf32>
    %cst_188 = arith.constant 1.000000e+30 : f32
    %312 = vector.broadcast %cst_188 : f32 to vector<1x16xf32>
    %313 = arith.mulf %311, %312 : vector<1x16xf32>
    %314 = vector.broadcast %313 : vector<1x16xf32> to vector<2x16xf32>
    %315 = arith.subf %307, %314 : vector<2x16xf32>
    %c0_189 = arith.constant 0 : index
    %c0_190 = arith.constant 0 : index
    %c0_191 = arith.constant 0 : index
    %316 = vector.load %arg31[%c0_189, %c0_190, %c0_191] : memref<1x2x16xf32, #tpu.memory_space<vmem>>, vector<1x2x16xf32>
    %317 = vector.shape_cast %316 : vector<1x2x16xf32> to vector<2x16xf32>
    %318 = vector.shape_cast %315 : vector<2x16xf32> to vector<1x2x16xf32>
    tpu.vector_store %arg31[%c0_189, %c0_190, %c0_191], %318 {strides = array<i32>} : memref<1x2x16xf32, #tpu.memory_space<vmem>>, vector<1x2x16xf32>,
    %c0_192 = arith.constant 0 : index
    %c0_193 = arith.constant 0 : index
    %319 = vector.load %arg25[%c0_192, %c0_193] : memref<1x32xbf16, #tpu.memory_space<vmem>>, vector<1x32xbf16>
    %cst_194 = arith.constant dense<0.000000e+00> : vector<1x16xf32>
    %320 = tpu.matmul %319, %288, %cst_194 {dimension_numbers = #tpu.dot_dimension_numbers<[1], [1], [0], [0], [0, 0, 1, 0], [], []>} : vector<1x32xbf16>, vector<16x32xbf16>, vector<1x16xf32> -> vector<1x16xf32>
    %c0_195 = arith.constant 0 : index
    %c0_196 = arith.constant 0 : index
    %c0_197 = arith.constant 0 : index
    %321 = vector.load %arg4[%c0_195, %c0_196, %c0_197] : memref<1x8x16xbf16, #tpu.memory_space<vmem>>, vector<1x8x16xbf16>
    %322 = vector.shape_cast %321 : vector<1x8x16xbf16> to vector<8x16xbf16>
    %323 = arith.truncf %320 : vector<1x16xf32> to vector<1x16xbf16>
    %cst_198 = arith.constant dense<0.000000e+00> : vector<1x8xf32>
    %324 = tpu.matmul %323, %322, %cst_198 {dimension_numbers = #tpu.dot_dimension_numbers<[1], [1], [0], [0], [0, 0, 1, 0], [], []>} : vector<1x16xbf16>, vector<8x16xbf16>, vector<1x8xf32> -> vector<1x8xf32>
    %cst_199 = arith.constant 1.000000e+00 : f32
    %325 = vector.broadcast %cst_199 : f32 to vector<1x16xf32>
    %326 = arith.truncf %325 : vector<1x16xf32> to vector<1x16xbf16>
    %cst_200 = arith.constant dense<0.000000e+00> : vector<1x8xf32>
    %327 = tpu.matmul %326, %322, %cst_200 {dimension_numbers = #tpu.dot_dimension_numbers<[1], [1], [0], [0], [0, 0, 1, 0], [], []>} : vector<1x16xbf16>, vector<8x16xbf16>, vector<1x8xf32> -> vector<1x8xf32>
    %cst_201 = arith.constant 1.000000e-30 : f32
    %328 = vector.broadcast %cst_201 : f32 to vector<1x8xf32>
    %329 = arith.addf %327, %328 : vector<1x8xf32>
    %330 = tpu.reciprocal %329 {approx = true} : vector<1x8xf32> -> vector<1x8xf32>
    %331 = arith.mulf %324, %330 : vector<1x8xf32>
    %c0_202 = arith.constant 0 : index
    %c0_203 = arith.constant 0 : index
    %332 = vector.load %arg26[%c0_202, %c0_203] : memref<1x1xf32, #tpu.memory_space<vmem>>, vector<1x1xf32>
    %333 = vector.broadcast %332 : vector<1x1xf32> to vector<1x8xf32>
    %334 = arith.addf %331, %333 : vector<1x8xf32>
    %c0_204 = arith.constant 0 : index
    %c0_205 = arith.constant 0 : index
    %c0_206 = arith.constant 0 : index
    %335 = vector.load %arg33[%c0_204, %c0_205, %c0_206] : memref<1x1x8xf32, #tpu.memory_space<vmem>>, vector<1x1x8xf32>
    %336 = vector.shape_cast %335 : vector<1x1x8xf32> to vector<1x8xf32>
    %337 = vector.shape_cast %334 : vector<1x8xf32> to vector<1x1x8xf32>
    tpu.vector_store %arg33[%c0_204, %c0_205, %c0_206], %337 {strides = array<i32>} : memref<1x1x8xf32, #tpu.memory_space<vmem>>, vector<1x1x8xf32>,
    return
  }
  func.func @transform_0(%arg0: i32) -> (i32, i32, i32) {
    %c0_i32 = arith.constant 0 : i32
    %c0_i32_0 = arith.constant 0 : i32
    %c0_i32_1 = arith.constant 0 : i32
    return %arg0, %c0_i32, %c0_i32_0 : i32, i32, i32
  }
  func.func @transform_1(%arg0: i32) -> (i32, i32, i32) {
    %c0_i32 = arith.constant 0 : i32
    %c0_i32_0 = arith.constant 0 : i32
    %c0_i32_1 = arith.constant 0 : i32
    return %arg0, %c0_i32, %c0_i32_0 : i32, i32, i32
  }
  func.func @transform_2(%arg0: i32) -> (i32, i32, i32) {
    %c0_i32 = arith.constant 0 : i32
    %c0_i32_0 = arith.constant 0 : i32
    %c0_i32_1 = arith.constant 0 : i32
    return %arg0, %c0_i32, %c0_i32_0 : i32, i32, i32
  }
  func.func @transform_3(%arg0: i32) -> (i32, i32, i32) {
    %c0_i32 = arith.constant 0 : i32
    %c0_i32_0 = arith.constant 0 : i32
    %c0_i32_1 = arith.constant 0 : i32
    return %arg0, %c0_i32, %c0_i32_0 : i32, i32, i32
  }
  func.func @transform_4(%arg0: i32) -> (i32, i32) {
    %c0_i32 = arith.constant 0 : i32
    %c0_i32_0 = arith.constant 0 : i32
    %c0_i32_1 = arith.constant 0 : i32
    return %c0_i32, %c0_i32_0 : i32, i32
  }
  func.func @transform_5(%arg0: i32) -> (i32, i32) {
    %c0_i32 = arith.constant 0 : i32
    %c0_i32_0 = arith.constant 0 : i32
    %c0_i32_1 = arith.constant 0 : i32
    return %c0_i32, %c0_i32_0 : i32, i32
  }
  func.func @transform_6(%arg0: i32) -> (i32, i32, i32) {
    %c0_i32 = arith.constant 0 : i32
    %c0_i32_0 = arith.constant 0 : i32
    %c0_i32_1 = arith.constant 0 : i32
    %c0_i32_2 = arith.constant 0 : i32
    return %c0_i32, %c0_i32_0, %c0_i32_1 : i32, i32, i32
  }
  func.func @transform_7(%arg0: i32) -> (i32, i32, i32) {
    %c0_i32 = arith.constant 0 : i32
    %c0_i32_0 = arith.constant 0 : i32
    %c0_i32_1 = arith.constant 0 : i32
    %c0_i32_2 = arith.constant 0 : i32
    return %c0_i32, %c0_i32_0, %c0_i32_1 : i32, i32, i32
  }
  func.func @transform_8(%arg0: i32) -> (i32, i32, i32) {
    %c0_i32 = arith.constant 0 : i32
    %c0_i32_0 = arith.constant 0 : i32
    %c0_i32_1 = arith.constant 0 : i32
    %c0_i32_2 = arith.constant 0 : i32
    return %c0_i32, %c0_i32_0, %c0_i32_1 : i32, i32, i32
  }
  func.func @transform_9(%arg0: i32) -> (i32, i32, i32) {
    %c0_i32 = arith.constant 0 : i32
    %c0_i32_0 = arith.constant 0 : i32
    %c0_i32_1 = arith.constant 0 : i32
    %c0_i32_2 = arith.constant 0 : i32
    return %c0_i32, %c0_i32_0, %c0_i32_1 : i32, i32, i32
  }
  func.func @transform_10(%arg0: i32) -> (i32, i32, i32) {
    %c0_i32 = arith.constant 0 : i32
    %c0_i32_0 = arith.constant 0 : i32
    %c0_i32_1 = arith.constant 0 : i32
    %c0_i32_2 = arith.constant 0 : i32
    return %c0_i32, %c0_i32_0, %c0_i32_1 : i32, i32, i32
  }
  func.func @transform_11(%arg0: i32) -> (i32, i32, i32) {
    %c0_i32 = arith.constant 0 : i32
    %c0_i32_0 = arith.constant 0 : i32
    %c0_i32_1 = arith.constant 0 : i32
    %c0_i32_2 = arith.constant 0 : i32
    return %c0_i32, %c0_i32_0, %c0_i32_1 : i32, i32, i32
  }
  func.func @transform_12(%arg0: i32) -> (i32, i32, i32) {
    %c0_i32 = arith.constant 0 : i32
    %c0_i32_0 = arith.constant 0 : i32
    %c0_i32_1 = arith.constant 0 : i32
    %c0_i32_2 = arith.constant 0 : i32
    return %c0_i32, %c0_i32_0, %c0_i32_1 : i32, i32, i32
  }
  func.func @transform_13(%arg0: i32) -> (i32, i32) {
    %c0_i32 = arith.constant 0 : i32
    %c0_i32_0 = arith.constant 0 : i32
    %c0_i32_1 = arith.constant 0 : i32
    return %c0_i32, %c0_i32_0 : i32, i32
  }
  func.func @transform_14(%arg0: i32) -> (i32, i32) {
    %c0_i32 = arith.constant 0 : i32
    %c0_i32_0 = arith.constant 0 : i32
    %c0_i32_1 = arith.constant 0 : i32
    return %c0_i32, %c0_i32_0 : i32, i32
  }
  func.func @transform_15(%arg0: i32) -> (i32, i32) {
    %c0_i32 = arith.constant 0 : i32
    %c0_i32_0 = arith.constant 0 : i32
    %c0_i32_1 = arith.constant 0 : i32
    return %c0_i32, %c0_i32_0 : i32, i32
  }
  func.func @transform_16(%arg0: i32) -> (i32, i32) {
    %c0_i32 = arith.constant 0 : i32
    %c0_i32_0 = arith.constant 0 : i32
    %c0_i32_1 = arith.constant 0 : i32
    return %c0_i32, %c0_i32_0 : i32, i32
  }
  func.func @transform_17(%arg0: i32) -> (i32, i32) {
    %c0_i32 = arith.constant 0 : i32
    %c0_i32_0 = arith.constant 0 : i32
    %c0_i32_1 = arith.constant 0 : i32
    return %c0_i32, %c0_i32_0 : i32, i32
  }
  func.func @transform_18(%arg0: i32) -> (i32, i32) {
    %c0_i32 = arith.constant 0 : i32
    %c0_i32_0 = arith.constant 0 : i32
    %c0_i32_1 = arith.constant 0 : i32
    return %c0_i32, %c0_i32_0 : i32, i32
  }
  func.func @transform_19(%arg0: i32) -> (i32, i32) {
    %c0_i32 = arith.constant 0 : i32
    %c0_i32_0 = arith.constant 0 : i32
    %c0_i32_1 = arith.constant 0 : i32
    return %c0_i32, %c0_i32_0 : i32, i32
  }
  func.func @transform_20(%arg0: i32) -> (i32, i32) {
    %c0_i32 = arith.constant 0 : i32
    %c0_i32_0 = arith.constant 0 : i32
    %c0_i32_1 = arith.constant 0 : i32
    return %c0_i32, %c0_i32_0 : i32, i32
  }
  func.func @transform_21(%arg0: i32) -> (i32, i32) {
    %c0_i32 = arith.constant 0 : i32
    %c0_i32_0 = arith.constant 0 : i32
    %c0_i32_1 = arith.constant 0 : i32
    return %c0_i32, %c0_i32_0 : i32, i32
  }
  func.func @transform_22(%arg0: i32) -> (i32, i32) {
    %c0_i32 = arith.constant 0 : i32
    %c0_i32_0 = arith.constant 0 : i32
    %c0_i32_1 = arith.constant 0 : i32
    return %c0_i32, %c0_i32_0 : i32, i32
  }
  func.func @transform_23(%arg0: i32) -> (i32, i32) {
    %c0_i32 = arith.constant 0 : i32
    %c0_i32_0 = arith.constant 0 : i32
    %c0_i32_1 = arith.constant 0 : i32
    return %c0_i32, %c0_i32_0 : i32, i32
  }
  func.func @transform_24(%arg0: i32) -> (i32, i32) {
    %c0_i32 = arith.constant 0 : i32
    %c0_i32_0 = arith.constant 0 : i32
    %c0_i32_1 = arith.constant 0 : i32
    return %c0_i32, %c0_i32_0 : i32, i32
  }
  func.func @transform_25(%arg0: i32) -> (i32, i32) {
    %c0_i32 = arith.constant 0 : i32
    %c0_i32_0 = arith.constant 0 : i32
    %c0_i32_1 = arith.constant 0 : i32
    return %c0_i32, %c0_i32_0 : i32, i32
  }
  func.func @transform_26(%arg0: i32) -> (i32, i32) {
    %c0_i32 = arith.constant 0 : i32
    %c0_i32_0 = arith.constant 0 : i32
    %c0_i32_1 = arith.constant 0 : i32
    return %c0_i32, %c0_i32_0 : i32, i32
  }
  func.func @transform_27(%arg0: i32) -> (i32, i32) {
    %c0_i32 = arith.constant 0 : i32
    %c0_i32_0 = arith.constant 0 : i32
    %c0_i32_1 = arith.constant 0 : i32
    return %c0_i32, %c0_i32_0 : i32, i32
  }
  func.func @transform_28(%arg0: i32) -> (i32, i32) {
    %c0_i32 = arith.constant 0 : i32
    %c0_i32_0 = arith.constant 0 : i32
    %c0_i32_1 = arith.constant 0 : i32
    return %c0_i32, %c0_i32_0 : i32, i32
  }
  func.func @transform_29(%arg0: i32) -> (i32, i32) {
    %c0_i32 = arith.constant 0 : i32
    %c0_i32_0 = arith.constant 0 : i32
    %c0_i32_1 = arith.constant 0 : i32
    return %c0_i32, %c0_i32_0 : i32, i32
  }
  func.func @transform_30(%arg0: i32) -> (i32, i32, i32) {
    %c0_i32 = arith.constant 0 : i32
    %c0_i32_0 = arith.constant 0 : i32
    %c0_i32_1 = arith.constant 0 : i32
    return %arg0, %c0_i32, %c0_i32_0 : i32, i32, i32
  }
  func.func @transform_31(%arg0: i32) -> (i32, i32, i32) {
    %c0_i32 = arith.constant 0 : i32
    %c0_i32_0 = arith.constant 0 : i32
    %c0_i32_1 = arith.constant 0 : i32
    return %arg0, %c0_i32, %c0_i32_0 : i32, i32, i32
  }
  func.func @transform_32(%arg0: i32) -> (i32, i32, i32) {
    %c0_i32 = arith.constant 0 : i32
    %c0_i32_0 = arith.constant 0 : i32
    %c0_i32_1 = arith.constant 0 : i32
    return %arg0, %c0_i32, %c0_i32_0 : i32, i32, i32
  }
}

</mosaic_0001>

<llo_original>
// kernel: tpu_custom_call.1
$region0: #{tpu_custom_call.1}
  #allocation0 [shape = 'u32[]', space=smem, size = 0x4, offset = 0x4, fixed_abs, tag = 'smem constant byte address 0x4 - core index']
  #allocation1 [shape = 'u32[72,128]{1,0:T(1,128)}', space=vmem, size = 0x9000, scoped, tag = 'internal scratch']
  #allocation2 [shape = 'f32[1,1]{1,0:T(1,128)S(1)}', space=vmem, size = 0x200, scoped, tag = 'scoped memory for tpu_custom_call.1']
  %s0 = inlined_call_operand.smem [shape: u32[33], index: -1, kind: input, shape index: {}]
  %s1 = sld [smem:[%s0]]
  %s2 = scalar_lea.smem %s0, 1
  %s3 = sld [smem:[%s2]]
  %s4 = scalar_lea.smem %s0, 2
  %s5 = sld [smem:[%s4]]
  %s6 = scalar_lea.smem %s0, 3
  %s7 = sld [smem:[%s6]]
  %s8 = scalar_lea.smem %s0, 4
  %s9 = sld [smem:[%s8]]
  %s10 = scalar_lea.smem %s0, 5
  %s11 = sld [smem:[%s10]]
  %s12 = scalar_lea.smem %s0, 6
  %s13 = sld [smem:[%s12]]
  %s14 = scalar_lea.smem %s0, 7
  %s15 = sld [smem:[%s14]]
  %s16 = scalar_lea.smem %s0, 8
  %s17 = sld [smem:[%s16]]
  %s18 = scalar_lea.smem %s0, 9
  %s19 = sld [smem:[%s18]]
  %s20 = scalar_lea.smem %s0, 10
  %s21 = sld [smem:[%s20]]
  %s22 = scalar_lea.smem %s0, 11
  %s23 = sld [smem:[%s22]]
  %s24 = scalar_lea.smem %s0, 12
  %s25 = sld [smem:[%s24]]
  %s26 = scalar_lea.smem %s0, 13
  %s27 = sld [smem:[%s26]]
  %s28 = scalar_lea.smem %s0, 14
  %s29 = sld [smem:[%s28]]
  %s30 = scalar_lea.smem %s0, 15
  %s31 = sld [smem:[%s30]]
  %s32 = scalar_lea.smem %s0, 16
  %s33 = sld [smem:[%s32]]
  %s34 = scalar_lea.smem %s0, 17
  %s35 = sld [smem:[%s34]]
  %s36 = scalar_lea.smem %s0, 18
  %s37 = sld [smem:[%s36]]
  %s38 = scalar_lea.smem %s0, 19
  %s39 = sld [smem:[%s38]]
  %s40 = scalar_lea.smem %s0, 20
  %s41 = sld [smem:[%s40]]
  %s42 = scalar_lea.smem %s0, 21
  %s43 = sld [smem:[%s42]]
  %s44 = scalar_lea.smem %s0, 22
  %s45 = sld [smem:[%s44]]
  %s46 = scalar_lea.smem %s0, 23
  %s47 = sld [smem:[%s46]]
  %s48 = scalar_lea.smem %s0, 24
  %s49 = sld [smem:[%s48]]
  %s50 = scalar_lea.smem %s0, 25
  %s51 = sld [smem:[%s50]]
  %s52 = scalar_lea.smem %s0, 26
  %s53 = sld [smem:[%s52]]
  %s54 = scalar_lea.smem %s0, 27
  %s55 = sld [smem:[%s54]]
  %s56 = scalar_lea.smem %s0, 28
  %s57 = sld [smem:[%s56]]
  %s58 = scalar_lea.smem %s0, 29
  %s59 = sld [smem:[%s58]]
  %s60 = scalar_lea.smem %s0, 30
  %s61 = sld [smem:[%s60]]
  %s62 = scalar_lea.smem %s0, 31
  %s63 = sld [smem:[%s62]]
  %s64 = scalar_lea.smem %s0, 32
  %s65 = sld [smem:[%s64]]
  %66 = xla_tuple %s61, %s63, %s65
  %s67 = sld [smem:[#allocation0]]
  $region169: #{tpu_custom_call.1} parent=0
    _
  %s69 = ssub.s32 1, %s67
  %s70 = scalar_select 0, %s69, %s67
  %v71 = vstv %s51
  %72 = vst [vmem:[#allocation2] sm:$0x1] %v71
  $region1: #{tpu_custom_call.1} parent=0
    #allocation3 [shape = 'u8[2048]{0}', space=vmem, size = 0x800, scoped, tag = 'output window, operand 0']
    #allocation4 [shape = 's32[2]{0}', space=sflag, size = 0x8, scoped, tag = 'scoped memory for tpu_custom_call.1']
    #allocation5 [shape = 'u8[1024]{0}', space=vmem, size = 0x400, scoped, tag = 'output window, operand 1']
    #allocation6 [shape = 's32[2]{0}', space=sflag, size = 0x8, scoped, tag = 'scoped memory for tpu_custom_call.1']
    #allocation7 [shape = 'u8[1024]{0}', space=vmem, size = 0x400, scoped, tag = 'output window, operand 2']
    %73 = vsyncpa [#allocation4], 0
    %s74 = scalar_lea.sflag [#allocation4], 1
    %75 = vsyncpa %s74, 0
    %76 = vsyncpa [#allocation6], 0
    %s77 = scalar_lea.sflag [#allocation6], 1
    %78 = vsyncpa %s77, 0
    loop: start=0, step=1, limit=4
    $region2: #{tpu_custom_call.1} parent=1 // loop_pre_header
      _
    $region3: #{tpu_custom_call.1} parent=1 // loop_header
      %s80 = sphi 0, %s84
      %p81 = scmp.ge.s32.totalorder %s80, 4
      %s90 = sphi 0, %s92
      %s93 = sphi 0, %s90
      %s94 = sphi 0, %s93
      %s110 = sphi 0, %s94
      %s116 = sphi 0, %s118
      %s119 = sphi 0, %s116
      %s120 = sphi 0, %s119
      %s136 = sphi 0, %s120
      %s142 = sphi 0, %s144
      %s145 = sphi 0, %s142
      %s146 = sphi 0, %s145
      %s162 = sphi 0, %s146
      %s168 = sphi 0, %s170
      %s171 = sphi 0, %s168
      %s172 = sphi 0, %s171
      %s188 = sphi 0, %s172
      %s192 = sphi 0, %s192
      %s194 = sphi 0, %s192
      %s195 = sphi 0, %s194
      %s209 = sphi 0, %s195
      %s213 = sphi 0, %s213
      %s215 = sphi 0, %s213
      %s216 = sphi 0, %s215
      %s230 = sphi 0, %s216
      %s234 = sphi 0, %s234
      %s236 = sphi 0, %s234
      %s237 = sphi 0, %s236
      %s251 = sphi 0, %s237
      %s255 = sphi 0, %s255
      %s257 = sphi 0, %s255
      %s258 = sphi 0, %s257
      %s272 = sphi 0, %s258
      %s276 = sphi 0, %s276
      %s278 = sphi 0, %s276
      %s279 = sphi 0, %s278
      %s293 = sphi 0, %s279
      %s297 = sphi 0, %s297
      %s299 = sphi 0, %s297
      %s300 = sphi 0, %s299
      %s314 = sphi 0, %s300
      %s318 = sphi 0, %s318
      %s320 = sphi 0, %s318
      %s321 = sphi 0, %s320
      %s335 = sphi 0, %s321
      %s339 = sphi 0, %s339
      %s341 = sphi 0, %s339
      %s342 = sphi 0, %s341
      %s356 = sphi 0, %s342
      %s360 = sphi 0, %s360
      %s362 = sphi 0, %s360
      %s363 = sphi 0, %s362
      %s377 = sphi 0, %s363
      %s381 = sphi 0, %s381
      %s383 = sphi 0, %s381
      %s384 = sphi 0, %s383
      %s398 = sphi 0, %s384
      %s402 = sphi 0, %s402
      %s404 = sphi 0, %s402
      %s405 = sphi 0, %s404
      %s419 = sphi 0, %s405
      %s423 = sphi 0, %s423
      %s425 = sphi 0, %s423
      %s426 = sphi 0, %s425
      %s440 = sphi 0, %s426
      %s444 = sphi 0, %s444
      %s446 = sphi 0, %s444
      %s447 = sphi 0, %s446
      %s461 = sphi 0, %s447
      %s465 = sphi 0, %s465
      %s467 = sphi 0, %s465
      %s468 = sphi 0, %s467
      %s482 = sphi 0, %s468
      %s486 = sphi 0, %s486
      %s488 = sphi 0, %s486
      %s489 = sphi 0, %s488
      %s503 = sphi 0, %s489
      %s507 = sphi 0, %s507
      %s509 = sphi 0, %s507
      %s510 = sphi 0, %s509
      %s524 = sphi 0, %s510
      %s528 = sphi 0, %s528
      %s530 = sphi 0, %s528
      %s531 = sphi 0, %s530
      %s545 = sphi 0, %s531
      %s549 = sphi 0, %s549
      %s551 = sphi 0, %s549
      %s552 = sphi 0, %s551
      %s566 = sphi 0, %s552
      %s570 = sphi 0, %s570
      %s572 = sphi 0, %s570
      %s573 = sphi 0, %s572
      %s587 = sphi 0, %s573
      %s591 = sphi 0, %s591
      %s593 = sphi 0, %s591
      %s594 = sphi 0, %s593
      %s608 = sphi 0, %s594
      %s612 = sphi 0, %s612
      %s614 = sphi 0, %s612
      %s615 = sphi 0, %s614
      %s629 = sphi 0, %s615
      %s633 = sphi 0, %s633
      %s635 = sphi 0, %s633
      %s636 = sphi 0, %s635
      %s650 = sphi 0, %s636
      %s654 = sphi 0, %s654
      %s656 = sphi 0, %s654
      %s657 = sphi 0, %s656
      %s671 = sphi 0, %s657
      %s675 = sphi 0, %s675
      %s677 = sphi 0, %s675
      %s678 = sphi 0, %s677
      %s692 = sphi 0, %s678
      %s696 = sphi 0, %s696
      %s698 = sphi 0, %s696
      %s699 = sphi 0, %s698
      %s713 = sphi 0, %s699
      %s717 = sphi 0, %s717
      %s719 = sphi 0, %s717
      %s720 = sphi 0, %s719
      %s734 = sphi 0, %s720
      %s740 = sphi 0, %s742
      %s743 = sphi 0, %s740
      %s744 = sphi 0, %s743
      %s760 = sphi 0, %s744
      %s766 = sphi 0, %s768
      %s769 = sphi 0, %s766
      %s770 = sphi 0, %s769
      %s786 = sphi 0, %s770
      %s792 = sphi 0, %s794
      %s795 = sphi 0, %s792
      %s796 = sphi 0, %s795
      %s812 = sphi 0, %s796
    $region4: #{tpu_custom_call.1} parent=1 // loop_header_branch
      %83 = sbr.rel (%p81) target = $region8
    $region5: #{tpu_custom_call.1} parent=1 // loop_body
      %s85 = ssub.s32 %s80, 1
      %s86 = ssub.s32 %s80, 2
      %s87 = sadd.s32 %s80, 1
      %s88 = ssub.s32 %s80, %s87
      %p89 = scmp.eq.s32.totalorder %s88, 0
      %s91 = sadd.s32 %s90, 1
      %s92 = scalar_select %p89, %s90, %s91
      %p95 = pneg %p89
      %p96 = scmp.eq.s32.totalorder %s80, 1
      %p97 = por %p95, %p96
      %p98 = scmp.ne.s32.totalorder %s90, %s93
      %p99 = scmp.eq.s32.totalorder %s80, 0
      %p100 = por %p98, %p99
      %p101 = scmp.ne.s32.totalorder %s90, %s93
      %p102 = scmp.eq.s32.totalorder %s85, 1
      %p103 = por %p101, %p102
      %p104 = scmp.ne.s32.totalorder %s93, %s94
      %p105 = scmp.eq.s32.totalorder %s85, 0
      %p106 = por %p104, %p105
      %p107 = scmp.ne.s32.totalorder %s93, %s94
      %p108 = scmp.eq.s32.totalorder %s86, 1
      %p109 = por %p107, %p108
      %p111 = scmp.ne.s32.totalorder %s94, %s110
      %p112 = scmp.eq.s32.totalorder %s86, 0
      %p113 = por %p111, %p112
      %s114 = ssub.s32 %s80, %s87
      %p115 = scmp.eq.s32.totalorder %s114, 0
      %s117 = sadd.s32 %s116, 1
      %s118 = scalar_select %p115, %s116, %s117
      %p121 = pneg %p115
      %p122 = scmp.eq.s32.totalorder %s80, 1
      %p123 = por %p121, %p122
      %p124 = scmp.ne.s32.totalorder %s116, %s119
      %p125 = scmp.eq.s32.totalorder %s80, 0
      %p126 = por %p124, %p125
      %p127 = scmp.ne.s32.totalorder %s116, %s119
      %p128 = scmp.eq.s32.totalorder %s85, 1
      %p129 = por %p127, %p128
      %p130 = scmp.ne.s32.totalorder %s119, %s120
      %p131 = scmp.eq.s32.totalorder %s85, 0
      %p132 = por %p130, %p131
      %p133 = scmp.ne.s32.totalorder %s119, %s120
      %p134 = scmp.eq.s32.totalorder %s86, 1
      %p135 = por %p133, %p134
      %p137 = scmp.ne.s32.totalorder %s120, %s136
      %p138 = scmp.eq.s32.totalorder %s86, 0
      %p139 = por %p137, %p138
      %s140 = ssub.s32 %s80, %s87
      %p141 = scmp.eq.s32.totalorder %s140, 0
      %s143 = sadd.s32 %s142, 1
      %s144 = scalar_select %p141, %s142, %s143
      %p147 = pneg %p141
      %p148 = scmp.eq.s32.totalorder %s80, 1
      %p149 = por %p147, %p148
      %p150 = scmp.ne.s32.totalorder %s142, %s145
      %p151 = scmp.eq.s32.totalorder %s80, 0
      %p152 = por %p150, %p151
      %p153 = scmp.ne.s32.totalorder %s142, %s145
      %p154 = scmp.eq.s32.totalorder %s85, 1
      %p155 = por %p153, %p154
      %p156 = scmp.ne.s32.totalorder %s145, %s146
      %p157 = scmp.eq.s32.totalorder %s85, 0
      %p158 = por %p156, %p157
      %p159 = scmp.ne.s32.totalorder %s145, %s146
      %p160 = scmp.eq.s32.totalorder %s86, 1
      %p161 = por %p159, %p160
      %p163 = scmp.ne.s32.totalorder %s146, %s162
      %p164 = scmp.eq.s32.totalorder %s86, 0
      %p165 = por %p163, %p164
      %s166 = ssub.s32 %s80, %s87
      %p167 = scmp.eq.s32.totalorder %s166, 0
      %s169 = sadd.s32 %s168, 1
      %s170 = scalar_select %p167, %s168, %s169
      %p173 = pneg %p167
      %p174 = scmp.eq.s32.totalorder %s80, 1
      %p175 = por %p173, %p174
      %p176 = scmp.ne.s32.totalorder %s168, %s171
      %p177 = scmp.eq.s32.totalorder %s80, 0
      %p178 = por %p176, %p177
      %p179 = scmp.ne.s32.totalorder %s168, %s171
      %p180 = scmp.eq.s32.totalorder %s85, 1
      %p181 = por %p179, %p180
      %p182 = scmp.ne.s32.totalorder %s171, %s172
      %p183 = scmp.eq.s32.totalorder %s85, 0
      %p184 = por %p182, %p183
      %p185 = scmp.ne.s32.totalorder %s171, %s172
      %p186 = scmp.eq.s32.totalorder %s86, 1
      %p187 = por %p185, %p186
      %p189 = scmp.ne.s32.totalorder %s172, %s188
      %p190 = scmp.eq.s32.totalorder %s86, 0
      %p191 = por %p189, %p190
      %s193 = sadd.s32 %s192, 1
      %p196 = scmp.eq.s32.totalorder %s80, 1
      %p197 = scmp.ne.s32.totalorder %s192, %s194
      %p198 = scmp.eq.s32.totalorder %s80, 0
      %p199 = por %p197, %p198
      %p200 = scmp.ne.s32.totalorder %s192, %s194
      %p201 = scmp.eq.s32.totalorder %s85, 1
      %p202 = por %p200, %p201
      %p203 = scmp.ne.s32.totalorder %s194, %s195
      %p204 = scmp.eq.s32.totalorder %s85, 0
      %p205 = por %p203, %p204
      %p206 = scmp.ne.s32.totalorder %s194, %s195
      %p207 = scmp.eq.s32.totalorder %s86, 1
      %p208 = por %p206, %p207
      %p210 = scmp.ne.s32.totalorder %s195, %s209
      %p211 = scmp.eq.s32.totalorder %s86, 0
      %p212 = por %p210, %p211
      %s214 = sadd.s32 %s213, 1
      %p217 = scmp.eq.s32.totalorder %s80, 1
      %p218 = scmp.ne.s32.totalorder %s213, %s215
      %p219 = scmp.eq.s32.totalorder %s80, 0
      %p220 = por %p218, %p219
      %p221 = scmp.ne.s32.totalorder %s213, %s215
      %p222 = scmp.eq.s32.totalorder %s85, 1
      %p223 = por %p221, %p222
      %p224 = scmp.ne.s32.totalorder %s215, %s216
      %p225 = scmp.eq.s32.totalorder %s85, 0
      %p226 = por %p224, %p225
      %p227 = scmp.ne.s32.totalorder %s215, %s216
      %p228 = scmp.eq.s32.totalorder %s86, 1
      %p229 = por %p227, %p228
      %p231 = scmp.ne.s32.totalorder %s216, %s230
      %p232 = scmp.eq.s32.totalorder %s86, 0
      %p233 = por %p231, %p232
      %s235 = sadd.s32 %s234, 1
      %p238 = scmp.eq.s32.totalorder %s80, 1
      %p239 = scmp.ne.s32.totalorder %s234, %s236
      %p240 = scmp.eq.s32.totalorder %s80, 0
      %p241 = por %p239, %p240
      %p242 = scmp.ne.s32.totalorder %s234, %s236
      %p243 = scmp.eq.s32.totalorder %s85, 1
      %p244 = por %p242, %p243
      %p245 = scmp.ne.s32.totalorder %s236, %s237
      %p246 = scmp.eq.s32.totalorder %s85, 0
      %p247 = por %p245, %p246
      %p248 = scmp.ne.s32.totalorder %s236, %s237
      %p249 = scmp.eq.s32.totalorder %s86, 1
      %p250 = por %p248, %p249
      %p252 = scmp.ne.s32.totalorder %s237, %s251
      %p253 = scmp.eq.s32.totalorder %s86, 0
      %p254 = por %p252, %p253
      %s256 = sadd.s32 %s255, 1
      %p259 = scmp.eq.s32.totalorder %s80, 1
      %p260 = scmp.ne.s32.totalorder %s255, %s257
      %p261 = scmp.eq.s32.totalorder %s80, 0
      %p262 = por %p260, %p261
      %p263 = scmp.ne.s32.totalorder %s255, %s257
      %p264 = scmp.eq.s32.totalorder %s85, 1
      %p265 = por %p263, %p264
      %p266 = scmp.ne.s32.totalorder %s257, %s258
      %p267 = scmp.eq.s32.totalorder %s85, 0
      %p268 = por %p266, %p267
      %p269 = scmp.ne.s32.totalorder %s257, %s258
      %p270 = scmp.eq.s32.totalorder %s86, 1
      %p271 = por %p269, %p270
      %p273 = scmp.ne.s32.totalorder %s258, %s272
      %p274 = scmp.eq.s32.totalorder %s86, 0
      %p275 = por %p273, %p274
      %s277 = sadd.s32 %s276, 1
      %p280 = scmp.eq.s32.totalorder %s80, 1
      %p281 = scmp.ne.s32.totalorder %s276, %s278
      %p282 = scmp.eq.s32.totalorder %s80, 0
      %p283 = por %p281, %p282
      %p284 = scmp.ne.s32.totalorder %s276, %s278
      %p285 = scmp.eq.s32.totalorder %s85, 1
      %p286 = por %p284, %p285
      %p287 = scmp.ne.s32.totalorder %s278, %s279
      %p288 = scmp.eq.s32.totalorder %s85, 0
      %p289 = por %p287, %p288
      %p290 = scmp.ne.s32.totalorder %s278, %s279
      %p291 = scmp.eq.s32.totalorder %s86, 1
      %p292 = por %p290, %p291
      %p294 = scmp.ne.s32.totalorder %s279, %s293
      %p295 = scmp.eq.s32.totalorder %s86, 0
      %p296 = por %p294, %p295
      %s298 = sadd.s32 %s297, 1
      %p301 = scmp.eq.s32.totalorder %s80, 1
      %p302 = scmp.ne.s32.totalorder %s297, %s299
      %p303 = scmp.eq.s32.totalorder %s80, 0
      %p304 = por %p302, %p303
      %p305 = scmp.ne.s32.totalorder %s297, %s299
      %p306 = scmp.eq.s32.totalorder %s85, 1
      %p307 = por %p305, %p306
      %p308 = scmp.ne.s32.totalorder %s299, %s300
      %p309 = scmp.eq.s32.totalorder %s85, 0
      %p310 = por %p308, %p309
      %p311 = scmp.ne.s32.totalorder %s299, %s300
      %p312 = scmp.eq.s32.totalorder %s86, 1
      %p313 = por %p311, %p312
      %p315 = scmp.ne.s32.totalorder %s300, %s314
      %p316 = scmp.eq.s32.totalorder %s86, 0
      %p317 = por %p315, %p316
      %s319 = sadd.s32 %s318, 1
      %p322 = scmp.eq.s32.totalorder %s80, 1
      %p323 = scmp.ne.s32.totalorder %s318, %s320
      %p324 = scmp.eq.s32.totalorder %s80, 0
      %p325 = por %p323, %p324
      %p326 = scmp.ne.s32.totalorder %s318, %s320
      %p327 = scmp.eq.s32.totalorder %s85, 1
      %p328 = por %p326, %p327
      %p329 = scmp.ne.s32.totalorder %s320, %s321
      %p330 = scmp.eq.s32.totalorder %s85, 0
      %p331 = por %p329, %p330
      %p332 = scmp.ne.s32.totalorder %s320, %s321
      %p333 = scmp.eq.s32.totalorder %s86, 1
      %p334 = por %p332, %p333
      %p336 = scmp.ne.s32.totalorder %s321, %s335
      %p337 = scmp.eq.s32.totalorder %s86, 0
      %p338 = por %p336, %p337
      %s340 = sadd.s32 %s339, 1
      %p343 = scmp.eq.s32.totalorder %s80, 1
      %p344 = scmp.ne.s32.totalorder %s339, %s341
      %p345 = scmp.eq.s32.totalorder %s80, 0
      %p346 = por %p344, %p345
      %p347 = scmp.ne.s32.totalorder %s339, %s341
      %p348 = scmp.eq.s32.totalorder %s85, 1
      %p349 = por %p347, %p348
      %p350 = scmp.ne.s32.totalorder %s341, %s342
      %p351 = scmp.eq.s32.totalorder %s85, 0
      %p352 = por %p350, %p351
      %p353 = scmp.ne.s32.totalorder %s341, %s342
      %p354 = scmp.eq.s32.totalorder %s86, 1
      %p355 = por %p353, %p354
      %p357 = scmp.ne.s32.totalorder %s342, %s356
      %p358 = scmp.eq.s32.totalorder %s86, 0
      %p359 = por %p357, %p358
      %s361 = sadd.s32 %s360, 1
      %p364 = scmp.eq.s32.totalorder %s80, 1
      %p365 = scmp.ne.s32.totalorder %s360, %s362
      %p366 = scmp.eq.s32.totalorder %s80, 0
      %p367 = por %p365, %p366
      %p368 = scmp.ne.s32.totalorder %s360, %s362
      %p369 = scmp.eq.s32.totalorder %s85, 1
      %p370 = por %p368, %p369
      %p371 = scmp.ne.s32.totalorder %s362, %s363
      %p372 = scmp.eq.s32.totalorder %s85, 0
      %p373 = por %p371, %p372
      %p374 = scmp.ne.s32.totalorder %s362, %s363
      %p375 = scmp.eq.s32.totalorder %s86, 1
      %p376 = por %p374, %p375
      %p378 = scmp.ne.s32.totalorder %s363, %s377
      %p379 = scmp.eq.s32.totalorder %s86, 0
      %p380 = por %p378, %p379
      %s382 = sadd.s32 %s381, 1
      %p385 = scmp.eq.s32.totalorder %s80, 1
      %p386 = scmp.ne.s32.totalorder %s381, %s383
      %p387 = scmp.eq.s32.totalorder %s80, 0
      %p388 = por %p386, %p387
      %p389 = scmp.ne.s32.totalorder %s381, %s383
      %p390 = scmp.eq.s32.totalorder %s85, 1
      %p391 = por %p389, %p390
      %p392 = scmp.ne.s32.totalorder %s383, %s384
      %p393 = scmp.eq.s32.totalorder %s85, 0
      %p394 = por %p392, %p393
      %p395 = scmp.ne.s32.totalorder %s383, %s384
      %p396 = scmp.eq.s32.totalorder %s86, 1
      %p397 = por %p395, %p396
      %p399 = scmp.ne.s32.totalorder %s384, %s398
      %p400 = scmp.eq.s32.totalorder %s86, 0
      %p401 = por %p399, %p400
      %s403 = sadd.s32 %s402, 1
      %p406 = scmp.eq.s32.totalorder %s80, 1
      %p407 = scmp.ne.s32.totalorder %s402, %s404
      %p408 = scmp.eq.s32.totalorder %s80, 0
      %p409 = por %p407, %p408
      %p410 = scmp.ne.s32.totalorder %s402, %s404
      %p411 = scmp.eq.s32.totalorder %s85, 1
      %p412 = por %p410, %p411
      %p413 = scmp.ne.s32.totalorder %s404, %s405
      %p414 = scmp.eq.s32.totalorder %s85, 0
      %p415 = por %p413, %p414
      %p416 = scmp.ne.s32.totalorder %s404, %s405
      %p417 = scmp.eq.s32.totalorder %s86, 1
      %p418 = por %p416, %p417
      %p420 = scmp.ne.s32.totalorder %s405, %s419
      %p421 = scmp.eq.s32.totalorder %s86, 0
      %p422 = por %p420, %p421
      %s424 = sadd.s32 %s423, 1
      %p427 = scmp.eq.s32.totalorder %s80, 1
      %p428 = scmp.ne.s32.totalorder %s423, %s425
      %p429 = scmp.eq.s32.totalorder %s80, 0
      %p430 = por %p428, %p429
      %p431 = scmp.ne.s32.totalorder %s423, %s425
      %p432 = scmp.eq.s32.totalorder %s85, 1
      %p433 = por %p431, %p432
      %p434 = scmp.ne.s32.totalorder %s425, %s426
      %p435 = scmp.eq.s32.totalorder %s85, 0
      %p436 = por %p434, %p435
      %p437 = scmp.ne.s32.totalorder %s425, %s426
      %p438 = scmp.eq.s32.totalorder %s86, 1
      %p439 = por %p437, %p438
      %p441 = scmp.ne.s32.totalorder %s426, %s440
      %p442 = scmp.eq.s32.totalorder %s86, 0
      %p443 = por %p441, %p442
      %s445 = sadd.s32 %s444, 1
      %p448 = scmp.eq.s32.totalorder %s80, 1
      %p449 = scmp.ne.s32.totalorder %s444, %s446
      %p450 = scmp.eq.s32.totalorder %s80, 0
      %p451 = por %p449, %p450
      %p452 = scmp.ne.s32.totalorder %s444, %s446
      %p453 = scmp.eq.s32.totalorder %s85, 1
      %p454 = por %p452, %p453
      %p455 = scmp.ne.s32.totalorder %s446, %s447
      %p456 = scmp.eq.s32.totalorder %s85, 0
      %p457 = por %p455, %p456
      %p458 = scmp.ne.s32.totalorder %s446, %s447
      %p459 = scmp.eq.s32.totalorder %s86, 1
      %p460 = por %p458, %p459
      %p462 = scmp.ne.s32.totalorder %s447, %s461
      %p463 = scmp.eq.s32.totalorder %s86, 0
      %p464 = por %p462, %p463
      %s466 = sadd.s32 %s465, 1
      %p469 = scmp.eq.s32.totalorder %s80, 1
      %p470 = scmp.ne.s32.totalorder %s465, %s467
      %p471 = scmp.eq.s32.totalorder %s80, 0
      %p472 = por %p470, %p471
      %p473 = scmp.ne.s32.totalorder %s465, %s467
      %p474 = scmp.eq.s32.totalorder %s85, 1
      %p475 = por %p473, %p474
      %p476 = scmp.ne.s32.totalorder %s467, %s468
      %p477 = scmp.eq.s32.totalorder %s85, 0
      %p478 = por %p476, %p477
      %p479 = scmp.ne.s32.totalorder %s467, %s468
      %p480 = scmp.eq.s32.totalorder %s86, 1
      %p481 = por %p479, %p480
      %p483 = scmp.ne.s32.totalorder %s468, %s482
      %p484 = scmp.eq.s32.totalorder %s86, 0
      %p485 = por %p483, %p484
      %s487 = sadd.s32 %s486, 1
      %p490 = scmp.eq.s32.totalorder %s80, 1
      %p491 = scmp.ne.s32.totalorder %s486, %s488
      %p492 = scmp.eq.s32.totalorder %s80, 0
      %p493 = por %p491, %p492
      %p494 = scmp.ne.s32.totalorder %s486, %s488
      %p495 = scmp.eq.s32.totalorder %s85, 1
      %p496 = por %p494, %p495
      %p497 = scmp.ne.s32.totalorder %s488, %s489
      %p498 = scmp.eq.s32.totalorder %s85, 0
      %p499 = por %p497, %p498
      %p500 = scmp.ne.s32.totalorder %s488, %s489
      %p501 = scmp.eq.s32.totalorder %s86, 1
      %p502 = por %p500, %p501
      %p504 = scmp.ne.s32.totalorder %s489, %s503
      %p505 = scmp.eq.s32.totalorder %s86, 0
      %p506 = por %p504, %p505
      %s508 = sadd.s32 %s507, 1
      %p511 = scmp.eq.s32.totalorder %s80, 1
      %p512 = scmp.ne.s32.totalorder %s507, %s509
      %p513 = scmp.eq.s32.totalorder %s80, 0
      %p514 = por %p512, %p513
      %p515 = scmp.ne.s32.totalorder %s507, %s509
      %p516 = scmp.eq.s32.totalorder %s85, 1
      %p517 = por %p515, %p516
      %p518 = scmp.ne.s32.totalorder %s509, %s510
      %p519 = scmp.eq.s32.totalorder %s85, 0
      %p520 = por %p518, %p519
      %p521 = scmp.ne.s32.totalorder %s509, %s510
      %p522 = scmp.eq.s32.totalorder %s86, 1
      %p523 = por %p521, %p522
      %p525 = scmp.ne.s32.totalorder %s510, %s524
      %p526 = scmp.eq.s32.totalorder %s86, 0
      %p527 = por %p525, %p526
      %s529 = sadd.s32 %s528, 1
      %p532 = scmp.eq.s32.totalorder %s80, 1
      %p533 = scmp.ne.s32.totalorder %s528, %s530
      %p534 = scmp.eq.s32.totalorder %s80, 0
      %p535 = por %p533, %p534
      %p536 = scmp.ne.s32.totalorder %s528, %s530
      %p537 = scmp.eq.s32.totalorder %s85, 1
      %p538 = por %p536, %p537
      %p539 = scmp.ne.s32.totalorder %s530, %s531
      %p540 = scmp.eq.s32.totalorder %s85, 0
      %p541 = por %p539, %p540
      %p542 = scmp.ne.s32.totalorder %s530, %s531
      %p543 = scmp.eq.s32.totalorder %s86, 1
      %p544 = por %p542, %p543
      %p546 = scmp.ne.s32.totalorder %s531, %s545
      %p547 = scmp.eq.s32.totalorder %s86, 0
      %p548 = por %p546, %p547
      %s550 = sadd.s32 %s549, 1
      %p553 = scmp.eq.s32.totalorder %s80, 1
      %p554 = scmp.ne.s32.totalorder %s549, %s551
      %p555 = scmp.eq.s32.totalorder %s80, 0
      %p556 = por %p554, %p555
      %p557 = scmp.ne.s32.totalorder %s549, %s551
      %p558 = scmp.eq.s32.totalorder %s85, 1
      %p559 = por %p557, %p558
      %p560 = scmp.ne.s32.totalorder %s551, %s552
      %p561 = scmp.eq.s32.totalorder %s85, 0
      %p562 = por %p560, %p561
      %p563 = scmp.ne.s32.totalorder %s551, %s552
      %p564 = scmp.eq.s32.totalorder %s86, 1
      %p565 = por %p563, %p564
      %p567 = scmp.ne.s32.totalorder %s552, %s566
      %p568 = scmp.eq.s32.totalorder %s86, 0
      %p569 = por %p567, %p568
      %s571 = sadd.s32 %s570, 1
      %p574 = scmp.eq.s32.totalorder %s80, 1
      %p575 = scmp.ne.s32.totalorder %s570, %s572
      %p576 = scmp.eq.s32.totalorder %s80, 0
      %p577 = por %p575, %p576
      %p578 = scmp.ne.s32.totalorder %s570, %s572
      %p579 = scmp.eq.s32.totalorder %s85, 1
      %p580 = por %p578, %p579
      %p581 = scmp.ne.s32.totalorder %s572, %s573
      %p582 = scmp.eq.s32.totalorder %s85, 0
      %p583 = por %p581, %p582
      %p584 = scmp.ne.s32.totalorder %s572, %s573
      %p585 = scmp.eq.s32.totalorder %s86, 1
      %p586 = por %p584, %p585
      %p588 = scmp.ne.s32.totalorder %s573, %s587
      %p589 = scmp.eq.s32.totalorder %s86, 0
      %p590 = por %p588, %p589
      %s592 = sadd.s32 %s591, 1
      %p595 = scmp.eq.s32.totalorder %s80, 1
      %p596 = scmp.ne.s32.totalorder %s591, %s593
      %p597 = scmp.eq.s32.totalorder %s80, 0
      %p598 = por %p596, %p597
      %p599 = scmp.ne.s32.totalorder %s591, %s593
      %p600 = scmp.eq.s32.totalorder %s85, 1
      %p601 = por %p599, %p600
      %p602 = scmp.ne.s32.totalorder %s593, %s594
      %p603 = scmp.eq.s32.totalorder %s85, 0
      %p604 = por %p602, %p603
      %p605 = scmp.ne.s32.totalorder %s593, %s594
      %p606 = scmp.eq.s32.totalorder %s86, 1
      %p607 = por %p605, %p606
      %p609 = scmp.ne.s32.totalorder %s594, %s608
      %p610 = scmp.eq.s32.totalorder %s86, 0
      %p611 = por %p609, %p610
      %s613 = sadd.s32 %s612, 1
      %p616 = scmp.eq.s32.totalorder %s80, 1
      %p617 = scmp.ne.s32.totalorder %s612, %s614
      %p618 = scmp.eq.s32.totalorder %s80, 0
      %p619 = por %p617, %p618
      %p620 = scmp.ne.s32.totalorder %s612, %s614
      %p621 = scmp.eq.s32.totalorder %s85, 1
      %p622 = por %p620, %p621
      %p623 = scmp.ne.s32.totalorder %s614, %s615
      %p624 = scmp.eq.s32.totalorder %s85, 0
      %p625 = por %p623, %p624
      %p626 = scmp.ne.s32.totalorder %s614, %s615
      %p627 = scmp.eq.s32.totalorder %s86, 1
      %p628 = por %p626, %p627
      %p630 = scmp.ne.s32.totalorder %s615, %s629
      %p631 = scmp.eq.s32.totalorder %s86, 0
      %p632 = por %p630, %p631
      %s634 = sadd.s32 %s633, 1
      %p637 = scmp.eq.s32.totalorder %s80, 1
      %p638 = scmp.ne.s32.totalorder %s633, %s635
      %p639 = scmp.eq.s32.totalorder %s80, 0
      %p640 = por %p638, %p639
      %p641 = scmp.ne.s32.totalorder %s633, %s635
      %p642 = scmp.eq.s32.totalorder %s85, 1
      %p643 = por %p641, %p642
      %p644 = scmp.ne.s32.totalorder %s635, %s636
      %p645 = scmp.eq.s32.totalorder %s85, 0
      %p646 = por %p644, %p645
      %p647 = scmp.ne.s32.totalorder %s635, %s636
      %p648 = scmp.eq.s32.totalorder %s86, 1
      %p649 = por %p647, %p648
      %p651 = scmp.ne.s32.totalorder %s636, %s650
      %p652 = scmp.eq.s32.totalorder %s86, 0
      %p653 = por %p651, %p652
      %s655 = sadd.s32 %s654, 1
      %p658 = scmp.eq.s32.totalorder %s80, 1
      %p659 = scmp.ne.s32.totalorder %s654, %s656
      %p660 = scmp.eq.s32.totalorder %s80, 0
      %p661 = por %p659, %p660
      %p662 = scmp.ne.s32.totalorder %s654, %s656
      %p663 = scmp.eq.s32.totalorder %s85, 1
      %p664 = por %p662, %p663
      %p665 = scmp.ne.s32.totalorder %s656, %s657
      %p666 = scmp.eq.s32.totalorder %s85, 0
      %p667 = por %p665, %p666
      %p668 = scmp.ne.s32.totalorder %s656, %s657
      %p669 = scmp.eq.s32.totalorder %s86, 1
      %p670 = por %p668, %p669
      %p672 = scmp.ne.s32.totalorder %s657, %s671
      %p673 = scmp.eq.s32.totalorder %s86, 0
      %p674 = por %p672, %p673
      %s676 = sadd.s32 %s675, 1
      %p679 = scmp.eq.s32.totalorder %s80, 1
      %p680 = scmp.ne.s32.totalorder %s675, %s677
      %p681 = scmp.eq.s32.totalorder %s80, 0
      %p682 = por %p680, %p681
      %p683 = scmp.ne.s32.totalorder %s675, %s677
      %p684 = scmp.eq.s32.totalorder %s85, 1
      %p685 = por %p683, %p684
      %p686 = scmp.ne.s32.totalorder %s677, %s678
      %p687 = scmp.eq.s32.totalorder %s85, 0
      %p688 = por %p686, %p687
      %p689 = scmp.ne.s32.totalorder %s677, %s678
      %p690 = scmp.eq.s32.totalorder %s86, 1
      %p691 = por %p689, %p690
      %p693 = scmp.ne.s32.totalorder %s678, %s692
      %p694 = scmp.eq.s32.totalorder %s86, 0
      %p695 = por %p693, %p694
      %s697 = sadd.s32 %s696, 1
      %p700 = scmp.eq.s32.totalorder %s80, 1
      %p701 = scmp.ne.s32.totalorder %s696, %s698
      %p702 = scmp.eq.s32.totalorder %s80, 0
      %p703 = por %p701, %p702
      %p704 = scmp.ne.s32.totalorder %s696, %s698
      %p705 = scmp.eq.s32.totalorder %s85, 1
      %p706 = por %p704, %p705
      %p707 = scmp.ne.s32.totalorder %s698, %s699
      %p708 = scmp.eq.s32.totalorder %s85, 0
      %p709 = por %p707, %p708
      %p710 = scmp.ne.s32.totalorder %s698, %s699
      %p711 = scmp.eq.s32.totalorder %s86, 1
      %p712 = por %p710, %p711
      %p714 = scmp.ne.s32.totalorder %s699, %s713
      %p715 = scmp.eq.s32.totalorder %s86, 0
      %p716 = por %p714, %p715
      %s718 = sadd.s32 %s717, 1
      %p721 = scmp.eq.s32.totalorder %s80, 1
      %p722 = scmp.ne.s32.totalorder %s717, %s719
      %p723 = scmp.eq.s32.totalorder %s80, 0
      %p724 = por %p722, %p723
      %p725 = scmp.ne.s32.totalorder %s717, %s719
      %p726 = scmp.eq.s32.totalorder %s85, 1
      %p727 = por %p725, %p726
      %p728 = scmp.ne.s32.totalorder %s719, %s720
      %p729 = scmp.eq.s32.totalorder %s85, 0
      %p730 = por %p728, %p729
      %p731 = scmp.ne.s32.totalorder %s719, %s720
      %p732 = scmp.eq.s32.totalorder %s86, 1
      %p733 = por %p731, %p732
      %p735 = scmp.ne.s32.totalorder %s720, %s734
      %p736 = scmp.eq.s32.totalorder %s86, 0
      %p737 = por %p735, %p736
      %s738 = ssub.s32 %s80, %s87
      %p739 = scmp.eq.s32.totalorder %s738, 0
      %s741 = sadd.s32 %s740, 1
      %s742 = scalar_select %p739, %s740, %s741
      %p745 = pneg %p739
      %p746 = scmp.eq.s32.totalorder %s80, 1
      %p747 = por %p745, %p746
      %p748 = scmp.ne.s32.totalorder %s740, %s743
      %p749 = scmp.eq.s32.totalorder %s80, 0
      %p750 = por %p748, %p749
      %p751 = scmp.ne.s32.totalorder %s740, %s743
      %p752 = scmp.eq.s32.totalorder %s85, 1
      %p753 = por %p751, %p752
      %p754 = scmp.ne.s32.totalorder %s743, %s744
      %p755 = scmp.eq.s32.totalorder %s85, 0
      %p756 = por %p754, %p755
      %p757 = scmp.ne.s32.totalorder %s743, %s744
      %p758 = scmp.eq.s32.totalorder %s86, 1
      %p759 = por %p757, %p758
      %p761 = scmp.ne.s32.totalorder %s744, %s760
      %p762 = scmp.eq.s32.totalorder %s86, 0
      %p763 = por %p761, %p762
      %s764 = ssub.s32 %s80, %s87
      %p765 = scmp.eq.s32.totalorder %s764, 0
      %s767 = sadd.s32 %s766, 1
      %s768 = scalar_select %p765, %s766, %s767
      %p771 = pneg %p765
      %p772 = scmp.eq.s32.totalorder %s80, 1
      %p773 = por %p771, %p772
      %p774 = scmp.ne.s32.totalorder %s766, %s769
      %p775 = scmp.eq.s32.totalorder %s80, 0
      %p776 = por %p774, %p775
      %p777 = scmp.ne.s32.totalorder %s766, %s769
      %p778 = scmp.eq.s32.totalorder %s85, 1
      %p779 = por %p777, %p778
      %p780 = scmp.ne.s32.totalorder %s769, %s770
      %p781 = scmp.eq.s32.totalorder %s85, 0
      %p782 = por %p780, %p781
      %p783 = scmp.ne.s32.totalorder %s769, %s770
      %p784 = scmp.eq.s32.totalorder %s86, 1
      %p785 = por %p783, %p784
      %p787 = scmp.ne.s32.totalorder %s770, %s786
      %p788 = scmp.eq.s32.totalorder %s86, 0
      %p789 = por %p787, %p788
      %s790 = ssub.s32 %s80, %s87
      %p791 = scmp.eq.s32.totalorder %s790, 0
      %s793 = sadd.s32 %s792, 1
      %s794 = scalar_select %p791, %s792, %s793
      %p797 = pneg %p791
      %p798 = scmp.eq.s32.totalorder %s80, 1
      %p799 = por %p797, %p798
      %p800 = scmp.ne.s32.totalorder %s792, %s795
      %p801 = scmp.eq.s32.totalorder %s80, 0
      %p802 = por %p800, %p801
      %p803 = scmp.ne.s32.totalorder %s792, %s795
      %p804 = scmp.eq.s32.totalorder %s85, 1
      %p805 = por %p803, %p804
      %p806 = scmp.ne.s32.totalorder %s795, %s796
      %p807 = scmp.eq.s32.totalorder %s85, 0
      %p808 = por %p806, %p807
      %p809 = scmp.ne.s32.totalorder %s795, %s796
      %p810 = scmp.eq.s32.totalorder %s86, 1
      %p811 = por %p809, %p810
      %p813 = scmp.ne.s32.totalorder %s796, %s812
      %p814 = scmp.eq.s32.totalorder %s86, 0
      %p815 = por %p813, %p814
      %p816 = scmp.le.s32.totalorder 1, %s80
      %p817 = scmp.lt.s32.totalorder %s80, 3
      %p818 = pnand %p816, %p817
      %p819 = pneg %p818
      // Predicated region
      $region9: #{tpu_custom_call.1} parent=5 // pred_check
        _
      $region10: #{tpu_custom_call.1} parent=5 // pred_check_branch
        %821 = sbr.rel (%p818) target = $region12
      $region11: #{tpu_custom_call.1} parent=5 // pred_region
        %s822 = ssub.s32 %s80, 1
        // Predicated region
        $region13: #{tpu_custom_call.1} parent=11 // pred_check
          %p823 = pneg %p205
        $region14: #{tpu_custom_call.1} parent=11 // pred_check_branch
          %825 = sbr.rel (%p823) target = $region16
        $region15: #{tpu_custom_call.1} parent=11 // pred_region
          _
        $region16: #{tpu_custom_call.1} parent=11 // pred_fallthru
          _
        // Predicated region
        $region17: #{tpu_custom_call.1} parent=11 // pred_check
          %p826 = pneg %p226
        $region18: #{tpu_custom_call.1} parent=11 // pred_check_branch
          %828 = sbr.rel (%p826) target = $region20
        $region19: #{tpu_custom_call.1} parent=11 // pred_region
          _
        $region20: #{tpu_custom_call.1} parent=11 // pred_fallthru
          _
        // Predicated region
        $region21: #{tpu_custom_call.1} parent=11 // pred_check
          %p829 = pneg %p247
        $region22: #{tpu_custom_call.1} parent=11 // pred_check_branch
          %831 = sbr.rel (%p829) target = $region24
        $region23: #{tpu_custom_call.1} parent=11 // pred_region
          _
        $region24: #{tpu_custom_call.1} parent=11 // pred_fallthru
          _
        // Predicated region
        $region25: #{tpu_custom_call.1} parent=11 // pred_check
          %p832 = pneg %p268
        $region26: #{tpu_custom_call.1} parent=11 // pred_check_branch
          %834 = sbr.rel (%p832) target = $region28
        $region27: #{tpu_custom_call.1} parent=11 // pred_region
          _
        $region28: #{tpu_custom_call.1} parent=11 // pred_fallthru
          _
        // Predicated region
        $region29: #{tpu_custom_call.1} parent=11 // pred_check
          %p835 = pneg %p289
        $region30: #{tpu_custom_call.1} parent=11 // pred_check_branch
          %837 = sbr.rel (%p835) target = $region32
        $region31: #{tpu_custom_call.1} parent=11 // pred_region
          _
        $region32: #{tpu_custom_call.1} parent=11 // pred_fallthru
          _
        // Predicated region
        $region33: #{tpu_custom_call.1} parent=11 // pred_check
          %p838 = pneg %p310
        $region34: #{tpu_custom_call.1} parent=11 // pred_check_branch
          %840 = sbr.rel (%p838) target = $region36
        $region35: #{tpu_custom_call.1} parent=11 // pred_region
          _
        $region36: #{tpu_custom_call.1} parent=11 // pred_fallthru
          _
        // Predicated region
        $region37: #{tpu_custom_call.1} parent=11 // pred_check
          %p841 = pneg %p331
        $region38: #{tpu_custom_call.1} parent=11 // pred_check_branch
          %843 = sbr.rel (%p841) target = $region40
        $region39: #{tpu_custom_call.1} parent=11 // pred_region
          _
        $region40: #{tpu_custom_call.1} parent=11 // pred_fallthru
          _
        // Predicated region
        $region41: #{tpu_custom_call.1} parent=11 // pred_check
          %p844 = pneg %p352
        $region42: #{tpu_custom_call.1} parent=11 // pred_check_branch
          %846 = sbr.rel (%p844) target = $region44
        $region43: #{tpu_custom_call.1} parent=11 // pred_region
          _
        $region44: #{tpu_custom_call.1} parent=11 // pred_fallthru
          _
        // Predicated region
        $region45: #{tpu_custom_call.1} parent=11 // pred_check
          %p847 = pneg %p373
        $region46: #{tpu_custom_call.1} parent=11 // pred_check_branch
          %849 = sbr.rel (%p847) target = $region48
        $region47: #{tpu_custom_call.1} parent=11 // pred_region
          _
        $region48: #{tpu_custom_call.1} parent=11 // pred_fallthru
          _
        // Predicated region
        $region49: #{tpu_custom_call.1} parent=11 // pred_check
          %p850 = pneg %p394
        $region50: #{tpu_custom_call.1} parent=11 // pred_check_branch
          %852 = sbr.rel (%p850) target = $region52
        $region51: #{tpu_custom_call.1} parent=11 // pred_region
          _
        $region52: #{tpu_custom_call.1} parent=11 // pred_fallthru
          _
        // Predicated region
        $region53: #{tpu_custom_call.1} parent=11 // pred_check
          %p853 = pneg %p415
        $region54: #{tpu_custom_call.1} parent=11 // pred_check_branch
          %855 = sbr.rel (%p853) target = $region56
        $region55: #{tpu_custom_call.1} parent=11 // pred_region
          _
        $region56: #{tpu_custom_call.1} parent=11 // pred_fallthru
          _
        // Predicated region
        $region57: #{tpu_custom_call.1} parent=11 // pred_check
          %p856 = pneg %p436
        $region58: #{tpu_custom_call.1} parent=11 // pred_check_branch
          %858 = sbr.rel (%p856) target = $region60
        $region59: #{tpu_custom_call.1} parent=11 // pred_region
          _
        $region60: #{tpu_custom_call.1} parent=11 // pred_fallthru
          _
        // Predicated region
        $region61: #{tpu_custom_call.1} parent=11 // pred_check
          %p859 = pneg %p457
        $region62: #{tpu_custom_call.1} parent=11 // pred_check_branch
          %861 = sbr.rel (%p859) target = $region64
        $region63: #{tpu_custom_call.1} parent=11 // pred_region
          _
        $region64: #{tpu_custom_call.1} parent=11 // pred_fallthru
          _
        // Predicated region
        $region65: #{tpu_custom_call.1} parent=11 // pred_check
          %p862 = pneg %p478
        $region66: #{tpu_custom_call.1} parent=11 // pred_check_branch
          %864 = sbr.rel (%p862) target = $region68
        $region67: #{tpu_custom_call.1} parent=11 // pred_region
          _
        $region68: #{tpu_custom_call.1} parent=11 // pred_fallthru
          _
        // Predicated region
        $region69: #{tpu_custom_call.1} parent=11 // pred_check
          %p865 = pneg %p499
        $region70: #{tpu_custom_call.1} parent=11 // pred_check_branch
          %867 = sbr.rel (%p865) target = $region72
        $region71: #{tpu_custom_call.1} parent=11 // pred_region
          _
        $region72: #{tpu_custom_call.1} parent=11 // pred_fallthru
          _
        // Predicated region
        $region73: #{tpu_custom_call.1} parent=11 // pred_check
          %p868 = pneg %p520
        $region74: #{tpu_custom_call.1} parent=11 // pred_check_branch
          %870 = sbr.rel (%p868) target = $region76
        $region75: #{tpu_custom_call.1} parent=11 // pred_region
          _
        $region76: #{tpu_custom_call.1} parent=11 // pred_fallthru
          _
        // Predicated region
        $region77: #{tpu_custom_call.1} parent=11 // pred_check
          %p871 = pneg %p541
        $region78: #{tpu_custom_call.1} parent=11 // pred_check_branch
          %873 = sbr.rel (%p871) target = $region80
        $region79: #{tpu_custom_call.1} parent=11 // pred_region
          _
        $region80: #{tpu_custom_call.1} parent=11 // pred_fallthru
          _
        // Predicated region
        $region81: #{tpu_custom_call.1} parent=11 // pred_check
          %p874 = pneg %p562
        $region82: #{tpu_custom_call.1} parent=11 // pred_check_branch
          %876 = sbr.rel (%p874) target = $region84
        $region83: #{tpu_custom_call.1} parent=11 // pred_region
          _
        $region84: #{tpu_custom_call.1} parent=11 // pred_fallthru
          _
        // Predicated region
        $region85: #{tpu_custom_call.1} parent=11 // pred_check
          %p877 = pneg %p583
        $region86: #{tpu_custom_call.1} parent=11 // pred_check_branch
          %879 = sbr.rel (%p877) target = $region88
        $region87: #{tpu_custom_call.1} parent=11 // pred_region
          _
        $region88: #{tpu_custom_call.1} parent=11 // pred_fallthru
          _
        // Predicated region
        $region89: #{tpu_custom_call.1} parent=11 // pred_check
          %p880 = pneg %p604
        $region90: #{tpu_custom_call.1} parent=11 // pred_check_branch
          %882 = sbr.rel (%p880) target = $region92
        $region91: #{tpu_custom_call.1} parent=11 // pred_region
          _
        $region92: #{tpu_custom_call.1} parent=11 // pred_fallthru
          _
        // Predicated region
        $region93: #{tpu_custom_call.1} parent=11 // pred_check
          %p883 = pneg %p625
        $region94: #{tpu_custom_call.1} parent=11 // pred_check_branch
          %885 = sbr.rel (%p883) target = $region96
        $region95: #{tpu_custom_call.1} parent=11 // pred_region
          _
        $region96: #{tpu_custom_call.1} parent=11 // pred_fallthru
          _
        // Predicated region
        $region97: #{tpu_custom_call.1} parent=11 // pred_check
          %p886 = pneg %p646
        $region98: #{tpu_custom_call.1} parent=11 // pred_check_branch
          %888 = sbr.rel (%p886) target = $region100
        $region99: #{tpu_custom_call.1} parent=11 // pred_region
          _
        $region100: #{tpu_custom_call.1} parent=11 // pred_fallthru
          _
        // Predicated region
        $region101: #{tpu_custom_call.1} parent=11 // pred_check
          %p889 = pneg %p667
        $region102: #{tpu_custom_call.1} parent=11 // pred_check_branch
          %891 = sbr.rel (%p889) target = $region104
        $region103: #{tpu_custom_call.1} parent=11 // pred_region
          _
        $region104: #{tpu_custom_call.1} parent=11 // pred_fallthru
          _
        // Predicated region
        $region105: #{tpu_custom_call.1} parent=11 // pred_check
          %p892 = pneg %p688
        $region106: #{tpu_custom_call.1} parent=11 // pred_check_branch
          %894 = sbr.rel (%p892) target = $region108
        $region107: #{tpu_custom_call.1} parent=11 // pred_region
          _
        $region108: #{tpu_custom_call.1} parent=11 // pred_fallthru
          _
        // Predicated region
        $region109: #{tpu_custom_call.1} parent=11 // pred_check
          %p895 = pneg %p709
        $region110: #{tpu_custom_call.1} parent=11 // pred_check_branch
          %897 = sbr.rel (%p895) target = $region112
        $region111: #{tpu_custom_call.1} parent=11 // pred_region
          _
        $region112: #{tpu_custom_call.1} parent=11 // pred_fallthru
          _
        // Predicated region
        $region113: #{tpu_custom_call.1} parent=11 // pred_check
          %p898 = pneg %p730
        $region114: #{tpu_custom_call.1} parent=11 // pred_check_branch
          %900 = sbr.rel (%p898) target = $region116
        $region115: #{tpu_custom_call.1} parent=11 // pred_region
          _
        $region116: #{tpu_custom_call.1} parent=11 // pred_fallthru
          _
      $region12: #{tpu_custom_call.1} parent=5 // pred_fallthru
        _
      %p901 = scmp.lt.s32.totalorder %s80, 2
      // Predicated region
      $region117: #{tpu_custom_call.1} parent=5 // pred_check
        %p902 = pneg %p901
      $region118: #{tpu_custom_call.1} parent=5 // pred_check_branch
        %904 = sbr.rel (%p902) target = $region120
      $region119: #{tpu_custom_call.1} parent=5 // pred_region
        // Predicated region
        $region121: #{tpu_custom_call.1} parent=119 // pred_check
          %p905 = pneg %p100
        $region122: #{tpu_custom_call.1} parent=119 // pred_check_branch
          %907 = sbr.rel (%p905) target = $region124
        $region123: #{tpu_custom_call.1} parent=119 // pred_region
          %p908 = scmp.lt.s32.totalorder %s80, 1
          %s909 = scalar_select %p908, %s80, 1
          %s910 = smul.addr %s909, 2
          %s911 = smul.addr %s910, 4
          %s912 = scalar_lea.vmem %s1, %s911
        $region124: #{tpu_custom_call.1} parent=119 // pred_fallthru
          _
        // Predicated region
        $region125: #{tpu_custom_call.1} parent=119 // pred_check
          %p913 = pneg %p126
        $region126: #{tpu_custom_call.1} parent=119 // pred_check_branch
          %915 = sbr.rel (%p913) target = $region128
        $region127: #{tpu_custom_call.1} parent=119 // pred_region
          %p916 = scmp.lt.s32.totalorder %s80, 1
          %s917 = scalar_select %p916, %s80, 1
          %s918 = scalar_lea.vmem %s3, %s917
        $region128: #{tpu_custom_call.1} parent=119 // pred_fallthru
          _
        // Predicated region
        $region129: #{tpu_custom_call.1} parent=119 // pred_check
          %p919 = pneg %p152
        $region130: #{tpu_custom_call.1} parent=119 // pred_check_branch
          %921 = sbr.rel (%p919) target = $region132
        $region131: #{tpu_custom_call.1} parent=119 // pred_region
          %p922 = scmp.lt.s32.totalorder %s80, 1
          %s923 = scalar_select %p922, %s80, 1
          %s924 = scalar_lea.vmem %s5, %s923
        $region132: #{tpu_custom_call.1} parent=119 // pred_fallthru
          _
        // Predicated region
        $region133: #{tpu_custom_call.1} parent=119 // pred_check
          %p925 = pneg %p178
        $region134: #{tpu_custom_call.1} parent=119 // pred_check_branch
          %927 = sbr.rel (%p925) target = $region136
        $region135: #{tpu_custom_call.1} parent=119 // pred_region
          %p928 = scmp.lt.s32.totalorder %s80, 1
          %s929 = scalar_select %p928, %s80, 1
          %s930 = smul.addr %s929, 4
          %s931 = scalar_lea.vmem %s7, %s930
        $region136: #{tpu_custom_call.1} parent=119 // pred_fallthru
          _
      $region120: #{tpu_custom_call.1} parent=5 // pred_fallthru
        _
      %p932 = scmp.le.s32.totalorder 1, %s80
      %p933 = scmp.lt.s32.totalorder %s80, 3
      %p934 = pnand %p932, %p933
      %p935 = pneg %p934
      // Predicated region
      $region137: #{tpu_custom_call.1} parent=5 // pred_check
        _
      $region138: #{tpu_custom_call.1} parent=5 // pred_check_branch
        %937 = sbr.rel (%p934) target = $region140
      $region139: #{tpu_custom_call.1} parent=5 // pred_region
        %s938 = ssub.s32 %s80, 1
        %p939 = scmp.lt.s32.totalorder %s85, 1
        %s940 = scalar_select %p939, %s85, 1
        %s941 = smul.addr %s940, 2
        %s942 = smul.addr %s941, 4
        %s943 = scalar_lea.vmem %s1, %s942
        %p944 = pneg %p106
        %p945 = pneg %p103
        %p946 = scmp.lt.s32.totalorder %s85, 1
        %s947 = scalar_select %p946, %s85, 1
        %s948 = scalar_lea.vmem %s3, %s947
        %p949 = pneg %p132
        %p950 = pneg %p129
        %p951 = scmp.lt.s32.totalorder %s85, 1
        %s952 = scalar_select %p951, %s85, 1
        %s953 = scalar_lea.vmem %s5, %s952
        %p954 = pneg %p158
        %p955 = pneg %p155
        %p956 = scmp.lt.s32.totalorder %s85, 1
        %s957 = scalar_select %p956, %s85, 1
        %s958 = smul.addr %s957, 4
        %s959 = scalar_lea.vmem %s7, %s958
        %p960 = pneg %p184
        %p961 = pneg %p181
        %p962 = pneg %p205
        %p963 = pneg %p202
        %p964 = pneg %p226
        %p965 = pneg %p223
        %p966 = pneg %p247
        %p967 = pneg %p244
        %p968 = pneg %p268
        %p969 = pneg %p265
        %p970 = pneg %p289
        %p971 = pneg %p286
        %p972 = pneg %p310
        %p973 = pneg %p307
        %p974 = pneg %p331
        %p975 = pneg %p328
        %p976 = pneg %p352
        %p977 = pneg %p349
        %p978 = pneg %p373
        %p979 = pneg %p370
        %p980 = pneg %p394
        %p981 = pneg %p391
        %p982 = pneg %p415
        %p983 = pneg %p412
        %p984 = pneg %p436
        %p985 = pneg %p433
        %p986 = pneg %p457
        %p987 = pneg %p454
        %p988 = pneg %p478
        %p989 = pneg %p475
        %p990 = pneg %p499
        %p991 = pneg %p496
        %p992 = pneg %p520
        %p993 = pneg %p517
        %p994 = pneg %p541
        %p995 = pneg %p538
        %p996 = pneg %p562
        %p997 = pneg %p559
        %p998 = pneg %p583
        %p999 = pneg %p580
        %p1000 = pneg %p604
        %p1001 = pneg %p601
        %p1002 = pneg %p625
        %p1003 = pneg %p622
        %p1004 = pneg %p646
        %p1005 = pneg %p643
        %p1006 = pneg %p667
        %p1007 = pneg %p664
        %p1008 = pneg %p688
        %p1009 = pneg %p685
        %p1010 = pneg %p709
        %p1011 = pneg %p706
        %p1012 = pneg %p730
        %p1013 = pneg %p727
        %p1014 = pneg %p756
        %p1015 = pneg %p753
        %s1016 = sand.u32 %s743, 1
        %s1017 = scalar_lea.sflag [#allocation4], %s1016
        %s1018 = sand.u32 %s743, 1
        %s1019 = smul.addr %s1018, 2
        %s1020 = scalar_lea.vmem [#allocation3], %s1019
        %p1021 = pneg %p782
        %p1022 = pneg %p779
        %s1023 = sand.u32 %s85, 1
        %s1024 = scalar_lea.sflag [#allocation6], %s1023
        %s1025 = sand.u32 %s769, 1
        %s1026 = scalar_lea.vmem [#allocation5], %s1025
        %p1027 = pneg %p808
        %p1028 = pneg %p805
        %s1029 = sand.u32 %s85, 1
        %s1030 = scalar_lea.sflag [#allocation6], %s1029
        %s1031 = sand.u32 %s795, 1
        %s1032 = scalar_lea.vmem [#allocation7], %s1031
        %p1033 = scmp.lt.s32.totalorder %s85, 1
        %s1034 = scalar_select %p1033, %s85, 1
        %s1035 = smul.addr %s1034, 2
        %s1036 = smul.addr %s1035, 4
        %s1037 = scalar_lea.vmem %s1, %s1036
        %p1038 = scmp.lt.s32.totalorder %s85, 1
        %s1039 = scalar_select %p1038, %s85, 1
        %s1040 = scalar_lea.vmem %s3, %s1039
        %p1041 = scmp.lt.s32.totalorder %s85, 1
        %s1042 = scalar_select %p1041, %s85, 1
        %s1043 = scalar_lea.vmem %s5, %s1042
        %p1044 = scmp.lt.s32.totalorder %s85, 1
        %s1045 = scalar_select %p1044, %s85, 1
        %s1046 = smul.addr %s1045, 4
        %s1047 = scalar_lea.vmem %s7, %s1046
        %v1050 = vld [vmem:[%s1037] sm:$0xf]
        %v1051 = vld [vmem:[%s1037 + $0x4] sm:$0xf]
        %v1052 = vld [vmem:[%s1040] sm:$0x1]
        %v1053 = vsub.f32 1.0, %v1052
        %v1054 = vmul.f32 %v1053, -10000.0
        %v1055 = vld [vmem:[%s9] sm:$0xf]
        %v1056 = vld [vmem:[%s9 + $0x4] sm:$0xf]
        %v1057 = vld [vmem:[%s9 + $0x8] sm:$0xf]
        %v1058 = vld [vmem:[%s9 + $0xc] sm:$0xf]
        %v1059 = vld [vmem:[%s9 + $0x10] sm:$0xf]
        %v1060 = vld [vmem:[%s9 + $0x14] sm:$0xf]
        %v1061 = vld [vmem:[%s11] sm:$0x1]
        %v1063 = vperm.slane %v1061, 0
        %v1067 = vunpack.c.l.b16 %v1050
        %v1068 = vunpack.c.l.b16 %v1051
        %v1069 = vpack.c.b16 %v1068, %v1067
        %v1076 = vunpack.c.l.b16 %v1055
        %v1077 = vunpack.c.l.b16 %v1056
        %v1078 = vunpack.c.l.b16 %v1057
        %v1079 = vunpack.c.l.b16 %v1058
        %v1080 = vunpack.c.l.b16 %v1059
        %v1081 = vunpack.c.l.b16 %v1060
        %v1082 = vpack.c.b16 %v1077, %v1076
        %v1083 = vpack.c.b16 %v1079, %v1078
        %v1084 = vpack.c.b16 %v1081, %v1080
        %vm1088 = vcmask 392192
        %v1090 = vsel %vm1088, %v1069, 0
        %1092 = vmatpush.bf16.msra.mxu0 0
        %1093 = vmatpush.bf16.msra.mxu0 0
        %1094 = vmatpush.bf16.msra.mxu0 0
        %1095 = vmatpush.bf16.msra.mxu0 0
        %1096 = vmatpush.bf16.msra.mxu0 0
        %1097 = vmatpush.bf16.msra.mxu0 %v1084
        %1098 = vmatpush.bf16.msra.mxu0 %v1083
        %1099 = vmatpush.bf16.msra.mxu0 %v1082
        %1100 = vmatmul.bf16.gmra.mxu0 %v1090
        %v1101 = vpop.f32.mrf.mxu0
        %v1102 = vadd.f32 %v1063, %v1101
        %v1103 = vpop.f32.mrf.mxu0
        %v1104 = vadd.f32 %v1063, %v1103
        %1105 = vdwg.mxu0
        %v1106 = vmul.f32 %v1102, 0.5
        %v1107 = vmul.f32 %v1104, 0.5
        %v1108 = vmul.f32 %v1102, 0.044715
        %v1109 = vmul.f32 %v1104, 0.044715
        %v1110 = vmul.f32 %v1108, %v1102
        %v1111 = vmul.f32 %v1109, %v1104
        %v1112 = vmul.f32 %v1110, %v1102
        %v1113 = vmul.f32 %v1111, %v1104
        %v1114 = vadd.f32 %v1102, %v1112
        %v1115 = vadd.f32 %v1104, %v1113
        %v1116 = vmul.f32 %v1114, 0.7978846
        %v1117 = vmul.f32 %v1115, 0.7978846
        %v1118 = vtanh.pop %v1116
        %v1119 = vtanh.pop %v1117
        %v1120 = vadd.f32 %v1118, 1.0
        %v1121 = vadd.f32 %v1119, 1.0
        %v1122 = vmul.f32 %v1106, %v1120
        %v1123 = vmul.f32 %v1107, %v1121
        %v1124 = vpack.c.bf16 %v1123, %v1122
        %v1125 = vld [vmem:[%s13] sm:$0xf]
        %v1126 = vld [vmem:[%s13 + $0x4] sm:$0xf]
        %v1127 = vld [vmem:[%s13 + $0x8] sm:$0xf]
        %v1128 = vld [vmem:[%s13 + $0xc] sm:$0xf]
        %v1129 = vld [vmem:[%s15] sm:$0x1]
        %v1131 = vperm.slane %v1129, 0
        %v1137 = vunpack.c.l.b16 %v1125
        %v1138 = vunpack.c.l.b16 %v1126
        %v1139 = vunpack.c.l.b16 %v1127
        %v1140 = vunpack.c.l.b16 %v1128
        %v1141 = vpack.c.b16 %v1138, %v1137
        %v1142 = vpack.c.b16 %v1140, %v1139
        %vm1145 = vcmask 261120
        %v1147 = vsel %vm1145, %v1124, 0
        %1149 = vmatpush.bf16.msra.mxu0 0
        %1150 = vmatpush.bf16.msra.mxu0 0
        %1151 = vmatpush.bf16.msra.mxu0 0
        %1152 = vmatpush.bf16.msra.mxu0 0
        %1153 = vmatpush.bf16.msra.mxu0 0
        %1154 = vmatpush.bf16.msra.mxu0 0
        %1155 = vmatpush.bf16.msra.mxu0 %v1142
        %1156 = vmatpush.bf16.msra.mxu0 %v1141
        %1157 = vmatmul.bf16.gmra.mxu0 %v1147
        %v1158 = vpop.f32.mrf.mxu0
        %v1159 = vadd.f32 %v1131, %v1158
        %v1160 = vpop.f32.mrf.mxu0
        %v1161 = vadd.f32 %v1131, %v1160
        %1162 = vdwg.mxu0
        %v1163 = vld [vmem:[%s17] sm:$0xf]
        %v1164 = vld [vmem:[%s17 + $0x4] sm:$0xf]
        %v1165 = vld [vmem:[%s17 + $0x8] sm:$0xf]
        %v1166 = vld [vmem:[%s17 + $0xc] sm:$0xf]
        %v1167 = vld [vmem:[%s19] sm:$0x1]
        %v1169 = vperm.slane %v1167, 0
        %v1175 = vunpack.c.l.b16 %v1163
        %v1176 = vunpack.c.l.b16 %v1164
        %v1177 = vunpack.c.l.b16 %v1165
        %v1178 = vunpack.c.l.b16 %v1166
        %v1179 = vpack.c.b16 %v1176, %v1175
        %v1180 = vpack.c.b16 %v1178, %v1177
        %1183 = vmatpush.bf16.msra.mxu0 0
        %1184 = vmatpush.bf16.msra.mxu0 0
        %1185 = vmatpush.bf16.msra.mxu0 0
        %1186 = vmatpush.bf16.msra.mxu0 0
        %1187 = vmatpush.bf16.msra.mxu0 0
        %1188 = vmatpush.bf16.msra.mxu0 0
        %1189 = vmatpush.bf16.msra.mxu0 %v1180
        %1190 = vmatpush.bf16.msra.mxu0 %v1179
        %1191 = vmatmul.bf16.gmra.mxu0 %v1147
        %v1192 = vpop.f32.mrf.mxu0
        %v1193 = vadd.f32 %v1169, %v1192
        %v1194 = vpop.f32.mrf.mxu0
        %v1195 = vadd.f32 %v1169, %v1194
        %1196 = vdwg.mxu0
        %v1197 = vld [vmem:[%s21] sm:$0xf]
        %v1198 = vld [vmem:[%s21 + $0x4] sm:$0xf]
        %v1199 = vld [vmem:[%s21 + $0x8] sm:$0xf]
        %v1200 = vld [vmem:[%s21 + $0xc] sm:$0xf]
        %v1201 = vld [vmem:[%s23] sm:$0x1]
        %v1203 = vperm.slane %v1201, 0
        %v1209 = vunpack.c.l.b16 %v1197
        %v1210 = vunpack.c.l.b16 %v1198
        %v1211 = vunpack.c.l.b16 %v1199
        %v1212 = vunpack.c.l.b16 %v1200
        %v1213 = vpack.c.b16 %v1210, %v1209
        %v1214 = vpack.c.b16 %v1212, %v1211
        %1217 = vmatpush.bf16.msra.mxu0 0
        %1218 = vmatpush.bf16.msra.mxu0 0
        %1219 = vmatpush.bf16.msra.mxu0 0
        %1220 = vmatpush.bf16.msra.mxu0 0
        %1221 = vmatpush.bf16.msra.mxu0 0
        %1222 = vmatpush.bf16.msra.mxu0 0
        %1223 = vmatpush.bf16.msra.mxu0 %v1214
        %1224 = vmatpush.bf16.msra.mxu0 %v1213
        %1225 = vmatmul.bf16.gmra.mxu0 %v1147
        %v1226 = vpop.f32.mrf.mxu0
        %v1227 = vadd.f32 %v1203, %v1226
        %v1228 = vpop.f32.mrf.mxu0
        %v1229 = vadd.f32 %v1203, %v1228
        %1230 = vdwg.mxu0
        %v1231 = vpack.c.bf16 %v1161, %v1159
        %v1232 = vpack.c.bf16 %v1195, %v1193
        %vm1233 = vcmask 64512
        %v1235 = vsel %vm1233, %v1231, 0
        %v1238 = vsel %vm1233, %v1232, 0
        %1240 = vmatpush.bf16.xpose.msra.mxu0 0
        %1241 = vmatpush.bf16.xpose.msra.mxu0 0
        %1242 = vmatpush.bf16.xpose.msra.mxu0 0
        %1243 = vmatpush.bf16.xpose.msra.mxu0 0
        %1244 = vmatpush.bf16.xpose.msra.mxu0 0
        %1245 = vmatpush.bf16.xpose.msra.mxu0 0
        %1246 = vmatpush.bf16.xpose.msra.mxu0 0
        %1247 = vmatpush.bf16.xpose.msra.mxu0 %v1238
        %1248 = vmatmul.bf16.gmra.mxu0 %v1235
        %v1249 = vpop.f32.mrf.mxu0
        %v1250 = vadd.f32 0.0, %v1249
        %v1251 = vpop.f32.mrf.mxu0
        %v1252 = vadd.f32 0.0, %v1251
        %1253 = vdwg.mxu0
        %v1254 = vmul.f32 %v1250, 0.35355338
        %v1255 = vmul.f32 %v1252, 0.35355338
        %v1257 = vperm.slane %v1054, 0
        %v1259 = vadd.f32 %v1254, %v1257
        %v1260 = vadd.f32 %v1255, %v1257
        %vm1261 = vcmask 130048
        %v1262 = vsel %vm1261, %v1259, -inf
        %1263 = vmax.xlane.f32.xlu0 %v1262
        %v1264 = vpop.xlane.xlu0 %1263
        %v1265 = vsel %vm1261, %v1260, -inf
        %1266 = vmax.xlane.f32.xlu0 %v1265
        %v1267 = vpop.xlane.xlu0 %1266
        %v1268 = vsub.f32 %v1259, %v1264
        %v1269 = vsub.f32 %v1260, %v1267
        %v1270 = vmul.f32 %v1268, 1.442695
        %v1271 = vpow.pop %v1270
        %v1272 = vmul.f32 %v1269, 1.442695
        %v1273 = vpow.pop %v1272
        %v1274 = vsel %vm1261, %v1271, 0.0
        %1275 = vadd.xlane.f32.xlu0 %v1274
        %v1276 = vpop.xlane.xlu0 %1275
        %v1277 = vsel %vm1261, %v1273, 0.0
        %1278 = vadd.xlane.f32.xlu0 %v1277
        %v1279 = vpop.xlane.xlu0 %1278
        %v1280 = vrcp.pop %v1276
        %v1281 = vrcp.pop %v1279
        %v1282 = vmul.f32 %v1271, %v1280
        %v1283 = vmul.f32 %v1273, %v1281
        %v1284 = vpack.c.bf16 %v1283, %v1282
        %v1285 = vpack.c.bf16 %v1229, %v1227
        %v1287 = vsel %vm1261, %v1284, 0
        %1289 = vmatpush.bf16.msra.mxu0 0
        %1290 = vmatpush.bf16.msra.mxu0 0
        %1291 = vmatpush.bf16.msra.mxu0 0
        %1292 = vmatpush.bf16.msra.mxu0 0
        %1293 = vmatpush.bf16.msra.mxu0 0
        %1294 = vmatpush.bf16.msra.mxu0 0
        %1295 = vmatpush.bf16.msra.mxu0 0
        %1296 = vmatpush.bf16.msra.mxu0 %v1285
        %1297 = vmatmul.bf16.gmra.mxu0 %v1287
        %v1298 = vpop.f32.mrf.mxu0
        %v1299 = vadd.f32 0.0, %v1298
        %v1300 = vpop.f32.mrf.mxu0
        %v1301 = vadd.f32 0.0, %v1300
        %1302 = vdwg.mxu0
        %v1303 = vld [vmem:[%s25] sm:$0xf]
        %v1304 = vpack.c.bf16 %v1301, %v1299
        %s1305 = scalar_lea.vmem %s13, 16
        %v1306 = vld [vmem:[%s1305] sm:$0xf]
        %v1307 = vld [vmem:[%s1305 + $0x4] sm:$0xf]
        %v1308 = vld [vmem:[%s1305 + $0x8] sm:$0xf]
        %v1309 = vld [vmem:[%s1305 + $0xc] sm:$0xf]
        %s1310 = scalar_lea.vmem %s15, 1
        %v1311 = vld [vmem:[%s1310] sm:$0x1]
        %v1313 = vperm.slane %v1311, 0
        %v1319 = vunpack.c.l.b16 %v1306
        %v1320 = vunpack.c.l.b16 %v1307
        %v1321 = vunpack.c.l.b16 %v1308
        %v1322 = vunpack.c.l.b16 %v1309
        %v1323 = vpack.c.b16 %v1320, %v1319
        %v1324 = vpack.c.b16 %v1322, %v1321
        %1327 = vmatpush.bf16.msra.mxu0 0
        %1328 = vmatpush.bf16.msra.mxu0 0
        %1329 = vmatpush.bf16.msra.mxu0 0
        %1330 = vmatpush.bf16.msra.mxu0 0
        %1331 = vmatpush.bf16.msra.mxu0 0
        %1332 = vmatpush.bf16.msra.mxu0 0
        %1333 = vmatpush.bf16.msra.mxu0 %v1324
        %1334 = vmatpush.bf16.msra.mxu0 %v1323
        %1335 = vmatmul.bf16.gmra.mxu0 %v1147
        %v1336 = vpop.f32.mrf.mxu0
        %v1337 = vadd.f32 %v1313, %v1336
        %v1338 = vpop.f32.mrf.mxu0
        %v1339 = vadd.f32 %v1313, %v1338
        %1340 = vdwg.mxu0
        %s1341 = scalar_lea.vmem %s17, 16
        %v1342 = vld [vmem:[%s1341] sm:$0xf]
        %v1343 = vld [vmem:[%s1341 + $0x4] sm:$0xf]
        %v1344 = vld [vmem:[%s1341 + $0x8] sm:$0xf]
        %v1345 = vld [vmem:[%s1341 + $0xc] sm:$0xf]
        %s1346 = scalar_lea.vmem %s19, 1
        %v1347 = vld [vmem:[%s1346] sm:$0x1]
        %v1349 = vperm.slane %v1347, 0
        %v1355 = vunpack.c.l.b16 %v1342
        %v1356 = vunpack.c.l.b16 %v1343
        %v1357 = vunpack.c.l.b16 %v1344
        %v1358 = vunpack.c.l.b16 %v1345
        %v1359 = vpack.c.b16 %v1356, %v1355
        %v1360 = vpack.c.b16 %v1358, %v1357
        %1363 = vmatpush.bf16.msra.mxu0 0
        %1364 = vmatpush.bf16.msra.mxu0 0
        %1365 = vmatpush.bf16.msra.mxu0 0
        %1366 = vmatpush.bf16.msra.mxu0 0
        %1367 = vmatpush.bf16.msra.mxu0 0
        %1368 = vmatpush.bf16.msra.mxu0 0
        %1369 = vmatpush.bf16.msra.mxu0 %v1360
        %1370 = vmatpush.bf16.msra.mxu0 %v1359
        %1371 = vmatmul.bf16.gmra.mxu0 %v1147
        %v1372 = vpop.f32.mrf.mxu0
        %v1373 = vadd.f32 %v1349, %v1372
        %v1374 = vpop.f32.mrf.mxu0
        %v1375 = vadd.f32 %v1349, %v1374
        %1376 = vdwg.mxu0
        %s1377 = scalar_lea.vmem %s21, 16
        %v1378 = vld [vmem:[%s1377] sm:$0xf]
        %v1379 = vld [vmem:[%s1377 + $0x4] sm:$0xf]
        %v1380 = vld [vmem:[%s1377 + $0x8] sm:$0xf]
        %v1381 = vld [vmem:[%s1377 + $0xc] sm:$0xf]
        %s1382 = scalar_lea.vmem %s23, 1
        %v1383 = vld [vmem:[%s1382] sm:$0x1]
        %v1385 = vperm.slane %v1383, 0
        %v1391 = vunpack.c.l.b16 %v1378
        %v1392 = vunpack.c.l.b16 %v1379
        %v1393 = vunpack.c.l.b16 %v1380
        %v1394 = vunpack.c.l.b16 %v1381
        %v1395 = vpack.c.b16 %v1392, %v1391
        %v1396 = vpack.c.b16 %v1394, %v1393
        %1399 = vmatpush.bf16.msra.mxu0 0
        %1400 = vmatpush.bf16.msra.mxu0 0
        %1401 = vmatpush.bf16.msra.mxu0 0
        %1402 = vmatpush.bf16.msra.mxu0 0
        %1403 = vmatpush.bf16.msra.mxu0 0
        %1404 = vmatpush.bf16.msra.mxu0 0
        %1405 = vmatpush.bf16.msra.mxu0 %v1396
        %1406 = vmatpush.bf16.msra.mxu0 %v1395
        %1407 = vmatmul.bf16.gmra.mxu0 %v1147
        %v1408 = vpop.f32.mrf.mxu0
        %v1409 = vadd.f32 %v1385, %v1408
        %v1410 = vpop.f32.mrf.mxu0
        %v1411 = vadd.f32 %v1385, %v1410
        %1412 = vdwg.mxu0
        %v1413 = vpack.c.bf16 %v1339, %v1337
        %v1414 = vpack.c.bf16 %v1375, %v1373
        %v1416 = vsel %vm1233, %v1413, 0
        %v1419 = vsel %vm1233, %v1414, 0
        %1421 = vmatpush.bf16.xpose.msra.mxu0 0
        %1422 = vmatpush.bf16.xpose.msra.mxu0 0
        %1423 = vmatpush.bf16.xpose.msra.mxu0 0
        %1424 = vmatpush.bf16.xpose.msra.mxu0 0
        %1425 = vmatpush.bf16.xpose.msra.mxu0 0
        %1426 = vmatpush.bf16.xpose.msra.mxu0 0
        %1427 = vmatpush.bf16.xpose.msra.mxu0 0
        %1428 = vmatpush.bf16.xpose.msra.mxu0 %v1419
        %1429 = vmatmul.bf16.gmra.mxu0 %v1416
        %v1430 = vpop.f32.mrf.mxu0
        %v1431 = vadd.f32 0.0, %v1430
        %v1432 = vpop.f32.mrf.mxu0
        %v1433 = vadd.f32 0.0, %v1432
        %1434 = vdwg.mxu0
        %v1435 = vmul.f32 %v1431, 0.35355338
        %v1436 = vmul.f32 %v1433, 0.35355338
        %v1437 = vadd.f32 %v1435, %v1257
        %v1438 = vadd.f32 %v1436, %v1257
        %v1439 = vsel %vm1261, %v1437, -inf
        %1440 = vmax.xlane.f32.xlu0 %v1439
        %v1441 = vpop.xlane.xlu0 %1440
        %v1442 = vsel %vm1261, %v1438, -inf
        %1443 = vmax.xlane.f32.xlu0 %v1442
        %v1444 = vpop.xlane.xlu0 %1443
        %v1445 = vsub.f32 %v1437, %v1441
        %v1446 = vsub.f32 %v1438, %v1444
        %v1447 = vmul.f32 %v1445, 1.442695
        %v1448 = vpow.pop %v1447
        %v1449 = vmul.f32 %v1446, 1.442695
        %v1450 = vpow.pop %v1449
        %v1451 = vsel %vm1261, %v1448, 0.0
        %1452 = vadd.xlane.f32.xlu0 %v1451
        %v1453 = vpop.xlane.xlu0 %1452
        %v1454 = vsel %vm1261, %v1450, 0.0
        %1455 = vadd.xlane.f32.xlu0 %v1454
        %v1456 = vpop.xlane.xlu0 %1455
        %v1457 = vrcp.pop %v1453
        %v1458 = vrcp.pop %v1456
        %v1459 = vmul.f32 %v1448, %v1457
        %v1460 = vmul.f32 %v1450, %v1458
        %v1461 = vpack.c.bf16 %v1460, %v1459
        %v1462 = vpack.c.bf16 %v1411, %v1409
        %v1464 = vsel %vm1261, %v1461, 0
        %1466 = vmatpush.bf16.msra.mxu0 0
        %1467 = vmatpush.bf16.msra.mxu0 0
        %1468 = vmatpush.bf16.msra.mxu0 0
        %1469 = vmatpush.bf16.msra.mxu0 0
        %1470 = vmatpush.bf16.msra.mxu0 0
        %1471 = vmatpush.bf16.msra.mxu0 0
        %1472 = vmatpush.bf16.msra.mxu0 0
        %1473 = vmatpush.bf16.msra.mxu0 %v1462
        %1474 = vmatmul.bf16.gmra.mxu0 %v1464
        %v1475 = vpop.f32.mrf.mxu0
        %v1476 = vadd.f32 0.0, %v1475
        %v1477 = vpop.f32.mrf.mxu0
        %v1478 = vadd.f32 0.0, %v1477
        %1479 = vdwg.mxu0
        %s1480 = scalar_lea.vmem %s25, 4
        %v1481 = vld [vmem:[%s1480] sm:$0xf]
        %v1482 = vpack.c.bf16 %v1478, %v1476
        %v1484 = vsel %vm1233, %v1482, 0
        %vm1486 = vcmask 1043456
        %v1488 = vsel %vm1486, %v1481, 0
        %1490 = vmatpush.bf16.msra.mxu0 0
        %1491 = vmatpush.bf16.msra.mxu0 0
        %1492 = vmatpush.bf16.msra.mxu0 0
        %1493 = vmatpush.bf16.msra.mxu0 0
        %1494 = vmatpush.bf16.msra.mxu0 0
        %1495 = vmatpush.bf16.msra.mxu0 0
        %1496 = vmatpush.bf16.msra.mxu0 0
        %1497 = vmatpush.bf16.msra.mxu0 %v1488
        %1498 = vmatmul.bf16.gmra.mxu0 %v1484
        %v1499 = vpop.f32.mrf.mxu0
        %v1500 = vadd.f32 0.0, %v1499
        %v1501 = vpop.f32.mrf.mxu0
        %v1502 = vadd.f32 0.0, %v1501
        %1503 = vdwg.mxu0
        %v1505 = vsel %vm1233, %v1304, 0
        %v1508 = vsel %vm1486, %v1303, 0
        %1510 = vmatpush.bf16.msra.mxu0 0
        %1511 = vmatpush.bf16.msra.mxu0 0
        %1512 = vmatpush.bf16.msra.mxu0 0
        %1513 = vmatpush.bf16.msra.mxu0 0
        %1514 = vmatpush.bf16.msra.mxu0 0
        %1515 = vmatpush.bf16.msra.mxu0 0
        %1516 = vmatpush.bf16.msra.mxu0 0
        %1517 = vmatpush.bf16.msra.mxu0 %v1508
        %1518 = vmatmul.bf16.gmra.mxu0 %v1505
        %v1519 = vpop.f32.mrf.mxu0
        %v1520 = vadd.f32 %v1500, %v1519
        %v1521 = vpop.f32.mrf.mxu0
        %v1522 = vadd.f32 %v1502, %v1521
        %1523 = vdwg.mxu0
        %s1524 = scalar_lea.vmem %s13, 32
        %v1525 = vld [vmem:[%s1524] sm:$0xf]
        %v1526 = vld [vmem:[%s1524 + $0x4] sm:$0xf]
        %v1527 = vld [vmem:[%s1524 + $0x8] sm:$0xf]
        %v1528 = vld [vmem:[%s1524 + $0xc] sm:$0xf]
        %s1529 = scalar_lea.vmem %s15, 2
        %v1530 = vld [vmem:[%s1529] sm:$0x1]
        %v1532 = vperm.slane %v1530, 0
        %v1538 = vunpack.c.l.b16 %v1525
        %v1539 = vunpack.c.l.b16 %v1526
        %v1540 = vunpack.c.l.b16 %v1527
        %v1541 = vunpack.c.l.b16 %v1528
        %v1542 = vpack.c.b16 %v1539, %v1538
        %v1543 = vpack.c.b16 %v1541, %v1540
        %1546 = vmatpush.bf16.msra.mxu0 0
        %1547 = vmatpush.bf16.msra.mxu0 0
        %1548 = vmatpush.bf16.msra.mxu0 0
        %1549 = vmatpush.bf16.msra.mxu0 0
        %1550 = vmatpush.bf16.msra.mxu0 0
        %1551 = vmatpush.bf16.msra.mxu0 0
        %1552 = vmatpush.bf16.msra.mxu0 %v1543
        %1553 = vmatpush.bf16.msra.mxu0 %v1542
        %1554 = vmatmul.bf16.gmra.mxu0 %v1147
        %v1555 = vpop.f32.mrf.mxu0
        %v1556 = vadd.f32 %v1532, %v1555
        %v1557 = vpop.f32.mrf.mxu0
        %v1558 = vadd.f32 %v1532, %v1557
        %1559 = vdwg.mxu0
        %s1560 = scalar_lea.vmem %s17, 32
        %v1561 = vld [vmem:[%s1560] sm:$0xf]
        %v1562 = vld [vmem:[%s1560 + $0x4] sm:$0xf]
        %v1563 = vld [vmem:[%s1560 + $0x8] sm:$0xf]
        %v1564 = vld [vmem:[%s1560 + $0xc] sm:$0xf]
        %s1565 = scalar_lea.vmem %s19, 2
        %v1566 = vld [vmem:[%s1565] sm:$0x1]
        %v1568 = vperm.slane %v1566, 0
        %v1574 = vunpack.c.l.b16 %v1561
        %v1575 = vunpack.c.l.b16 %v1562
        %v1576 = vunpack.c.l.b16 %v1563
        %v1577 = vunpack.c.l.b16 %v1564
        %v1578 = vpack.c.b16 %v1575, %v1574
        %v1579 = vpack.c.b16 %v1577, %v1576
        %1582 = vmatpush.bf16.msra.mxu0 0
        %1583 = vmatpush.bf16.msra.mxu0 0
        %1584 = vmatpush.bf16.msra.mxu0 0
        %1585 = vmatpush.bf16.msra.mxu0 0
        %1586 = vmatpush.bf16.msra.mxu0 0
        %1587 = vmatpush.bf16.msra.mxu0 0
        %1588 = vmatpush.bf16.msra.mxu0 %v1579
        %1589 = vmatpush.bf16.msra.mxu0 %v1578
        %1590 = vmatmul.bf16.gmra.mxu0 %v1147
        %v1591 = vpop.f32.mrf.mxu0
        %v1592 = vadd.f32 %v1568, %v1591
        %v1593 = vpop.f32.mrf.mxu0
        %v1594 = vadd.f32 %v1568, %v1593
        %1595 = vdwg.mxu0
        %s1596 = scalar_lea.vmem %s21, 32
        %v1597 = vld [vmem:[%s1596] sm:$0xf]
        %v1598 = vld [vmem:[%s1596 + $0x4] sm:$0xf]
        %v1599 = vld [vmem:[%s1596 + $0x8] sm:$0xf]
        %v1600 = vld [vmem:[%s1596 + $0xc] sm:$0xf]
        %s1601 = scalar_lea.vmem %s23, 2
        %v1602 = vld [vmem:[%s1601] sm:$0x1]
        %v1604 = vperm.slane %v1602, 0
        %v1610 = vunpack.c.l.b16 %v1597
        %v1611 = vunpack.c.l.b16 %v1598
        %v1612 = vunpack.c.l.b16 %v1599
        %v1613 = vunpack.c.l.b16 %v1600
        %v1614 = vpack.c.b16 %v1611, %v1610
        %v1615 = vpack.c.b16 %v1613, %v1612
        %1618 = vmatpush.bf16.msra.mxu0 0
        %1619 = vmatpush.bf16.msra.mxu0 0
        %1620 = vmatpush.bf16.msra.mxu0 0
        %1621 = vmatpush.bf16.msra.mxu0 0
        %1622 = vmatpush.bf16.msra.mxu0 0
        %1623 = vmatpush.bf16.msra.mxu0 0
        %1624 = vmatpush.bf16.msra.mxu0 %v1615
        %1625 = vmatpush.bf16.msra.mxu0 %v1614
        %1626 = vmatmul.bf16.gmra.mxu0 %v1147
        %v1627 = vpop.f32.mrf.mxu0
        %v1628 = vadd.f32 %v1604, %v1627
        %v1629 = vpop.f32.mrf.mxu0
        %v1630 = vadd.f32 %v1604, %v1629
        %1631 = vdwg.mxu0
        %v1632 = vpack.c.bf16 %v1558, %v1556
        %v1633 = vpack.c.bf16 %v1594, %v1592
        %v1635 = vsel %vm1233, %v1632, 0
        %v1638 = vsel %vm1233, %v1633, 0
        %1640 = vmatpush.bf16.xpose.msra.mxu0 0
        %1641 = vmatpush.bf16.xpose.msra.mxu0 0
        %1642 = vmatpush.bf16.xpose.msra.mxu0 0
        %1643 = vmatpush.bf16.xpose.msra.mxu0 0
        %1644 = vmatpush.bf16.xpose.msra.mxu0 0
        %1645 = vmatpush.bf16.xpose.msra.mxu0 0
        %1646 = vmatpush.bf16.xpose.msra.mxu0 0
        %1647 = vmatpush.bf16.xpose.msra.mxu0 %v1638
        %1648 = vmatmul.bf16.gmra.mxu0 %v1635
        %v1649 = vpop.f32.mrf.mxu0
        %v1650 = vadd.f32 0.0, %v1649
        %v1651 = vpop.f32.mrf.mxu0
        %v1652 = vadd.f32 0.0, %v1651
        %1653 = vdwg.mxu0
        %v1654 = vmul.f32 %v1650, 0.35355338
        %v1655 = vmul.f32 %v1652, 0.35355338
        %v1656 = vadd.f32 %v1654, %v1257
        %v1657 = vadd.f32 %v1655, %v1257
        %v1658 = vsel %vm1261, %v1656, -inf
        %1659 = vmax.xlane.f32.xlu0 %v1658
        %v1660 = vpop.xlane.xlu0 %1659
        %v1661 = vsel %vm1261, %v1657, -inf
        %1662 = vmax.xlane.f32.xlu0 %v1661
        %v1663 = vpop.xlane.xlu0 %1662
        %v1664 = vsub.f32 %v1656, %v1660
        %v1665 = vsub.f32 %v1657, %v1663
        %v1666 = vmul.f32 %v1664, 1.442695
        %v1667 = vpow.pop %v1666
        %v1668 = vmul.f32 %v1665, 1.442695
        %v1669 = vpow.pop %v1668
        %v1670 = vsel %vm1261, %v1667, 0.0
        %1671 = vadd.xlane.f32.xlu0 %v1670
        %v1672 = vpop.xlane.xlu0 %1671
        %v1673 = vsel %vm1261, %v1669, 0.0
        %1674 = vadd.xlane.f32.xlu0 %v1673
        %v1675 = vpop.xlane.xlu0 %1674
        %v1676 = vrcp.pop %v1672
        %v1677 = vrcp.pop %v1675
        %v1678 = vmul.f32 %v1667, %v1676
        %v1679 = vmul.f32 %v1669, %v1677
        %v1680 = vpack.c.bf16 %v1679, %v1678
        %v1681 = vpack.c.bf16 %v1630, %v1628
        %v1683 = vsel %vm1261, %v1680, 0
        %1685 = vmatpush.bf16.msra.mxu0 0
        %1686 = vmatpush.bf16.msra.mxu0 0
        %1687 = vmatpush.bf16.msra.mxu0 0
        %1688 = vmatpush.bf16.msra.mxu0 0
        %1689 = vmatpush.bf16.msra.mxu0 0
        %1690 = vmatpush.bf16.msra.mxu0 0
        %1691 = vmatpush.bf16.msra.mxu0 0
        %1692 = vmatpush.bf16.msra.mxu0 %v1681
        %1693 = vmatmul.bf16.gmra.mxu0 %v1683
        %v1694 = vpop.f32.mrf.mxu0
        %v1695 = vadd.f32 0.0, %v1694
        %v1696 = vpop.f32.mrf.mxu0
        %v1697 = vadd.f32 0.0, %v1696
        %1698 = vdwg.mxu0
        %s1699 = scalar_lea.vmem %s25, 8
        %v1700 = vld [vmem:[%s1699] sm:$0xf]
        %v1701 = vpack.c.bf16 %v1697, %v1695
        %v1703 = vsel %vm1233, %v1701, 0
        %v1706 = vsel %vm1486, %v1700, 0
        %1708 = vmatpush.bf16.msra.mxu0 0
        %1709 = vmatpush.bf16.msra.mxu0 0
        %1710 = vmatpush.bf16.msra.mxu0 0
        %1711 = vmatpush.bf16.msra.mxu0 0
        %1712 = vmatpush.bf16.msra.mxu0 0
        %1713 = vmatpush.bf16.msra.mxu0 0
        %1714 = vmatpush.bf16.msra.mxu0 0
        %1715 = vmatpush.bf16.msra.mxu0 %v1706
        %1716 = vmatmul.bf16.gmra.mxu0 %v1703
        %v1717 = vpop.f32.mrf.mxu0
        %v1718 = vadd.f32 0.0, %v1717
        %v1719 = vpop.f32.mrf.mxu0
        %v1720 = vadd.f32 0.0, %v1719
        %1721 = vdwg.mxu0
        %v1722 = vadd.f32 %v1520, %v1718
        %v1723 = vadd.f32 %v1522, %v1720
        %s1724 = scalar_lea.vmem %s13, 48
        %v1725 = vld [vmem:[%s1724] sm:$0xf]
        %v1726 = vld [vmem:[%s1724 + $0x4] sm:$0xf]
        %v1727 = vld [vmem:[%s1724 + $0x8] sm:$0xf]
        %v1728 = vld [vmem:[%s1724 + $0xc] sm:$0xf]
        %s1729 = scalar_lea.vmem %s15, 3
        %v1730 = vld [vmem:[%s1729] sm:$0x1]
        %v1732 = vperm.slane %v1730, 0
        %v1738 = vunpack.c.l.b16 %v1725
        %v1739 = vunpack.c.l.b16 %v1726
        %v1740 = vunpack.c.l.b16 %v1727
        %v1741 = vunpack.c.l.b16 %v1728
        %v1742 = vpack.c.b16 %v1739, %v1738
        %v1743 = vpack.c.b16 %v1741, %v1740
        %1746 = vmatpush.bf16.msra.mxu0 0
        %1747 = vmatpush.bf16.msra.mxu0 0
        %1748 = vmatpush.bf16.msra.mxu0 0
        %1749 = vmatpush.bf16.msra.mxu0 0
        %1750 = vmatpush.bf16.msra.mxu0 0
        %1751 = vmatpush.bf16.msra.mxu0 0
        %1752 = vmatpush.bf16.msra.mxu0 %v1743
        %1753 = vmatpush.bf16.msra.mxu0 %v1742
        %1754 = vmatmul.bf16.gmra.mxu0 %v1147
        %v1755 = vpop.f32.mrf.mxu0
        %v1756 = vadd.f32 %v1732, %v1755
        %v1757 = vpop.f32.mrf.mxu0
        %v1758 = vadd.f32 %v1732, %v1757
        %1759 = vdwg.mxu0
        %s1760 = scalar_lea.vmem %s17, 48
        %v1761 = vld [vmem:[%s1760] sm:$0xf]
        %v1762 = vld [vmem:[%s1760 + $0x4] sm:$0xf]
        %v1763 = vld [vmem:[%s1760 + $0x8] sm:$0xf]
        %v1764 = vld [vmem:[%s1760 + $0xc] sm:$0xf]
        %s1765 = scalar_lea.vmem %s19, 3
        %v1766 = vld [vmem:[%s1765] sm:$0x1]
        %v1768 = vperm.slane %v1766, 0
        %v1774 = vunpack.c.l.b16 %v1761
        %v1775 = vunpack.c.l.b16 %v1762
        %v1776 = vunpack.c.l.b16 %v1763
        %v1777 = vunpack.c.l.b16 %v1764
        %v1778 = vpack.c.b16 %v1775, %v1774
        %v1779 = vpack.c.b16 %v1777, %v1776
        %1782 = vmatpush.bf16.msra.mxu0 0
        %1783 = vmatpush.bf16.msra.mxu0 0
        %1784 = vmatpush.bf16.msra.mxu0 0
        %1785 = vmatpush.bf16.msra.mxu0 0
        %1786 = vmatpush.bf16.msra.mxu0 0
        %1787 = vmatpush.bf16.msra.mxu0 0
        %1788 = vmatpush.bf16.msra.mxu0 %v1779
        %1789 = vmatpush.bf16.msra.mxu0 %v1778
        %1790 = vmatmul.bf16.gmra.mxu0 %v1147
        %v1791 = vpop.f32.mrf.mxu0
        %v1792 = vadd.f32 %v1768, %v1791
        %v1793 = vpop.f32.mrf.mxu0
        %v1794 = vadd.f32 %v1768, %v1793
        %1795 = vdwg.mxu0
        %s1796 = scalar_lea.vmem %s21, 48
        %v1797 = vld [vmem:[%s1796] sm:$0xf]
        %v1798 = vld [vmem:[%s1796 + $0x4] sm:$0xf]
        %v1799 = vld [vmem:[%s1796 + $0x8] sm:$0xf]
        %v1800 = vld [vmem:[%s1796 + $0xc] sm:$0xf]
        %s1801 = scalar_lea.vmem %s23, 3
        %v1802 = vld [vmem:[%s1801] sm:$0x1]
        %v1804 = vperm.slane %v1802, 0
        %v1810 = vunpack.c.l.b16 %v1797
        %v1811 = vunpack.c.l.b16 %v1798
        %v1812 = vunpack.c.l.b16 %v1799
        %v1813 = vunpack.c.l.b16 %v1800
        %v1814 = vpack.c.b16 %v1811, %v1810
        %v1815 = vpack.c.b16 %v1813, %v1812
        %1818 = vmatpush.bf16.msra.mxu0 0
        %1819 = vmatpush.bf16.msra.mxu0 0
        %1820 = vmatpush.bf16.msra.mxu0 0
        %1821 = vmatpush.bf16.msra.mxu0 0
        %1822 = vmatpush.bf16.msra.mxu0 0
        %1823 = vmatpush.bf16.msra.mxu0 0
        %1824 = vmatpush.bf16.msra.mxu0 %v1815
        %1825 = vmatpush.bf16.msra.mxu0 %v1814
        %1826 = vmatmul.bf16.gmra.mxu0 %v1147
        %v1827 = vpop.f32.mrf.mxu0
        %v1828 = vadd.f32 %v1804, %v1827
        %v1829 = vpop.f32.mrf.mxu0
        %v1830 = vadd.f32 %v1804, %v1829
        %1831 = vdwg.mxu0
        %v1832 = vpack.c.bf16 %v1758, %v1756
        %v1833 = vpack.c.bf16 %v1794, %v1792
        %v1835 = vsel %vm1233, %v1832, 0
        %v1838 = vsel %vm1233, %v1833, 0
        %1840 = vmatpush.bf16.xpose.msra.mxu0 0
        %1841 = vmatpush.bf16.xpose.msra.mxu0 0
        %1842 = vmatpush.bf16.xpose.msra.mxu0 0
        %1843 = vmatpush.bf16.xpose.msra.mxu0 0
        %1844 = vmatpush.bf16.xpose.msra.mxu0 0
        %1845 = vmatpush.bf16.xpose.msra.mxu0 0
        %1846 = vmatpush.bf16.xpose.msra.mxu0 0
        %1847 = vmatpush.bf16.xpose.msra.mxu0 %v1838
        %1848 = vmatmul.bf16.gmra.mxu0 %v1835
        %v1849 = vpop.f32.mrf.mxu0
        %v1850 = vadd.f32 0.0, %v1849
        %v1851 = vpop.f32.mrf.mxu0
        %v1852 = vadd.f32 0.0, %v1851
        %1853 = vdwg.mxu0
        %v1854 = vmul.f32 %v1850, 0.35355338
        %v1855 = vmul.f32 %v1852, 0.35355338
        %v1856 = vadd.f32 %v1854, %v1257
        %v1857 = vadd.f32 %v1855, %v1257
        %v1858 = vsel %vm1261, %v1856, -inf
        %1859 = vmax.xlane.f32.xlu0 %v1858
        %v1860 = vpop.xlane.xlu0 %1859
        %v1861 = vsel %vm1261, %v1857, -inf
        %1862 = vmax.xlane.f32.xlu0 %v1861
        %v1863 = vpop.xlane.xlu0 %1862
        %v1864 = vsub.f32 %v1856, %v1860
        %v1865 = vsub.f32 %v1857, %v1863
        %v1866 = vmul.f32 %v1864, 1.442695
        %v1867 = vpow.pop %v1866
        %v1868 = vmul.f32 %v1865, 1.442695
        %v1869 = vpow.pop %v1868
        %v1870 = vsel %vm1261, %v1867, 0.0
        %1871 = vadd.xlane.f32.xlu0 %v1870
        %v1872 = vpop.xlane.xlu0 %1871
        %v1873 = vsel %vm1261, %v1869, 0.0
        %1874 = vadd.xlane.f32.xlu0 %v1873
        %v1875 = vpop.xlane.xlu0 %1874
        %v1876 = vrcp.pop %v1872
        %v1877 = vrcp.pop %v1875
        %v1878 = vmul.f32 %v1867, %v1876
        %v1879 = vmul.f32 %v1869, %v1877
        %v1880 = vpack.c.bf16 %v1879, %v1878
        %v1881 = vpack.c.bf16 %v1830, %v1828
        %v1883 = vsel %vm1261, %v1880, 0
        %1885 = vmatpush.bf16.msra.mxu0 0
        %1886 = vmatpush.bf16.msra.mxu0 0
        %1887 = vmatpush.bf16.msra.mxu0 0
        %1888 = vmatpush.bf16.msra.mxu0 0
        %1889 = vmatpush.bf16.msra.mxu0 0
        %1890 = vmatpush.bf16.msra.mxu0 0
        %1891 = vmatpush.bf16.msra.mxu0 0
        %1892 = vmatpush.bf16.msra.mxu0 %v1881
        %1893 = vmatmul.bf16.gmra.mxu0 %v1883
        %v1894 = vpop.f32.mrf.mxu0
        %v1895 = vadd.f32 0.0, %v1894
        %v1896 = vpop.f32.mrf.mxu0
        %v1897 = vadd.f32 0.0, %v1896
        %1898 = vdwg.mxu0
        %s1899 = scalar_lea.vmem %s25, 12
        %v1900 = vld [vmem:[%s1899] sm:$0xf]
        %v1901 = vpack.c.bf16 %v1897, %v1895
        %v1903 = vsel %vm1233, %v1901, 0
        %v1906 = vsel %vm1486, %v1900, 0
        %1908 = vmatpush.bf16.msra.mxu0 0
        %1909 = vmatpush.bf16.msra.mxu0 0
        %1910 = vmatpush.bf16.msra.mxu0 0
        %1911 = vmatpush.bf16.msra.mxu0 0
        %1912 = vmatpush.bf16.msra.mxu0 0
        %1913 = vmatpush.bf16.msra.mxu0 0
        %1914 = vmatpush.bf16.msra.mxu0 0
        %1915 = vmatpush.bf16.msra.mxu0 %v1906
        %1916 = vmatmul.bf16.gmra.mxu0 %v1903
        %v1917 = vpop.f32.mrf.mxu0
        %v1918 = vadd.f32 0.0, %v1917
        %v1919 = vpop.f32.mrf.mxu0
        %v1920 = vadd.f32 0.0, %v1919
        %1921 = vdwg.mxu0
        %v1922 = vadd.f32 %v1722, %v1918
        %v1923 = vadd.f32 %v1723, %v1920
        %v1924 = vld [vmem:[%s27] sm:$0x1]
        %v1926 = vperm.slane %v1924, 0
        %v1928 = vadd.f32 %v1922, %v1926
        %v1929 = vadd.f32 %v1923, %v1926
        %v1930 = vadd.f32 %v1928, %v1122
        %v1931 = vadd.f32 %v1929, %v1123
        %v1932 = vld [vmem:[%s29] sm:$0x1]
        %v1933 = vld [vmem:[%s31] sm:$0x1]
        %v1934 = vsel %vm1145, %v1930, 0.0
        %1935 = vadd.xlane.f32.xlu0 %v1934
        %v1936 = vpop.xlane.xlu0 %1935
        %v1937 = vsel %vm1145, %v1931, 0.0
        %1938 = vadd.xlane.f32.xlu0 %v1937
        %v1939 = vpop.xlane.xlu0 %1938
        %v1940 = vrcp.pop 32.0
        %v1941 = vmul.f32 32.0, %v1940
        %v1942 = vsub.f32 1.0, %v1941
        %v1943 = vmul.f32 %v1940, %v1942
        %v1944 = vadd.f32 %v1940, %v1943
        %vm1945 = vweird.f32 %v1940
        %v1946 = vsel %vm1945, %v1940, %v1944
        %v1947 = vmul.f32 %v1936, %v1946
        %v1948 = vmul.f32 %v1939, %v1946
        %v1949 = vsub.f32 %v1930, %v1947
        %v1950 = vsub.f32 %v1931, %v1948
        %v1951 = vmul.f32 %v1949, %v1949
        %v1952 = vmul.f32 %v1950, %v1950
        %v1953 = vsel %vm1145, %v1951, 0.0
        %1954 = vadd.xlane.f32.xlu0 %v1953
        %v1955 = vpop.xlane.xlu0 %1954
        %v1956 = vsel %vm1145, %v1952, 0.0
        %1957 = vadd.xlane.f32.xlu0 %v1956
        %v1958 = vpop.xlane.xlu0 %1957
        %v1959 = vmul.f32 %v1955, %v1946
        %v1960 = vmul.f32 %v1958, %v1946
        %v1961 = vadd.f32 %v1959, 1e-12
        %v1962 = vadd.f32 %v1960, 1e-12
        %v1963 = vrsqrt.pop %v1961
        %v1964 = vmul.f32 %v1963, %v1961
        %v1965 = vmul.f32 %v1964, %v1963
        %v1966 = vmul.f32 0.5, %v1965
        %v1967 = vsub.f32 1.5, %v1966
        %v1968 = vmul.f32 %v1963, %v1967
        %v1969 = vmul.f32 %v1961, %v1968
        %vm1970 = vcmp.eq.f32.partialorder %v1961, inf
        %v1971 = vsel %vm1970, %v1961, %v1969
        %vm1972 = vcmp.eq.f32.partialorder %v1961, 0.0
        %v1973 = vand.u32 %v1961, 2147483648
        %v1974 = vsel %vm1972, %v1973, %v1971
        %v1975 = vrsqrt.pop %v1962
        %v1976 = vmul.f32 %v1975, %v1962
        %v1977 = vmul.f32 %v1976, %v1975
        %v1978 = vmul.f32 0.5, %v1977
        %v1979 = vsub.f32 1.5, %v1978
        %v1980 = vmul.f32 %v1975, %v1979
        %v1981 = vmul.f32 %v1962, %v1980
        %vm1982 = vcmp.eq.f32.partialorder %v1962, inf
        %v1983 = vsel %vm1982, %v1962, %v1981
        %vm1984 = vcmp.eq.f32.partialorder %v1962, 0.0
        %v1985 = vand.u32 %v1962, 2147483648
        %v1986 = vsel %vm1984, %v1985, %v1983
        %v1987 = vrcp.pop %v1974
        %v1988 = vmul.f32 %v1974, %v1987
        %v1989 = vsub.f32 1.0, %v1988
        %v1990 = vmul.f32 %v1987, %v1989
        %v1991 = vadd.f32 %v1987, %v1990
        %vm1992 = vweird.f32 %v1974
        %vm1993 = vweird.f32 %v1987
        %vm1994 = vmor %vm1992, %vm1993
        %v1995 = vsel %vm1994, %v1987, %v1991
        %v1996 = vand.u32 2147483647, %v1974
        %vm1997 = vcmp.eq.f32.partialorder %v1996, 8.507059e+37
        %v1998 = vand.u32 %v1974, 2147483648
        %v1999 = vor.u32 1.1754944e-38, %v1998
        %v2000 = vsel %vm1997, %v1999, %v1995
        %v2001 = vmul.f32 %v1949, %v2000
        %v2002 = vrcp.pop %v1986
        %v2003 = vmul.f32 %v1986, %v2002
        %v2004 = vsub.f32 1.0, %v2003
        %v2005 = vmul.f32 %v2002, %v2004
        %v2006 = vadd.f32 %v2002, %v2005
        %vm2007 = vweird.f32 %v1986
        %vm2008 = vweird.f32 %v2002
        %vm2009 = vmor %vm2007, %vm2008
        %v2010 = vsel %vm2009, %v2002, %v2006
        %v2011 = vand.u32 2147483647, %v1986
        %vm2012 = vcmp.eq.f32.partialorder %v2011, 8.507059e+37
        %v2013 = vand.u32 %v1986, 2147483648
        %v2014 = vor.u32 1.1754944e-38, %v2013
        %v2015 = vsel %vm2012, %v2014, %v2010
        %v2016 = vmul.f32 %v1950, %v2015
        %v2018 = vperm.slane %v1932, 0
        %v2020 = vmul.f32 %v2001, %v2018
        %v2021 = vmul.f32 %v2016, %v2018
        %v2023 = vperm.slane %v1933, 0
        %v2025 = vadd.f32 %v2020, %v2023
        %v2026 = vadd.f32 %v2021, %v2023
        %v2027 = vld [vmem:[%s33] sm:$0xf]
        %v2028 = vld [vmem:[%s33 + $0x4] sm:$0xf]
        %v2029 = vld [vmem:[%s33 + $0x8] sm:$0xf]
        %v2030 = vld [vmem:[%s33 + $0xc] sm:$0xf]
        %v2031 = vpack.c.bf16 %v2026, %v2025
        %v2032 = vld [vmem:[%s35] sm:$0x1]
        %v2034 = vperm.slane %v2032, 0
        %v2040 = vunpack.c.l.b16 %v2027
        %v2041 = vunpack.c.l.b16 %v2028
        %v2042 = vunpack.c.l.b16 %v2029
        %v2043 = vunpack.c.l.b16 %v2030
        %v2044 = vpack.c.b16 %v2041, %v2040
        %v2045 = vpack.c.b16 %v2043, %v2042
        %v2049 = vsel %vm1145, %v2031, 0
        %2051 = vmatpush.bf16.msra.mxu0 0
        %2052 = vmatpush.bf16.msra.mxu0 0
        %2053 = vmatpush.bf16.msra.mxu0 0
        %2054 = vmatpush.bf16.msra.mxu0 0
        %2055 = vmatpush.bf16.msra.mxu0 0
        %2056 = vmatpush.bf16.msra.mxu0 0
        %2057 = vmatpush.bf16.msra.mxu0 %v2045
        %2058 = vmatpush.bf16.msra.mxu0 %v2044
        %2059 = vmatmul.bf16.gmra.mxu0 %v2049
        %v2060 = vpop.f32.mrf.mxu0
        %v2061 = vadd.f32 %v2034, %v2060
        %v2062 = vpop.f32.mrf.mxu0
        %v2063 = vadd.f32 %v2034, %v2062
        %2064 = vdwg.mxu0
        %v2065 = vmul.f32 %v2061, 0.5
        %v2066 = vmul.f32 %v2063, 0.5
        %v2067 = vmul.f32 %v2061, 0.044715
        %v2068 = vmul.f32 %v2063, 0.044715
        %v2069 = vmul.f32 %v2067, %v2061
        %v2070 = vmul.f32 %v2068, %v2063
        %v2071 = vmul.f32 %v2069, %v2061
        %v2072 = vmul.f32 %v2070, %v2063
        %v2073 = vadd.f32 %v2061, %v2071
        %v2074 = vadd.f32 %v2063, %v2072
        %v2075 = vmul.f32 %v2073, 0.7978846
        %v2076 = vmul.f32 %v2074, 0.7978846
        %v2077 = vtanh.pop %v2075
        %v2078 = vtanh.pop %v2076
        %v2079 = vadd.f32 %v2077, 1.0
        %v2080 = vadd.f32 %v2078, 1.0
        %v2081 = vmul.f32 %v2065, %v2079
        %v2082 = vmul.f32 %v2066, %v2080
        %v2083 = vld [vmem:[%s37] sm:$0xf]
        %v2084 = vld [vmem:[%s37 + $0x4] sm:$0xf]
        %v2085 = vld [vmem:[%s37 + $0x8] sm:$0xf]
        %v2086 = vld [vmem:[%s37 + $0xc] sm:$0xf]
        %v2087 = vld [vmem:[%s37 + $0x10] sm:$0xf]
        %v2088 = vld [vmem:[%s37 + $0x14] sm:$0xf]
        %v2089 = vld [vmem:[%s37 + $0x18] sm:$0xf]
        %v2090 = vld [vmem:[%s37 + $0x1c] sm:$0xf]
        %v2091 = vpack.c.bf16 %v2082, %v2081
        %v2092 = vld [vmem:[%s39] sm:$0x1]
        %v2094 = vperm.slane %v2092, 0
        %v2104 = vunpack.c.l.b16 %v2083
        %v2105 = vunpack.c.l.b16 %v2084
        %v2106 = vunpack.c.l.b16 %v2085
        %v2107 = vunpack.c.l.b16 %v2086
        %v2108 = vunpack.c.l.b16 %v2087
        %v2109 = vunpack.c.l.b16 %v2088
        %v2110 = vunpack.c.l.b16 %v2089
        %v2111 = vunpack.c.l.b16 %v2090
        %v2112 = vpack.c.b16 %v2105, %v2104
        %v2113 = vpack.c.b16 %v2107, %v2106
        %v2114 = vpack.c.b16 %v2109, %v2108
        %v2115 = vpack.c.b16 %v2111, %v2110
        %vm2120 = vcmask 523264
        %v2122 = vsel %vm2120, %v2091, 0
        %2124 = vmatpush.bf16.msra.mxu0 0
        %2125 = vmatpush.bf16.msra.mxu0 0
        %2126 = vmatpush.bf16.msra.mxu0 0
        %2127 = vmatpush.bf16.msra.mxu0 0
        %2128 = vmatpush.bf16.msra.mxu0 %v2115
        %2129 = vmatpush.bf16.msra.mxu0 %v2114
        %2130 = vmatpush.bf16.msra.mxu0 %v2113
        %2131 = vmatpush.bf16.msra.mxu0 %v2112
        %2132 = vmatmul.bf16.gmra.mxu0 %v2122
        %v2133 = vpop.f32.mrf.mxu0
        %v2134 = vadd.f32 %v2094, %v2133
        %v2135 = vpop.f32.mrf.mxu0
        %v2136 = vadd.f32 %v2094, %v2135
        %2137 = vdwg.mxu0
        %v2138 = vadd.f32 %v2134, %v2025
        %v2139 = vadd.f32 %v2136, %v2026
        %v2140 = vld [vmem:[%s41] sm:$0x1]
        %v2141 = vld [vmem:[%s43] sm:$0x1]
        %v2142 = vsel %vm1145, %v2138, 0.0
        %2143 = vadd.xlane.f32.xlu0 %v2142
        %v2144 = vpop.xlane.xlu0 %2143
        %v2145 = vsel %vm1145, %v2139, 0.0
        %2146 = vadd.xlane.f32.xlu0 %v2145
        %v2147 = vpop.xlane.xlu0 %2146
        %v2148 = vmul.f32 %v2144, %v1946
        %v2149 = vmul.f32 %v2147, %v1946
        %v2150 = vsub.f32 %v2138, %v2148
        %v2151 = vsub.f32 %v2139, %v2149
        %v2152 = vmul.f32 %v2150, %v2150
        %v2153 = vmul.f32 %v2151, %v2151
        %v2154 = vsel %vm1145, %v2152, 0.0
        %2155 = vadd.xlane.f32.xlu0 %v2154
        %v2156 = vpop.xlane.xlu0 %2155
        %v2157 = vsel %vm1145, %v2153, 0.0
        %2158 = vadd.xlane.f32.xlu0 %v2157
        %v2159 = vpop.xlane.xlu0 %2158
        %v2160 = vmul.f32 %v2156, %v1946
        %v2161 = vmul.f32 %v2159, %v1946
        %v2162 = vadd.f32 %v2160, 1e-12
        %v2163 = vadd.f32 %v2161, 1e-12
        %v2164 = vrsqrt.pop %v2162
        %v2165 = vmul.f32 %v2164, %v2162
        %v2166 = vmul.f32 %v2165, %v2164
        %v2167 = vmul.f32 0.5, %v2166
        %v2168 = vsub.f32 1.5, %v2167
        %v2169 = vmul.f32 %v2164, %v2168
        %v2170 = vmul.f32 %v2162, %v2169
        %vm2171 = vcmp.eq.f32.partialorder %v2162, inf
        %v2172 = vsel %vm2171, %v2162, %v2170
        %vm2173 = vcmp.eq.f32.partialorder %v2162, 0.0
        %v2174 = vand.u32 %v2162, 2147483648
        %v2175 = vsel %vm2173, %v2174, %v2172
        %v2176 = vrsqrt.pop %v2163
        %v2177 = vmul.f32 %v2176, %v2163
        %v2178 = vmul.f32 %v2177, %v2176
        %v2179 = vmul.f32 0.5, %v2178
        %v2180 = vsub.f32 1.5, %v2179
        %v2181 = vmul.f32 %v2176, %v2180
        %v2182 = vmul.f32 %v2163, %v2181
        %vm2183 = vcmp.eq.f32.partialorder %v2163, inf
        %v2184 = vsel %vm2183, %v2163, %v2182
        %vm2185 = vcmp.eq.f32.partialorder %v2163, 0.0
        %v2186 = vand.u32 %v2163, 2147483648
        %v2187 = vsel %vm2185, %v2186, %v2184
        %v2188 = vrcp.pop %v2175
        %v2189 = vmul.f32 %v2175, %v2188
        %v2190 = vsub.f32 1.0, %v2189
        %v2191 = vmul.f32 %v2188, %v2190
        %v2192 = vadd.f32 %v2188, %v2191
        %vm2193 = vweird.f32 %v2175
        %vm2194 = vweird.f32 %v2188
        %vm2195 = vmor %vm2193, %vm2194
        %v2196 = vsel %vm2195, %v2188, %v2192
        %v2197 = vand.u32 2147483647, %v2175
        %vm2198 = vcmp.eq.f32.partialorder %v2197, 8.507059e+37
        %v2199 = vand.u32 %v2175, 2147483648
        %v2200 = vor.u32 1.1754944e-38, %v2199
        %v2201 = vsel %vm2198, %v2200, %v2196
        %v2202 = vmul.f32 %v2150, %v2201
        %v2203 = vrcp.pop %v2187
        %v2204 = vmul.f32 %v2187, %v2203
        %v2205 = vsub.f32 1.0, %v2204
        %v2206 = vmul.f32 %v2203, %v2205
        %v2207 = vadd.f32 %v2203, %v2206
        %vm2208 = vweird.f32 %v2187
        %vm2209 = vweird.f32 %v2203
        %vm2210 = vmor %vm2208, %vm2209
        %v2211 = vsel %vm2210, %v2203, %v2207
        %v2212 = vand.u32 2147483647, %v2187
        %vm2213 = vcmp.eq.f32.partialorder %v2212, 8.507059e+37
        %v2214 = vand.u32 %v2187, 2147483648
        %v2215 = vor.u32 1.1754944e-38, %v2214
        %v2216 = vsel %vm2213, %v2215, %v2211
        %v2217 = vmul.f32 %v2151, %v2216
        %v2219 = vperm.slane %v2140, 0
        %v2221 = vmul.f32 %v2202, %v2219
        %v2222 = vmul.f32 %v2217, %v2219
        %v2224 = vperm.slane %v2141, 0
        %v2226 = vadd.f32 %v2221, %v2224
        %v2227 = vadd.f32 %v2222, %v2224
        %v2228 = vpack.c.bf16 %v2226, %v2226
        %v2229 = vpack.c.bf16 %v2227, %v2227
        %v2230 = vld [vmem:[%s45] sm:$0xf]
        %v2231 = vld [vmem:[%s45 + $0x4] sm:$0xf]
        %v2232 = vld [vmem:[%s45 + $0x8] sm:$0xf]
        %v2233 = vld [vmem:[%s45 + $0xc] sm:$0xf]
        %v2234 = vld [vmem:[%s47] sm:$0x1]
        %v2239 = vunpack.c.l.b16 %v2230
        %v2240 = vunpack.c.l.b16 %v2231
        %v2241 = vunpack.c.l.b16 %v2232
        %v2242 = vunpack.c.l.b16 %v2233
        %v2243 = vpack.c.b16 %v2240, %v2239
        %v2244 = vpack.c.b16 %v2242, %v2241
        %v2248 = vsel %vm1145, %v2228, 0
        %2250 = vmatpush.bf16.msra.mxu0 0
        %2251 = vmatpush.bf16.msra.mxu0 0
        %2252 = vmatpush.bf16.msra.mxu0 0
        %2253 = vmatpush.bf16.msra.mxu0 0
        %2254 = vmatpush.bf16.msra.mxu0 0
        %2255 = vmatpush.bf16.msra.mxu0 0
        %2256 = vmatpush.bf16.msra.mxu0 %v2244
        %2257 = vmatpush.bf16.msra.mxu0 %v2243
        %2258 = vmatmul.bf16.gmra.mxu0 %v2248
        %v2259 = vpop.f32.mrf.mxu0
        %v2260 = vadd.f32 %v2234, %v2259
        %v2261 = vpop.f32.mrf.mxu0
        %2262 = vdwg.mxu0
        %v2263 = vtanh.pop %v2260
        %v2264 = vld [vmem:[%s57] sm:$0xf]
        %v2265 = vld [vmem:[%s57 + $0x4] sm:$0xf]
        %v2266 = vld [vmem:[%s57 + $0x8] sm:$0xf]
        %v2267 = vld [vmem:[%s57 + $0xc] sm:$0xf]
        %v2268 = vpack.c.bf16 %v2263, %v2263
        %v2269 = vld [vmem:[%s59] sm:$0x1]
        %v2274 = vunpack.c.l.b16 %v2264
        %v2275 = vunpack.c.l.b16 %v2265
        %v2276 = vunpack.c.l.b16 %v2266
        %v2277 = vunpack.c.l.b16 %v2267
        %v2278 = vpack.c.b16 %v2275, %v2274
        %v2279 = vpack.c.b16 %v2277, %v2276
        %v2283 = vsel %vm1145, %v2268, 0
        %2285 = vmatpush.bf16.msra.mxu0 0
        %2286 = vmatpush.bf16.msra.mxu0 0
        %2287 = vmatpush.bf16.msra.mxu0 0
        %2288 = vmatpush.bf16.msra.mxu0 0
        %2289 = vmatpush.bf16.msra.mxu0 0
        %2290 = vmatpush.bf16.msra.mxu0 0
        %2291 = vmatpush.bf16.msra.mxu0 %v2279
        %2292 = vmatpush.bf16.msra.mxu0 %v2278
        %2293 = vmatmul.bf16.gmra.mxu0 %v2283
        %v2294 = vpop.f32.mrf.mxu0
        %v2295 = vadd.f32 %v2269, %v2294
        %v2296 = vpop.f32.mrf.mxu0
        %2297 = vdwg.mxu0
        %vm2298 = vcmask 16384
        %2299 = vst.msk [vmem:[%s1026] sm:$0x1] %vm2298, %v2295
        %v2300 = vld [vmem:[%s53] sm:$0x1]
        %v2301 = vld [vmem:[%s55] sm:$0x3]
        %2303 = vset.pattern.permute.xlu0 0
        %2304 = vperm.xlu0 %2303, %v2301
        %v2305 = vpop.permute.xlu0 %2304
        %v2309 = vunpack.c.l.b16 %v2228
        %v2310 = vunpack.c.l.b16 %v2229
        %v2311 = vpack.c.b16 %v2310, %v2309
        %v2313 = vsel %vm1145, %v2300, 0
        %v2316 = vsel %vm1145, %v2311, 0
        %2318 = vmatpush.bf16.xpose.msra.mxu0 0
        %2319 = vmatpush.bf16.xpose.msra.mxu0 0
        %2320 = vmatpush.bf16.xpose.msra.mxu0 0
        %2321 = vmatpush.bf16.xpose.msra.mxu0 0
        %2322 = vmatpush.bf16.xpose.msra.mxu0 0
        %2323 = vmatpush.bf16.xpose.msra.mxu0 0
        %2324 = vmatpush.bf16.xpose.msra.mxu0 0
        %2325 = vmatpush.bf16.xpose.msra.mxu0 %v2316
        %2326 = vmatmul.bf16.gmra.mxu0 %v2313
        %v2327 = vpop.f32.mrf.mxu0
        %v2328 = vadd.f32 %v2305, %v2327
        %v2329 = vpop.f32.mrf.mxu0
        %2330 = vdwg.mxu0
        %v2331 = vld [vmem:[%s1043] sm:$0x1]
        %v2332 = vsub.f32 1.0, %v2331
        %v2333 = vmul.f32 %v2332, 1e+30
        %v2335 = vperm.slane %v2333, 0
        %v2337 = vsub.f32 %v2328, %v2335
        %vm2338 = vcmask 123904
        %2339 = vst.msk [vmem:[%s1020] sm:$0x3] %vm2338, %v2337
        %v2340 = vld [vmem:[%s49] sm:$0x1]
        %v2342 = vsel %vm1145, %v2340, 0
        %2344 = vmatpush.bf16.xpose.msra.mxu0 0
        %2345 = vmatpush.bf16.xpose.msra.mxu0 0
        %2346 = vmatpush.bf16.xpose.msra.mxu0 0
        %2347 = vmatpush.bf16.xpose.msra.mxu0 0
        %2348 = vmatpush.bf16.xpose.msra.mxu0 0
        %2349 = vmatpush.bf16.xpose.msra.mxu0 0
        %2350 = vmatpush.bf16.xpose.msra.mxu0 0
        %2351 = vmatpush.bf16.xpose.msra.mxu0 %v2316
        %2352 = vmatmul.bf16.gmra.mxu0 %v2342
        %v2353 = vpop.f32.mrf.mxu0
        %v2354 = vadd.f32 0.0, %v2353
        %v2355 = vpop.f32.mrf.mxu0
        %2356 = vdwg.mxu0
        %v2357 = vld [vmem:[%s1047] sm:$0xf]
        %v2358 = vpack.c.bf16 %v2354, %v2354
        %v2360 = vsel %vm1261, %v2358, 0
        %v2363 = vsel %vm1261, %v2357, 0
        %2365 = vmatpush.bf16.xpose.msra.mxu0 0
        %2366 = vmatpush.bf16.xpose.msra.mxu0 0
        %2367 = vmatpush.bf16.xpose.msra.mxu0 0
        %2368 = vmatpush.bf16.xpose.msra.mxu0 0
        %2369 = vmatpush.bf16.xpose.msra.mxu0 0
        %2370 = vmatpush.bf16.xpose.msra.mxu0 0
        %2371 = vmatpush.bf16.xpose.msra.mxu0 0
        %2372 = vmatpush.bf16.xpose.msra.mxu0 %v2363
        %2373 = vmatmul.bf16.gmra.mxu0 %v2360
        %v2374 = vpop.f32.mrf.mxu0
        %v2375 = vadd.f32 0.0, %v2374
        %v2376 = vpop.f32.mrf.mxu0
        %2377 = vdwg.mxu0
        %v2379 = vsel %vm1261, 1065369472, 0
        %2381 = vmatpush.bf16.xpose.msra.mxu0 0
        %2382 = vmatpush.bf16.xpose.msra.mxu0 0
        %2383 = vmatpush.bf16.xpose.msra.mxu0 0
        %2384 = vmatpush.bf16.xpose.msra.mxu0 0
        %2385 = vmatpush.bf16.xpose.msra.mxu0 0
        %2386 = vmatpush.bf16.xpose.msra.mxu0 0
        %2387 = vmatpush.bf16.xpose.msra.mxu0 0
        %2388 = vmatpush.bf16.xpose.msra.mxu0 %v2363
        %2389 = vmatmul.bf16.gmra.mxu0 %v2379
        %v2390 = vpop.f32.mrf.mxu0
        %v2391 = vadd.f32 1e-30, %v2390
        %v2392 = vpop.f32.mrf.mxu0
        %2393 = vdwg.mxu0
        %v2394 = vrcp.pop %v2391
        %v2395 = vmul.f32 %v2375, %v2394
        %v2396 = vld [vmem:[#allocation2] sm:$0x1]
        %2398 = vset.pattern.permute.xlu0 0
        %2399 = vperm.xlu0 %2398, %v2396
        %v2400 = vpop.permute.xlu0 %2399
        %v2402 = vperm.slane %v2400, 0
        %v2403 = vadd.f32 %v2395, %v2402
        %vm2404 = vcmask 57344
        %2405 = vst.msk [vmem:[%s1032] sm:$0x1] %vm2404, %v2403
        %s2406 = sand.u32 %s743, 1
        %s2407 = scalar_lea.sflag [#allocation4], %s2406
        %s2408 = sand.u32 %s743, 1
        %s2409 = smul.addr %s2408, 2
        %s2410 = scalar_lea.vmem [#allocation3], %s2409
        %s2411 = sand.u32 %s85, 1
        %s2412 = scalar_lea.sflag [#allocation6], %s2411
        %s2413 = sand.u32 %s769, 1
        %s2414 = scalar_lea.vmem [#allocation5], %s2413
        %s2415 = sand.u32 %s85, 1
        %s2416 = scalar_lea.sflag [#allocation6], %s2415
        %s2417 = sand.u32 %s795, 1
        %s2418 = scalar_lea.vmem [#allocation7], %s2417
        // Predicated region
        $region141: #{tpu_custom_call.1} parent=139 // pred_check
          %p2419 = pneg %p753
        $region142: #{tpu_custom_call.1} parent=139 // pred_check_branch
          %2421 = sbr.rel (%p2419) target = $region144
        $region143: #{tpu_custom_call.1} parent=139 // pred_region
          %2423 = vsyncadd %s2407, 0
          %s2424 = smul.addr %s85, 2
          %s2425 = scalar_lea.hbm %s61, %s2424
          %s2427 = sshll.u32 %s2410, 4
          %s2428 = int_to_ptr.vmem [resolvable:$true] %s2427
          %s2429 = sshll.u32 %s2425, 4
          %s2430 = int_to_ptr.hbm [resolvable:$true] %s2429
          %2432 = dma.vmem_to_hbm [thread:$0]  %s2428, 32, %s2430, %s2407
        $region144: #{tpu_custom_call.1} parent=139 // pred_fallthru
          _
        // Predicated region
        $region145: #{tpu_custom_call.1} parent=139 // pred_check
          %p2433 = pneg %p779
        $region146: #{tpu_custom_call.1} parent=139 // pred_check_branch
          %2435 = sbr.rel (%p2433) target = $region148
        $region147: #{tpu_custom_call.1} parent=139 // pred_region
          %2437 = vsyncadd %s2412, 0
          %s2438 = scalar_lea.hbm %s63, %s85
          %s2440 = sshll.u32 %s2414, 4
          %s2441 = int_to_ptr.vmem [resolvable:$true] %s2440
          %s2442 = sshll.u32 %s2438, 4
          %s2443 = int_to_ptr.hbm [resolvable:$true] %s2442
          %2445 = dma.vmem_to_hbm [thread:$0]  %s2441, 16, %s2443, %s2412
        $region148: #{tpu_custom_call.1} parent=139 // pred_fallthru
          _
        // Predicated region
        $region149: #{tpu_custom_call.1} parent=139 // pred_check
          %p2446 = pneg %p805
        $region150: #{tpu_custom_call.1} parent=139 // pred_check_branch
          %2448 = sbr.rel (%p2446) target = $region152
        $region151: #{tpu_custom_call.1} parent=139 // pred_region
          %2450 = vsyncadd %s2416, 0
          %s2451 = scalar_lea.hbm %s65, %s85
          %s2453 = sshll.u32 %s2418, 4
          %s2454 = int_to_ptr.vmem [resolvable:$true] %s2453
          %s2455 = sshll.u32 %s2451, 4
          %s2456 = int_to_ptr.hbm [resolvable:$true] %s2455
          %2458 = dma.vmem_to_hbm [thread:$0]  %s2454, 16, %s2456, %s2416
        $region152: #{tpu_custom_call.1} parent=139 // pred_fallthru
          _
      $region140: #{tpu_custom_call.1} parent=5 // pred_fallthru
        _
      %p2459 = scmp.le.s32.totalorder 2, %s80
      // Predicated region
      $region153: #{tpu_custom_call.1} parent=5 // pred_check
        %p2460 = pneg %p2459
      $region154: #{tpu_custom_call.1} parent=5 // pred_check_branch
        %2462 = sbr.rel (%p2460) target = $region156
      $region155: #{tpu_custom_call.1} parent=5 // pred_region
        %s2463 = ssub.s32 %s80, 2
        // Predicated region
        $region157: #{tpu_custom_call.1} parent=155 // pred_check
          %p2464 = pneg %p759
        $region158: #{tpu_custom_call.1} parent=155 // pred_check_branch
          %2466 = sbr.rel (%p2464) target = $region160
        $region159: #{tpu_custom_call.1} parent=155 // pred_region
          %s2467 = sand.u32 %s744, 1
          %s2468 = scalar_lea.sflag [#allocation4], %s2467
          %s2469 = sand.u32 %s744, 1
          %s2470 = smul.addr %s2469, 2
          %s2471 = scalar_lea.vmem [#allocation3], %s2470
          %2473 = dma.done %s2468, 32
        $region160: #{tpu_custom_call.1} parent=155 // pred_fallthru
          _
        // Predicated region
        $region161: #{tpu_custom_call.1} parent=155 // pred_check
          %p2474 = pneg %p785
        $region162: #{tpu_custom_call.1} parent=155 // pred_check_branch
          %2476 = sbr.rel (%p2474) target = $region164
        $region163: #{tpu_custom_call.1} parent=155 // pred_region
          %s2477 = sand.u32 %s86, 1
          %s2478 = scalar_lea.sflag [#allocation6], %s2477
          %s2479 = sand.u32 %s770, 1
          %s2480 = scalar_lea.vmem [#allocation5], %s2479
          %2482 = dma.done %s2478, 16
        $region164: #{tpu_custom_call.1} parent=155 // pred_fallthru
          _
        // Predicated region
        $region165: #{tpu_custom_call.1} parent=155 // pred_check
          %p2483 = pneg %p811
        $region166: #{tpu_custom_call.1} parent=155 // pred_check_branch
          %2485 = sbr.rel (%p2483) target = $region168
        $region167: #{tpu_custom_call.1} parent=155 // pred_region
          %s2486 = sand.u32 %s86, 1
          %s2487 = scalar_lea.sflag [#allocation6], %s2486
          %s2488 = sand.u32 %s796, 1
          %s2489 = scalar_lea.vmem [#allocation7], %s2488
          %2491 = dma.done %s2487, 16
        $region168: #{tpu_custom_call.1} parent=155 // pred_fallthru
          _
      $region156: #{tpu_custom_call.1} parent=5 // pred_fallthru
        _
    $region6: #{tpu_custom_call.1} parent=1 // loop_footer
      %s84 = sadd.s32 1, %s80
    $region7: #{tpu_custom_call.1} parent=1 // loop_footer_branch
      %79 = sbr.rel target = $region3
    $region8: #{tpu_custom_call.1} parent=1 // loop_exit
      _
    %2492 = vsyncpa [#allocation4], 1
    %s2493 = scalar_lea.sflag [#allocation4], 1
    %2494 = vsyncpa %s2493, 1
    %2495 = vsyncpa [#allocation6], 1
    %s2496 = scalar_lea.sflag [#allocation6], 1
    %2497 = vsyncpa %s2496, 1

</llo_original>
